<compile_context>
chip_gen: v5e
topology: v5e:2x2
jax: 0.10.0
libtpu: 0.0.40
codegen_flags: <defaults>
</compile_context>

<pallas_src>
import functools
import math

import jax
import jax.numpy as jnp
from jax.experimental import pallas as pl
from jax.experimental.pallas import tpu as pltpu

# ---------------------------------------------------------------------------
# Hyperparameters (OverdriveModel defaults)
# ---------------------------------------------------------------------------
NINPUTS = 1
NOUTPUTS = 1
NBLOCKS = 4
CHANNEL_WIDTH = 32
KERNEL_SIZE = 13
DILATION_GROWTH = 2
NCONDITION = 2
COND_DIM = 32

# receptive-field halo: sum_n (K-1) * growth^n = 12 * (1+2+4+8) = 180
HALO = sum((KERNEL_SIZE - 1) * (DILATION_GROWTH ** n) for n in range(NBLOCKS))


def _out_len(t_in):
    return t_in - HALO


# ---------------------------------------------------------------------------
# Pallas kernel: one (batch, time-tile) grid step.
# ---------------------------------------------------------------------------
def overdrive_kernel(*refs):
    xw_ref, gamma_ref, beta_ref = refs[:3]
    blk_refs = refs[3:3 + 2 * NBLOCKS]
    ow_ref, ob_ref, prelu_ref, o_ref = refs[3 + 2 * NBLOCKS:]

    x = xw_ref[0, 0]                                   # (1, TILE_T + HALO) f32
    for n in range(NBLOCKS):
        w2_ref = blk_refs[2 * n]                       # (Cout, K*Cin) bf16 (im2col)
        rw_ref = blk_refs[2 * n + 1]                   # (Cout, Cin)    f32
        dilation = DILATION_GROWTH ** n
        c_in = rw_ref.shape[1]
        t_in = x.shape[1]
        t_out = t_in - (KERNEL_SIZE - 1) * dilation

        # --- dilated conv as ONE im2col matmul (bf16 operands, f32 accumulate)
        x_bf = x.astype(jnp.bfloat16)
        taps = [x_bf[:, k * dilation:k * dilation + t_out] for k in range(KERNEL_SIZE)]
        patches = jnp.concatenate(taps, axis=0)        # (K*Cin, t_out) bf16
        acc = jnp.dot(w2_ref[...], patches,
                      preferred_element_type=jnp.float32)   # (Cout, t_out) f32

        # --- FiLM affine (conv bias already folded into beta in the wrapper)
        g = gamma_ref[0, n]                            # (Cout, 1)
        be = beta_ref[0, n]                            # (Cout, 1)
        acc = acc * g + be

        # --- PReLU (single shared alpha per block)
        alpha = prelu_ref[n]
        acc = jnp.where(acc >= 0.0, acc, alpha * acc)

        # --- 1x1 residual conv on the already-cropped slice (kept in f32)
        x_crop = x[:, t_in - t_out:]                   # (Cin, t_out) f32
        rw = rw_ref[...]
        if c_in == 1:
            res = rw * x_crop                          # broadcast (Cout, t_out)
        else:
            res = jnp.dot(rw, x_crop, preferred_element_type=jnp.float32)

        x = acc + res                                  # (Cout, t_out) f32

    # --- output 1x1 conv + tanh
    y = jnp.dot(ow_ref[...], x, preferred_element_type=jnp.float32) + ob_ref[...]
    o_ref[0] = jnp.tanh(y)


# ---------------------------------------------------------------------------
# Wrapper: hoisted conditioning/FiLM, time tiling, pallas_call plumbing.
# ---------------------------------------------------------------------------
@functools.partial(jax.jit, static_argnames=("tile_t",))
def overdrive_forward(params, x, c, *, tile_t=2048):
    B, _, T = x.shape
    t_out_total = _out_len(T)
    assert t_out_total > 0, "input shorter than the receptive field (181)"
    assert tile_t % 128 == 0, "tile_t must be a multiple of 128 (lane-dense output)"

    num_tiles = -(-t_out_total // tile_t)
    W = tile_t + HALO
    T_pad = num_tiles * tile_t + HALO

    # ---- overlapping time windows (halo = receptive field - 1), built in XLA.
    x32 = x.astype(jnp.float32)
    x_pad = jnp.pad(x32, ((0, 0), (0, 0), (0, T_pad - T)))
    idx = jnp.arange(num_tiles)[:, None] * tile_t + jnp.arange(W)[None, :]
    xw = x_pad[:, 0, :][:, idx].reshape(B, num_tiles, 1, W)       # (B, nt, 1, W)

    # ---- hoisted conditioning MLP + FiLM gamma/beta (tiny; recomputing per tile
    #      inside the kernel would be pure waste).
    relu = lambda v: jnp.maximum(v, 0.0)
    p = relu(c.astype(jnp.float32) @ params["cond_w1"].T + params["cond_b1"])
    p = relu(p @ params["cond_w2"].T + params["cond_b2"])
    p = relu(p @ params["cond_w3"].T + params["cond_b3"])          # (B, 1, 32)
    gammas, betas = [], []
    for n in range(NBLOCKS):
        gb = p @ params[f"blk{n}_film_w"].T + params[f"blk{n}_film_b"]   # (B,1,2C)
        g = gb[:, 0, :CHANNEL_WIDTH]
        b = gb[:, 0, CHANNEL_WIDTH:]
        gammas.append(g)
        # fold conv bias into beta:  (conv + cb)*g + b == conv*g + (cb*g + b)
        betas.append(params[f"blk{n}_conv_b"][None, :] * g + b)
    gamma = jnp.stack(gammas, axis=1)[..., None].astype(jnp.float32)   # (B,NB,C,1)
    beta = jnp.stack(betas, axis=1)[..., None].astype(jnp.float32)     # (B,NB,C,1)

    inputs = [xw, gamma, beta]
    in_specs = [
        pl.BlockSpec((1, 1, 1, W), lambda b, j: (b, j, 0, 0)),
        pl.BlockSpec((1, NBLOCKS, CHANNEL_WIDTH, 1), lambda b, j: (b, 0, 0, 0)),
        pl.BlockSpec((1, NBLOCKS, CHANNEL_WIDTH, 1), lambda b, j: (b, 0, 0, 0)),
    ]

    def add_rep(a):  # weight replicated across the whole grid
        inputs.append(a)
        in_specs.append(pl.BlockSpec(a.shape, lambda b, j, _nd=a.ndim: (0,) * _nd))

    for n in range(NBLOCKS):
        cw = params[f"blk{n}_conv_w"]                                   # (Cout,Cin,K)
        w2 = jnp.transpose(cw, (0, 2, 1)).reshape(CHANNEL_WIDTH, -1)    # (Cout,K*Cin)
        add_rep(w2.astype(jnp.bfloat16))
        add_rep(params[f"blk{n}_res_w"][:, :, 0].astype(jnp.float32))   # (Cout,Cin)

    add_rep(params["out_w"][:, :, 0].astype(jnp.float32))               # (1, C)
    add_rep(params["out_b"][:, None].astype(jnp.float32))               # (1, 1)

    prelu = jnp.stack([params[f"blk{n}_prelu"] for n in range(NBLOCKS)]).astype(jnp.float32)
    inputs.append(prelu)
    in_specs.append(pl.BlockSpec(memory_space=pltpu.MemorySpace.SMEM))

    # ---- rough cost estimate (helps XLA schedule around the call)
    flops_tile = 0
    t = W
    for n in range(NBLOCKS):
        d = DILATION_GROWTH ** n
        cin = NINPUTS if n == 0 else CHANNEL_WIDTH
        t_o = t - (KERNEL_SIZE - 1) * d
        flops_tile += 2 * CHANNEL_WIDTH * KERNEL_SIZE * cin * t_o    # dilated conv
        flops_tile += 2 * CHANNEL_WIDTH * cin * t_o                  # 1x1 residual
        flops_tile += 4 * CHANNEL_WIDTH * t_o                        # FiLM + PReLU
        t = t_o
    flops_tile += 2 * CHANNEL_WIDTH * tile_t + tile_t                # output conv
    cost = pl.CostEstimate(
        flops=int(B * num_tiles * flops_tile),
        transcendentals=int(B * num_tiles * tile_t),
        bytes_accessed=int(B * num_tiles * (W + tile_t) * 4),
    )

    # ---- VMEM budget: working set is dominated by the im2col buffer + f32 acts.
    est = (KERNEL_SIZE * CHANNEL_WIDTH * W * 2            # im2col patches (bf16)
           + 8 * CHANNEL_WIDTH * W * 4                    # f32 activations / temps
           + 4 * (W + tile_t) * 4                         # pipelined I/O buffers
           + 4 * CHANNEL_WIDTH * (KERNEL_SIZE * CHANNEL_WIDTH + CHANNEL_WIDTH) * 4)
    vmem_limit = min(max(2 * est, 16 * 1024 * 1024), 48 * 1024 * 1024)

    out = pl.pallas_call(
        overdrive_kernel,
        grid=(B, num_tiles),
        in_specs=in_specs,
        out_specs=pl.BlockSpec((1, 1, tile_t), lambda b, j: (b, 0, j)),
        out_shape=jax.ShapeDtypeStruct((B, NOUTPUTS, num_tiles * tile_t), jnp.float32),
        compiler_params=pltpu.CompilerParams(
            dimension_semantics=("parallel", "parallel"),
            vmem_limit_bytes=vmem_limit,
        ),
        cost_estimate=cost,
    )(*inputs)

    return out[:, :, :t_out_total]


# ---------------------------------------------------------------------------
# Deterministic parameter init (shapes follow the PyTorch module)
# ---------------------------------------------------------------------------
def init_params(key):
    keys = iter(jax.random.split(key, 32))

    def nrm(shape, scale):
        return scale * jax.random.normal(next(keys), shape, dtype=jnp.float32)

    p = {}
    p["cond_w1"] = nrm((16, NCONDITION), 0.7)
    p["cond_b1"] = nrm((16,), 0.1)
    p["cond_w2"] = nrm((32, 16), 0.25)
    p["cond_b2"] = nrm((32,), 0.1)
    p["cond_w3"] = nrm((COND_DIM, 32), 0.18)
    p["cond_b3"] = nrm((COND_DIM,), 0.1)
    for n in range(NBLOCKS):
        in_ch = NINPUTS if n == 0 else CHANNEL_WIDTH
        out_ch = CHANNEL_WIDTH
        p[f"blk{n}_conv_w"] = nrm((out_ch, in_ch, KERNEL_SIZE), 1.0 / math.sqrt(in_ch * KERNEL_SIZE))
        p[f"blk{n}_conv_b"] = nrm((out_ch,), 0.05)
        p[f"blk{n}_film_w"] = nrm((2 * out_ch, COND_DIM), 0.18)
        p[f"blk{n}_film_b"] = nrm((2 * out_ch,), 0.05)
        p[f"blk{n}_res_w"] = nrm((out_ch, in_ch, 1), 1.0 / math.sqrt(in_ch))
        p[f"blk{n}_prelu"] = jnp.float32(0.25)
    p["out_w"] = nrm((NOUTPUTS, CHANNEL_WIDTH, 1), 1.0 / math.sqrt(CHANNEL_WIDTH))
    p["out_b"] = nrm((NOUTPUTS,), 0.05)
    return p


# ---------------------------------------------------------------------------
# Pure-JAX reference (same math, f32 throughout) for the correctness check
# ---------------------------------------------------------------------------
def reference_forward(params, x, c):
    relu = lambda v: jnp.maximum(v, 0.0)
    p = relu(c @ params["cond_w1"].T + params["cond_b1"])
    p = relu(p @ params["cond_w2"].T + params["cond_b2"])
    p = relu(p @ params["cond_w3"].T + params["cond_b3"])            # (B, 1, 32)
    for n in range(NBLOCKS):
        cw = params[f"blk{n}_conv_w"]
        cb = params[f"blk{n}_conv_b"]
        fw = params[f"blk{n}_film_w"]
        fb = params[f"blk{n}_film_b"]
        rw = params[f"blk{n}_res_w"]
        alpha = params[f"blk{n}_prelu"]
        d = DILATION_GROWTH ** n
        c_out, _, K = cw.shape
        t_in = x.shape[-1]
        t_out = t_in - (K - 1) * d
        acc = jnp.zeros((x.shape[0], c_out, t_out), jnp.float32)
        for k in range(K):
            acc = acc + jnp.einsum("oi,bit->bot", cw[:, :, k],
                                   x[:, :, k * d:k * d + t_out])
        acc = acc + cb[None, :, None]
        gb = p @ fw.T + fb                                           # (B, 1, 2*Cout)
        g = jnp.swapaxes(gb[..., :c_out], 1, 2)
        b = jnp.swapaxes(gb[..., c_out:], 1, 2)
        acc = acc * g + b
        acc = jnp.where(acc >= 0.0, acc, alpha * acc)
        x_res = jnp.einsum("oi,bit->bot", rw[:, :, 0], x)
        x = acc + x_res[:, :, t_in - t_out:]
    y = jnp.einsum("oi,bit->bot", params["out_w"][:, :, 0], x) + params["out_b"][None, :, None]
    return jnp.tanh(y)


if __name__ == "__main__":
    key = jax.random.PRNGKey(0)
    pkey, xkey, ckey = jax.random.split(key, 3)
    params = init_params(pkey)

    # Small test: T_out = 320 -> 3 time tiles of 128 (exercises tiling + padding).
    B, T = 2, 500
    TILE_T = 128
    x = jax.random.normal(xkey, (B, NINPUTS, T), dtype=jnp.float32)
    c = jax.random.uniform(ckey, (B, 1, NCONDITION), dtype=jnp.float32)

    y = overdrive_forward(params, x, c, tile_t=TILE_T)
    y = jax.block_until_ready(y)

    assert y.shape == (B, NOUTPUTS, _out_len(T)), y.shape

    y_ref = reference_forward(params, x, c)
    max_err = float(jnp.max(jnp.abs(y - y_ref)))
    if not bool(jnp.allclose(y, y_ref, atol=3e-2, rtol=3e-2)):
        raise AssertionError(f"Pallas kernel mismatch vs reference, max abs err = {max_err}")

    print("KERNEL_OK")
</pallas_src>

<mosaic_0001>
module attributes {stable_mosaic.version = 11 : i64} {
  func.func @overdrive_kernel(%arg0: i32, %arg1: i32, %arg2: memref<1x1x1x308xf32, #tpu.memory_space<vmem>>, %arg3: memref<1x4x32x1xf32, #tpu.memory_space<vmem>>, %arg4: memref<1x4x32x1xf32, #tpu.memory_space<vmem>>, %arg5: memref<32x13xbf16, #tpu.memory_space<vmem>>, %arg6: memref<32x1xf32, #tpu.memory_space<vmem>>, %arg7: memref<32x416xbf16, #tpu.memory_space<vmem>>, %arg8: memref<32x32xf32, #tpu.memory_space<vmem>>, %arg9: memref<32x416xbf16, #tpu.memory_space<vmem>>, %arg10: memref<32x32xf32, #tpu.memory_space<vmem>>, %arg11: memref<32x416xbf16, #tpu.memory_space<vmem>>, %arg12: memref<32x32xf32, #tpu.memory_space<vmem>>, %arg13: memref<1x32xf32, #tpu.memory_space<vmem>>, %arg14: memref<1x1xf32, #tpu.memory_space<vmem>>, %arg15: memref<4xf32, #tpu.memory_space<smem>>, %arg16: memref<1x1x128xf32, #tpu.memory_space<vmem>>) attributes {dimension_semantics = [#tpu.dimension_semantics<parallel>, #tpu.dimension_semantics<parallel>], iteration_bounds = array<i64: 2, 3>, scalar_prefetch = 0 : i64, scratch_operands = 0 : i64, tpu.core_type = #tpu.core_type<tc>, window_params = [{transform_indices = @transform_0, window_bounds = array<i64: 1, 1, 1, 308>}, {transform_indices = @transform_1, window_bounds = array<i64: 1, 4, 32, 1>}, {transform_indices = @transform_2, window_bounds = array<i64: 1, 4, 32, 1>}, {pipeline_mode = #tpu.pipeline_mode<synchronous>, transform_indices = @transform_3, window_bounds = array<i64: 32, 13>}, {pipeline_mode = #tpu.pipeline_mode<synchronous>, transform_indices = @transform_4, window_bounds = array<i64: 32, 1>}, {pipeline_mode = #tpu.pipeline_mode<synchronous>, transform_indices = @transform_5, window_bounds = array<i64: 32, 416>}, {pipeline_mode = #tpu.pipeline_mode<synchronous>, transform_indices = @transform_6, window_bounds = array<i64: 32, 32>}, {pipeline_mode = #tpu.pipeline_mode<synchronous>, transform_indices = @transform_7, window_bounds = array<i64: 32, 416>}, {pipeline_mode = #tpu.pipeline_mode<synchronous>, transform_indices = @transform_8, window_bounds = array<i64: 32, 32>}, {pipeline_mode = #tpu.pipeline_mode<synchronous>, transform_indices = @transform_9, window_bounds = array<i64: 32, 416>}, {pipeline_mode = #tpu.pipeline_mode<synchronous>, transform_indices = @transform_10, window_bounds = array<i64: 32, 32>}, {pipeline_mode = #tpu.pipeline_mode<synchronous>, transform_indices = @transform_11, window_bounds = array<i64: 1, 32>}, {pipeline_mode = #tpu.pipeline_mode<synchronous>, transform_indices = @transform_12, window_bounds = array<i64: 1, 1>}, {transform_indices = @transform_13, window_bounds = array<i64: 4>}, {transform_indices = @transform_14, window_bounds = array<i64: 1, 1, 128>}]} {
    %c0 = arith.constant 0 : index
    %c0_0 = arith.constant 0 : index
    %c0_1 = arith.constant 0 : index
    %c0_2 = arith.constant 0 : index
    %0 = vector.load %arg2[%c0, %c0_0, %c0_1, %c0_2] : memref<1x1x1x308xf32, #tpu.memory_space<vmem>>, vector<1x1x1x308xf32>
    %1 = vector.shape_cast %0 : vector<1x1x1x308xf32> to vector<1x308xf32>
    %2 = arith.truncf %1 : vector<1x308xf32> to vector<1x308xbf16>
    %3 = vector.extract_strided_slice %2 {offsets = [0, 0], sizes = [1, 296], strides = [1, 1]} : vector<1x308xbf16> to vector<1x296xbf16>
    %4 = vector.extract_strided_slice %2 {offsets = [0, 1], sizes = [1, 296], strides = [1, 1]} : vector<1x308xbf16> to vector<1x296xbf16>
    %5 = vector.extract_strided_slice %2 {offsets = [0, 2], sizes = [1, 296], strides = [1, 1]} : vector<1x308xbf16> to vector<1x296xbf16>
    %6 = vector.extract_strided_slice %2 {offsets = [0, 3], sizes = [1, 296], strides = [1, 1]} : vector<1x308xbf16> to vector<1x296xbf16>
    %7 = vector.extract_strided_slice %2 {offsets = [0, 4], sizes = [1, 296], strides = [1, 1]} : vector<1x308xbf16> to vector<1x296xbf16>
    %8 = vector.extract_strided_slice %2 {offsets = [0, 5], sizes = [1, 296], strides = [1, 1]} : vector<1x308xbf16> to vector<1x296xbf16>
    %9 = vector.extract_strided_slice %2 {offsets = [0, 6], sizes = [1, 296], strides = [1, 1]} : vector<1x308xbf16> to vector<1x296xbf16>
    %10 = vector.extract_strided_slice %2 {offsets = [0, 7], sizes = [1, 296], strides = [1, 1]} : vector<1x308xbf16> to vector<1x296xbf16>
    %11 = vector.extract_strided_slice %2 {offsets = [0, 8], sizes = [1, 296], strides = [1, 1]} : vector<1x308xbf16> to vector<1x296xbf16>
    %12 = vector.extract_strided_slice %2 {offsets = [0, 9], sizes = [1, 296], strides = [1, 1]} : vector<1x308xbf16> to vector<1x296xbf16>
    %13 = vector.extract_strided_slice %2 {offsets = [0, 10], sizes = [1, 296], strides = [1, 1]} : vector<1x308xbf16> to vector<1x296xbf16>
    %14 = vector.extract_strided_slice %2 {offsets = [0, 11], sizes = [1, 296], strides = [1, 1]} : vector<1x308xbf16> to vector<1x296xbf16>
    %15 = vector.extract_strided_slice %2 {offsets = [0, 12], sizes = [1, 296], strides = [1, 1]} : vector<1x308xbf16> to vector<1x296xbf16>
    %16 = tpu.concatenate %3, %4, %5, %6, %7, %8, %9, %10, %11, %12, %13, %14, %15 in 0 : vector<1x296xbf16>, vector<1x296xbf16>, vector<1x296xbf16>, vector<1x296xbf16>, vector<1x296xbf16>, vector<1x296xbf16>, vector<1x296xbf16>, vector<1x296xbf16>, vector<1x296xbf16>, vector<1x296xbf16>, vector<1x296xbf16>, vector<1x296xbf16>, vector<1x296xbf16> -> vector<13x296xbf16>
    %c0_3 = arith.constant 0 : index
    %c0_4 = arith.constant 0 : index
    %17 = vector.load %arg5[%c0_3, %c0_4] : memref<32x13xbf16, #tpu.memory_space<vmem>>, vector<32x13xbf16>
    %cst = arith.constant dense<0.000000e+00> : vector<32x296xf32>
    %18 = tpu.matmul %17, %16, %cst {dimension_numbers = #tpu.dot_dimension_numbers<[1], [0], [0], [1], [0, 0, 1, 1], [], []>} : vector<32x13xbf16>, vector<13x296xbf16>, vector<32x296xf32> -> vector<32x296xf32>
    %c0_5 = arith.constant 0 : index
    %c0_6 = arith.constant 0 : index
    %c0_7 = arith.constant 0 : index
    %c0_8 = arith.constant 0 : index
    %19 = vector.load %arg3[%c0_5, %c0_6, %c0_7, %c0_8] : memref<1x4x32x1xf32, #tpu.memory_space<vmem>>, vector<1x1x32x1xf32>
    %20 = vector.shape_cast %19 : vector<1x1x32x1xf32> to vector<32x1xf32>
    %c0_9 = arith.constant 0 : index
    %c0_10 = arith.constant 0 : index
    %c0_11 = arith.constant 0 : index
    %c0_12 = arith.constant 0 : index
    %21 = vector.load %arg4[%c0_9, %c0_10, %c0_11, %c0_12] : memref<1x4x32x1xf32, #tpu.memory_space<vmem>>, vector<1x1x32x1xf32>
    %22 = vector.shape_cast %21 : vector<1x1x32x1xf32> to vector<32x1xf32>
    %23 = vector.broadcast %20 : vector<32x1xf32> to vector<32x296xf32>
    %24 = arith.mulf %18, %23 : vector<32x296xf32>
    %25 = vector.broadcast %22 : vector<32x1xf32> to vector<32x296xf32>
    %26 = arith.addf %24, %25 : vector<32x296xf32>
    %c0_13 = arith.constant 0 : index
    %27 = memref.load %arg15[%c0_13] : memref<4xf32, #tpu.memory_space<smem>>
    %cst_14 = arith.constant 0.000000e+00 : f32
    %28 = vector.broadcast %cst_14 : f32 to vector<32x296xf32>
    %29 = arith.cmpf oge, %26, %28 : vector<32x296xf32>
    %30 = vector.broadcast %27 : f32 to vector<32x296xf32>
    %31 = arith.mulf %30, %26 : vector<32x296xf32>
    %32 = arith.select %29, %26, %31 : vector<32x296xi1>, vector<32x296xf32>
    %33 = vector.extract_strided_slice %1 {offsets = [0, 12], sizes = [1, 296], strides = [1, 1]} : vector<1x308xf32> to vector<1x296xf32>
    %c0_15 = arith.constant 0 : index
    %c0_16 = arith.constant 0 : index
    %34 = vector.load %arg6[%c0_15, %c0_16] : memref<32x1xf32, #tpu.memory_space<vmem>>, vector<32x1xf32>
    %35 = vector.broadcast %34 : vector<32x1xf32> to vector<32x296xf32>
    %36 = vector.broadcast %33 : vector<1x296xf32> to vector<32x296xf32>
    %37 = arith.mulf %35, %36 : vector<32x296xf32>
    %38 = arith.addf %32, %37 : vector<32x296xf32>
    %39 = arith.truncf %38 : vector<32x296xf32> to vector<32x296xbf16>
    %40 = vector.extract_strided_slice %39 {offsets = [0, 0], sizes = [32, 272], strides = [1, 1]} : vector<32x296xbf16> to vector<32x272xbf16>
    %41 = vector.extract_strided_slice %39 {offsets = [0, 2], sizes = [32, 272], strides = [1, 1]} : vector<32x296xbf16> to vector<32x272xbf16>
    %42 = vector.extract_strided_slice %39 {offsets = [0, 4], sizes = [32, 272], strides = [1, 1]} : vector<32x296xbf16> to vector<32x272xbf16>
    %43 = vector.extract_strided_slice %39 {offsets = [0, 6], sizes = [32, 272], strides = [1, 1]} : vector<32x296xbf16> to vector<32x272xbf16>
    %44 = vector.extract_strided_slice %39 {offsets = [0, 8], sizes = [32, 272], strides = [1, 1]} : vector<32x296xbf16> to vector<32x272xbf16>
    %45 = vector.extract_strided_slice %39 {offsets = [0, 10], sizes = [32, 272], strides = [1, 1]} : vector<32x296xbf16> to vector<32x272xbf16>
    %46 = vector.extract_strided_slice %39 {offsets = [0, 12], sizes = [32, 272], strides = [1, 1]} : vector<32x296xbf16> to vector<32x272xbf16>
    %47 = vector.extract_strided_slice %39 {offsets = [0, 14], sizes = [32, 272], strides = [1, 1]} : vector<32x296xbf16> to vector<32x272xbf16>
    %48 = vector.extract_strided_slice %39 {offsets = [0, 16], sizes = [32, 272], strides = [1, 1]} : vector<32x296xbf16> to vector<32x272xbf16>
    %49 = vector.extract_strided_slice %39 {offsets = [0, 18], sizes = [32, 272], strides = [1, 1]} : vector<32x296xbf16> to vector<32x272xbf16>
    %50 = vector.extract_strided_slice %39 {offsets = [0, 20], sizes = [32, 272], strides = [1, 1]} : vector<32x296xbf16> to vector<32x272xbf16>
    %51 = vector.extract_strided_slice %39 {offsets = [0, 22], sizes = [32, 272], strides = [1, 1]} : vector<32x296xbf16> to vector<32x272xbf16>
    %52 = vector.extract_strided_slice %39 {offsets = [0, 24], sizes = [32, 272], strides = [1, 1]} : vector<32x296xbf16> to vector<32x272xbf16>
    %53 = tpu.concatenate %40, %41, %42, %43, %44, %45, %46, %47, %48, %49, %50, %51, %52 in 0 : vector<32x272xbf16>, vector<32x272xbf16>, vector<32x272xbf16>, vector<32x272xbf16>, vector<32x272xbf16>, vector<32x272xbf16>, vector<32x272xbf16>, vector<32x272xbf16>, vector<32x272xbf16>, vector<32x272xbf16>, vector<32x272xbf16>, vector<32x272xbf16>, vector<32x272xbf16> -> vector<416x272xbf16>
    %c0_17 = arith.constant 0 : index
    %c0_18 = arith.constant 0 : index
    %54 = vector.load %arg7[%c0_17, %c0_18] : memref<32x416xbf16, #tpu.memory_space<vmem>>, vector<32x416xbf16>
    %cst_19 = arith.constant dense<0.000000e+00> : vector<32x272xf32>
    %55 = tpu.matmul %54, %53, %cst_19 {dimension_numbers = #tpu.dot_dimension_numbers<[1], [0], [0], [1], [0, 0, 1, 1], [], []>} : vector<32x416xbf16>, vector<416x272xbf16>, vector<32x272xf32> -> vector<32x272xf32>
    %c0_20 = arith.constant 0 : index
    %c1 = arith.constant 1 : index
    %c0_21 = arith.constant 0 : index
    %c0_22 = arith.constant 0 : index
    %56 = vector.load %arg3[%c0_20, %c1, %c0_21, %c0_22] : memref<1x4x32x1xf32, #tpu.memory_space<vmem>>, vector<1x1x32x1xf32>
    %57 = vector.shape_cast %56 : vector<1x1x32x1xf32> to vector<32x1xf32>
    %c0_23 = arith.constant 0 : index
    %c1_24 = arith.constant 1 : index
    %c0_25 = arith.constant 0 : index
    %c0_26 = arith.constant 0 : index
    %58 = vector.load %arg4[%c0_23, %c1_24, %c0_25, %c0_26] : memref<1x4x32x1xf32, #tpu.memory_space<vmem>>, vector<1x1x32x1xf32>
    %59 = vector.shape_cast %58 : vector<1x1x32x1xf32> to vector<32x1xf32>
    %60 = vector.broadcast %57 : vector<32x1xf32> to vector<32x272xf32>
    %61 = arith.mulf %55, %60 : vector<32x272xf32>
    %62 = vector.broadcast %59 : vector<32x1xf32> to vector<32x272xf32>
    %63 = arith.addf %61, %62 : vector<32x272xf32>
    %c1_27 = arith.constant 1 : index
    %64 = memref.load %arg15[%c1_27] : memref<4xf32, #tpu.memory_space<smem>>
    %cst_28 = arith.constant 0.000000e+00 : f32
    %65 = vector.broadcast %cst_28 : f32 to vector<32x272xf32>
    %66 = arith.cmpf oge, %63, %65 : vector<32x272xf32>
    %67 = vector.broadcast %64 : f32 to vector<32x272xf32>
    %68 = arith.mulf %67, %63 : vector<32x272xf32>
    %69 = arith.select %66, %63, %68 : vector<32x272xi1>, vector<32x272xf32>
    %70 = vector.extract_strided_slice %38 {offsets = [0, 24], sizes = [32, 272], strides = [1, 1]} : vector<32x296xf32> to vector<32x272xf32>
    %c0_29 = arith.constant 0 : index
    %c0_30 = arith.constant 0 : index
    %71 = vector.load %arg8[%c0_29, %c0_30] : memref<32x32xf32, #tpu.memory_space<vmem>>, vector<32x32xf32>
    %cst_31 = arith.constant dense<0.000000e+00> : vector<32x272xf32>
    %72 = tpu.matmul %71, %70, %cst_31 {dimension_numbers = #tpu.dot_dimension_numbers<[1], [0], [0], [1], [0, 0, 1, 1], [], []>} : vector<32x32xf32>, vector<32x272xf32>, vector<32x272xf32> -> vector<32x272xf32>
    %73 = arith.addf %69, %72 : vector<32x272xf32>
    %74 = arith.truncf %73 : vector<32x272xf32> to vector<32x272xbf16>
    %75 = vector.extract_strided_slice %74 {offsets = [0, 0], sizes = [32, 224], strides = [1, 1]} : vector<32x272xbf16> to vector<32x224xbf16>
    %76 = vector.extract_strided_slice %74 {offsets = [0, 4], sizes = [32, 224], strides = [1, 1]} : vector<32x272xbf16> to vector<32x224xbf16>
    %77 = vector.extract_strided_slice %74 {offsets = [0, 8], sizes = [32, 224], strides = [1, 1]} : vector<32x272xbf16> to vector<32x224xbf16>
    %78 = vector.extract_strided_slice %74 {offsets = [0, 12], sizes = [32, 224], strides = [1, 1]} : vector<32x272xbf16> to vector<32x224xbf16>
    %79 = vector.extract_strided_slice %74 {offsets = [0, 16], sizes = [32, 224], strides = [1, 1]} : vector<32x272xbf16> to vector<32x224xbf16>
    %80 = vector.extract_strided_slice %74 {offsets = [0, 20], sizes = [32, 224], strides = [1, 1]} : vector<32x272xbf16> to vector<32x224xbf16>
    %81 = vector.extract_strided_slice %74 {offsets = [0, 24], sizes = [32, 224], strides = [1, 1]} : vector<32x272xbf16> to vector<32x224xbf16>
    %82 = vector.extract_strided_slice %74 {offsets = [0, 28], sizes = [32, 224], strides = [1, 1]} : vector<32x272xbf16> to vector<32x224xbf16>
    %83 = vector.extract_strided_slice %74 {offsets = [0, 32], sizes = [32, 224], strides = [1, 1]} : vector<32x272xbf16> to vector<32x224xbf16>
    %84 = vector.extract_strided_slice %74 {offsets = [0, 36], sizes = [32, 224], strides = [1, 1]} : vector<32x272xbf16> to vector<32x224xbf16>
    %85 = vector.extract_strided_slice %74 {offsets = [0, 40], sizes = [32, 224], strides = [1, 1]} : vector<32x272xbf16> to vector<32x224xbf16>
    %86 = vector.extract_strided_slice %74 {offsets = [0, 44], sizes = [32, 224], strides = [1, 1]} : vector<32x272xbf16> to vector<32x224xbf16>
    %87 = vector.extract_strided_slice %74 {offsets = [0, 48], sizes = [32, 224], strides = [1, 1]} : vector<32x272xbf16> to vector<32x224xbf16>
    %88 = tpu.concatenate %75, %76, %77, %78, %79, %80, %81, %82, %83, %84, %85, %86, %87 in 0 : vector<32x224xbf16>, vector<32x224xbf16>, vector<32x224xbf16>, vector<32x224xbf16>, vector<32x224xbf16>, vector<32x224xbf16>, vector<32x224xbf16>, vector<32x224xbf16>, vector<32x224xbf16>, vector<32x224xbf16>, vector<32x224xbf16>, vector<32x224xbf16>, vector<32x224xbf16> -> vector<416x224xbf16>
    %c0_32 = arith.constant 0 : index
    %c0_33 = arith.constant 0 : index
    %89 = vector.load %arg9[%c0_32, %c0_33] : memref<32x416xbf16, #tpu.memory_space<vmem>>, vector<32x416xbf16>
    %cst_34 = arith.constant dense<0.000000e+00> : vector<32x224xf32>
    %90 = tpu.matmul %89, %88, %cst_34 {dimension_numbers = #tpu.dot_dimension_numbers<[1], [0], [0], [1], [0, 0, 1, 1], [], []>} : vector<32x416xbf16>, vector<416x224xbf16>, vector<32x224xf32> -> vector<32x224xf32>
    %c0_35 = arith.constant 0 : index
    %c2 = arith.constant 2 : index
    %c0_36 = arith.constant 0 : index
    %c0_37 = arith.constant 0 : index
    %91 = vector.load %arg3[%c0_35, %c2, %c0_36, %c0_37] : memref<1x4x32x1xf32, #tpu.memory_space<vmem>>, vector<1x1x32x1xf32>
    %92 = vector.shape_cast %91 : vector<1x1x32x1xf32> to vector<32x1xf32>
    %c0_38 = arith.constant 0 : index
    %c2_39 = arith.constant 2 : index
    %c0_40 = arith.constant 0 : index
    %c0_41 = arith.constant 0 : index
    %93 = vector.load %arg4[%c0_38, %c2_39, %c0_40, %c0_41] : memref<1x4x32x1xf32, #tpu.memory_space<vmem>>, vector<1x1x32x1xf32>
    %94 = vector.shape_cast %93 : vector<1x1x32x1xf32> to vector<32x1xf32>
    %95 = vector.broadcast %92 : vector<32x1xf32> to vector<32x224xf32>
    %96 = arith.mulf %90, %95 : vector<32x224xf32>
    %97 = vector.broadcast %94 : vector<32x1xf32> to vector<32x224xf32>
    %98 = arith.addf %96, %97 : vector<32x224xf32>
    %c2_42 = arith.constant 2 : index
    %99 = memref.load %arg15[%c2_42] : memref<4xf32, #tpu.memory_space<smem>>
    %cst_43 = arith.constant 0.000000e+00 : f32
    %100 = vector.broadcast %cst_43 : f32 to vector<32x224xf32>
    %101 = arith.cmpf oge, %98, %100 : vector<32x224xf32>
    %102 = vector.broadcast %99 : f32 to vector<32x224xf32>
    %103 = arith.mulf %102, %98 : vector<32x224xf32>
    %104 = arith.select %101, %98, %103 : vector<32x224xi1>, vector<32x224xf32>
    %105 = vector.extract_strided_slice %73 {offsets = [0, 48], sizes = [32, 224], strides = [1, 1]} : vector<32x272xf32> to vector<32x224xf32>
    %c0_44 = arith.constant 0 : index
    %c0_45 = arith.constant 0 : index
    %106 = vector.load %arg10[%c0_44, %c0_45] : memref<32x32xf32, #tpu.memory_space<vmem>>, vector<32x32xf32>
    %cst_46 = arith.constant dense<0.000000e+00> : vector<32x224xf32>
    %107 = tpu.matmul %106, %105, %cst_46 {dimension_numbers = #tpu.dot_dimension_numbers<[1], [0], [0], [1], [0, 0, 1, 1], [], []>} : vector<32x32xf32>, vector<32x224xf32>, vector<32x224xf32> -> vector<32x224xf32>
    %108 = arith.addf %104, %107 : vector<32x224xf32>
    %109 = arith.truncf %108 : vector<32x224xf32> to vector<32x224xbf16>
    %110 = vector.extract_strided_slice %109 {offsets = [0, 0], sizes = [32, 128], strides = [1, 1]} : vector<32x224xbf16> to vector<32x128xbf16>
    %111 = vector.extract_strided_slice %109 {offsets = [0, 8], sizes = [32, 128], strides = [1, 1]} : vector<32x224xbf16> to vector<32x128xbf16>
    %112 = vector.extract_strided_slice %109 {offsets = [0, 16], sizes = [32, 128], strides = [1, 1]} : vector<32x224xbf16> to vector<32x128xbf16>
    %113 = vector.extract_strided_slice %109 {offsets = [0, 24], sizes = [32, 128], strides = [1, 1]} : vector<32x224xbf16> to vector<32x128xbf16>
    %114 = vector.extract_strided_slice %109 {offsets = [0, 32], sizes = [32, 128], strides = [1, 1]} : vector<32x224xbf16> to vector<32x128xbf16>
    %115 = vector.extract_strided_slice %109 {offsets = [0, 40], sizes = [32, 128], strides = [1, 1]} : vector<32x224xbf16> to vector<32x128xbf16>
    %116 = vector.extract_strided_slice %109 {offsets = [0, 48], sizes = [32, 128], strides = [1, 1]} : vector<32x224xbf16> to vector<32x128xbf16>
    %117 = vector.extract_strided_slice %109 {offsets = [0, 56], sizes = [32, 128], strides = [1, 1]} : vector<32x224xbf16> to vector<32x128xbf16>
    %118 = vector.extract_strided_slice %109 {offsets = [0, 64], sizes = [32, 128], strides = [1, 1]} : vector<32x224xbf16> to vector<32x128xbf16>
    %119 = vector.extract_strided_slice %109 {offsets = [0, 72], sizes = [32, 128], strides = [1, 1]} : vector<32x224xbf16> to vector<32x128xbf16>
    %120 = vector.extract_strided_slice %109 {offsets = [0, 80], sizes = [32, 128], strides = [1, 1]} : vector<32x224xbf16> to vector<32x128xbf16>
    %121 = vector.extract_strided_slice %109 {offsets = [0, 88], sizes = [32, 128], strides = [1, 1]} : vector<32x224xbf16> to vector<32x128xbf16>
    %122 = vector.extract_strided_slice %109 {offsets = [0, 96], sizes = [32, 128], strides = [1, 1]} : vector<32x224xbf16> to vector<32x128xbf16>
    %123 = tpu.concatenate %110, %111, %112, %113, %114, %115, %116, %117, %118, %119, %120, %121, %122 in 0 : vector<32x128xbf16>, vector<32x128xbf16>, vector<32x128xbf16>, vector<32x128xbf16>, vector<32x128xbf16>, vector<32x128xbf16>, vector<32x128xbf16>, vector<32x128xbf16>, vector<32x128xbf16>, vector<32x128xbf16>, vector<32x128xbf16>, vector<32x128xbf16>, vector<32x128xbf16> -> vector<416x128xbf16>
    %c0_47 = arith.constant 0 : index
    %c0_48 = arith.constant 0 : index
    %124 = vector.load %arg11[%c0_47, %c0_48] : memref<32x416xbf16, #tpu.memory_space<vmem>>, vector<32x416xbf16>
    %cst_49 = arith.constant dense<0.000000e+00> : vector<32x128xf32>
    %125 = tpu.matmul %124, %123, %cst_49 {dimension_numbers = #tpu.dot_dimension_numbers<[1], [0], [0], [1], [0, 0, 1, 1], [], []>} : vector<32x416xbf16>, vector<416x128xbf16>, vector<32x128xf32> -> vector<32x128xf32>
    %c0_50 = arith.constant 0 : index
    %c3 = arith.constant 3 : index
    %c0_51 = arith.constant 0 : index
    %c0_52 = arith.constant 0 : index
    %126 = vector.load %arg3[%c0_50, %c3, %c0_51, %c0_52] : memref<1x4x32x1xf32, #tpu.memory_space<vmem>>, vector<1x1x32x1xf32>
    %127 = vector.shape_cast %126 : vector<1x1x32x1xf32> to vector<32x1xf32>
    %c0_53 = arith.constant 0 : index
    %c3_54 = arith.constant 3 : index
    %c0_55 = arith.constant 0 : index
    %c0_56 = arith.constant 0 : index
    %128 = vector.load %arg4[%c0_53, %c3_54, %c0_55, %c0_56] : memref<1x4x32x1xf32, #tpu.memory_space<vmem>>, vector<1x1x32x1xf32>
    %129 = vector.shape_cast %128 : vector<1x1x32x1xf32> to vector<32x1xf32>
    %130 = vector.broadcast %127 : vector<32x1xf32> to vector<32x128xf32>
    %131 = arith.mulf %125, %130 : vector<32x128xf32>
    %132 = vector.broadcast %129 : vector<32x1xf32> to vector<32x128xf32>
    %133 = arith.addf %131, %132 : vector<32x128xf32>
    %c3_57 = arith.constant 3 : index
    %134 = memref.load %arg15[%c3_57] : memref<4xf32, #tpu.memory_space<smem>>
    %cst_58 = arith.constant 0.000000e+00 : f32
    %135 = vector.broadcast %cst_58 : f32 to vector<32x128xf32>
    %136 = arith.cmpf oge, %133, %135 : vector<32x128xf32>
    %137 = vector.broadcast %134 : f32 to vector<32x128xf32>
    %138 = arith.mulf %137, %133 : vector<32x128xf32>
    %139 = arith.select %136, %133, %138 : vector<32x128xi1>, vector<32x128xf32>
    %140 = vector.extract_strided_slice %108 {offsets = [0, 96], sizes = [32, 128], strides = [1, 1]} : vector<32x224xf32> to vector<32x128xf32>
    %c0_59 = arith.constant 0 : index
    %c0_60 = arith.constant 0 : index
    %141 = vector.load %arg12[%c0_59, %c0_60] : memref<32x32xf32, #tpu.memory_space<vmem>>, vector<32x32xf32>
    %cst_61 = arith.constant dense<0.000000e+00> : vector<32x128xf32>
    %142 = tpu.matmul %141, %140, %cst_61 {dimension_numbers = #tpu.dot_dimension_numbers<[1], [0], [0], [1], [0, 0, 1, 1], [], []>} : vector<32x32xf32>, vector<32x128xf32>, vector<32x128xf32> -> vector<32x128xf32>
    %143 = arith.addf %139, %142 : vector<32x128xf32>
    %c0_62 = arith.constant 0 : index
    %c0_63 = arith.constant 0 : index
    %144 = vector.load %arg13[%c0_62, %c0_63] : memref<1x32xf32, #tpu.memory_space<vmem>>, vector<1x32xf32>
    %cst_64 = arith.constant dense<0.000000e+00> : vector<1x128xf32>
    %145 = tpu.matmul %144, %143, %cst_64 {dimension_numbers = #tpu.dot_dimension_numbers<[1], [0], [0], [1], [0, 0, 1, 1], [], []>} : vector<1x32xf32>, vector<32x128xf32>, vector<1x128xf32> -> vector<1x128xf32>
    %c0_65 = arith.constant 0 : index
    %c0_66 = arith.constant 0 : index
    %146 = vector.load %arg14[%c0_65, %c0_66] : memref<1x1xf32, #tpu.memory_space<vmem>>, vector<1x1xf32>
    %147 = vector.broadcast %146 : vector<1x1xf32> to vector<1x128xf32>
    %148 = arith.addf %145, %147 : vector<1x128xf32>
    %149 = math.tanh %148 : vector<1x128xf32>
    %c0_67 = arith.constant 0 : index
    %c0_68 = arith.constant 0 : index
    %c0_69 = arith.constant 0 : index
    %150 = vector.load %arg16[%c0_67, %c0_68, %c0_69] : memref<1x1x128xf32, #tpu.memory_space<vmem>>, vector<1x1x128xf32>
    %151 = vector.shape_cast %150 : vector<1x1x128xf32> to vector<1x128xf32>
    %152 = vector.shape_cast %149 : vector<1x128xf32> to vector<1x1x128xf32>
    tpu.vector_store %arg16[%c0_67, %c0_68, %c0_69], %152 {strides = array<i32>} : memref<1x1x128xf32, #tpu.memory_space<vmem>>, vector<1x1x128xf32>,
    return
  }
  func.func @transform_0(%arg0: i32, %arg1: i32) -> (i32, i32, i32, i32) {
    %c0_i32 = arith.constant 0 : i32
    %c0_i32_0 = arith.constant 0 : i32
    %c0_i32_1 = arith.constant 0 : i32
    return %arg0, %arg1, %c0_i32, %c0_i32_0 : i32, i32, i32, i32
  }
  func.func @transform_1(%arg0: i32, %arg1: i32) -> (i32, i32, i32, i32) {
    %c0_i32 = arith.constant 0 : i32
    %c0_i32_0 = arith.constant 0 : i32
    %c0_i32_1 = arith.constant 0 : i32
    %c0_i32_2 = arith.constant 0 : i32
    return %arg0, %c0_i32, %c0_i32_0, %c0_i32_1 : i32, i32, i32, i32
  }
  func.func @transform_2(%arg0: i32, %arg1: i32) -> (i32, i32, i32, i32) {
    %c0_i32 = arith.constant 0 : i32
    %c0_i32_0 = arith.constant 0 : i32
    %c0_i32_1 = arith.constant 0 : i32
    %c0_i32_2 = arith.constant 0 : i32
    return %arg0, %c0_i32, %c0_i32_0, %c0_i32_1 : i32, i32, i32, i32
  }
  func.func @transform_3(%arg0: i32, %arg1: i32) -> (i32, i32) {
    %c0_i32 = arith.constant 0 : i32
    %c0_i32_0 = arith.constant 0 : i32
    %c0_i32_1 = arith.constant 0 : i32
    return %c0_i32, %c0_i32_0 : i32, i32
  }
  func.func @transform_4(%arg0: i32, %arg1: i32) -> (i32, i32) {
    %c0_i32 = arith.constant 0 : i32
    %c0_i32_0 = arith.constant 0 : i32
    %c0_i32_1 = arith.constant 0 : i32
    return %c0_i32, %c0_i32_0 : i32, i32
  }
  func.func @transform_5(%arg0: i32, %arg1: i32) -> (i32, i32) {
    %c0_i32 = arith.constant 0 : i32
    %c0_i32_0 = arith.constant 0 : i32
    %c0_i32_1 = arith.constant 0 : i32
    return %c0_i32, %c0_i32_0 : i32, i32
  }
  func.func @transform_6(%arg0: i32, %arg1: i32) -> (i32, i32) {
    %c0_i32 = arith.constant 0 : i32
    %c0_i32_0 = arith.constant 0 : i32
    %c0_i32_1 = arith.constant 0 : i32
    return %c0_i32, %c0_i32_0 : i32, i32
  }
  func.func @transform_7(%arg0: i32, %arg1: i32) -> (i32, i32) {
    %c0_i32 = arith.constant 0 : i32
    %c0_i32_0 = arith.constant 0 : i32
    %c0_i32_1 = arith.constant 0 : i32
    return %c0_i32, %c0_i32_0 : i32, i32
  }
  func.func @transform_8(%arg0: i32, %arg1: i32) -> (i32, i32) {
    %c0_i32 = arith.constant 0 : i32
    %c0_i32_0 = arith.constant 0 : i32
    %c0_i32_1 = arith.constant 0 : i32
    return %c0_i32, %c0_i32_0 : i32, i32
  }
  func.func @transform_9(%arg0: i32, %arg1: i32) -> (i32, i32) {
    %c0_i32 = arith.constant 0 : i32
    %c0_i32_0 = arith.constant 0 : i32
    %c0_i32_1 = arith.constant 0 : i32
    return %c0_i32, %c0_i32_0 : i32, i32
  }
  func.func @transform_10(%arg0: i32, %arg1: i32) -> (i32, i32) {
    %c0_i32 = arith.constant 0 : i32
    %c0_i32_0 = arith.constant 0 : i32
    %c0_i32_1 = arith.constant 0 : i32
    return %c0_i32, %c0_i32_0 : i32, i32
  }
  func.func @transform_11(%arg0: i32, %arg1: i32) -> (i32, i32) {
    %c0_i32 = arith.constant 0 : i32
    %c0_i32_0 = arith.constant 0 : i32
    %c0_i32_1 = arith.constant 0 : i32
    return %c0_i32, %c0_i32_0 : i32, i32
  }
  func.func @transform_12(%arg0: i32, %arg1: i32) -> (i32, i32) {
    %c0_i32 = arith.constant 0 : i32
    %c0_i32_0 = arith.constant 0 : i32
    %c0_i32_1 = arith.constant 0 : i32
    return %c0_i32, %c0_i32_0 : i32, i32
  }
  func.func @transform_13(%arg0: i32, %arg1: i32) -> i32 {
    %c0_i32 = arith.constant 0 : i32
    %c0_i32_0 = arith.constant 0 : i32
    return %c0_i32 : i32
  }
  func.func @transform_14(%arg0: i32, %arg1: i32) -> (i32, i32, i32) {
    %c0_i32 = arith.constant 0 : i32
    %c0_i32_0 = arith.constant 0 : i32
    return %arg0, %c0_i32, %arg1 : i32, i32, i32
  }
}

</mosaic_0001>

<llo_original>
// kernel: overdrive_forward.1
$region0: #{overdrive_forward.1}
  #allocation0 [shape = 'u32[]', space=smem, size = 0x4, offset = 0x4, fixed_abs, tag = 'smem constant byte address 0x4 - core index']
  #allocation1 [shape = 'u32[72,128]{1,0:T(1,128)}', space=vmem, size = 0x9000, scoped, tag = 'internal scratch']
  #allocation2 [shape = 'f32[1,1]{1,0:T(1,128)S(1)}', space=vmem, size = 0x200, scoped, tag = 'scoped memory for overdrive_forward.1']
  %s0 = inlined_call_operand.vmem [shape: f32[2,3,1,308], index: 0, kind: input, shape index: {}]
  %s1 = inlined_call_operand.vmem [shape: f32[2,4,32,1], index: 1, kind: input, shape index: {}]
  %s2 = inlined_call_operand.vmem [shape: f32[2,4,32,1], index: 2, kind: input, shape index: {}]
  %s3 = inlined_call_operand.vmem [shape: bf16[32,13], index: 3, kind: input, shape index: {}]
  %s4 = inlined_call_operand.vmem [shape: f32[32,1], index: 4, kind: input, shape index: {}]
  %s5 = inlined_call_operand.vmem [shape: bf16[32,416], index: 5, kind: input, shape index: {}]
  %s6 = inlined_call_operand.vmem [shape: f32[32,32], index: 6, kind: input, shape index: {}]
  %s7 = inlined_call_operand.vmem [shape: bf16[32,416], index: 7, kind: input, shape index: {}]
  %s8 = inlined_call_operand.vmem [shape: f32[32,32], index: 8, kind: input, shape index: {}]
  %s9 = inlined_call_operand.vmem [shape: bf16[32,416], index: 9, kind: input, shape index: {}]
  %s10 = inlined_call_operand.vmem [shape: f32[32,32], index: 10, kind: input, shape index: {}]
  %s11 = inlined_call_operand.vmem [shape: f32[1,32], index: 11, kind: input, shape index: {}]
  %s12 = inlined_call_operand.<no memory space> [shape: f32[1,1], index: 12, kind: input, shape index: {}]
  %s13 = inlined_call_operand.vmem [shape: f32[4], index: 13, kind: input, shape index: {}]
  %s14 = inlined_call_operand.hbm [shape: f32[2,1,384], index: 14, kind: output, shape index: {}]
  %s15 = sld [smem:[#allocation0]]
  $region93: #{overdrive_forward.1} parent=0
    _
  %s17 = ssub.s32 1, %s15
  %s18 = scalar_select 0, %s17, %s15
  %v19 = vstv %s12
  %20 = vst [vmem:[#allocation2] sm:$0x1] %v19
  $region1: #{overdrive_forward.1} parent=0
    #allocation3 [shape = 'u8[512]{0}', space=smem, size = 0x200, scoped, tag = 'input window, operand 13, single buffered']
    #allocation4 [shape = 's32[2]{0}', space=sflag, size = 0x8, scoped, tag = 'scoped memory for overdrive_forward.1']
    #allocation5 [shape = 's32[2]{0}', space=sflag, size = 0x8, scoped, tag = 'scoped memory for overdrive_forward.1']
    #allocation6 [shape = 'u8[1024]{0}', space=vmem, size = 0x400, scoped, tag = 'output window, operand 0']
    %21 = vsyncpa [#allocation5], 0
    %22 = vsyncpa [#allocation4], 0
    %s23 = scalar_lea.sflag [#allocation4], 1
    %24 = vsyncpa %s23, 0
    loop: start=0, step=1, limit=8
    $region2: #{overdrive_forward.1} parent=1 // loop_pre_header
      _
    $region3: #{overdrive_forward.1} parent=1 // loop_header
      %s26 = sphi 0, %s30
      %p27 = scmp.ge.s32.totalorder %s26, 8
      %s33 = sphi 0, %s45
      %s34 = sphi 0, %s41
      %s35 = sphi 0, %s33
      %s36 = sphi 0, %s34
      %s37 = sphi 0, %s35
      %s38 = sphi 0, %s36
      %s50 = sphi 0, %s52
      %s53 = sphi 0, %s50
      %s54 = sphi 0, %s53
      %s70 = sphi 0, %s54
      %s76 = sphi 0, %s78
      %s79 = sphi 0, %s76
      %s80 = sphi 0, %s79
      %s96 = sphi 0, %s80
      %s102 = sphi 0, %s104
      %s105 = sphi 0, %s102
      %s106 = sphi 0, %s105
      %s122 = sphi 0, %s106
      %s126 = sphi 0, %s126
      %s128 = sphi 0, %s126
      %s129 = sphi 0, %s128
      %s143 = sphi 0, %s129
      %s147 = sphi 0, %s147
      %s149 = sphi 0, %s147
      %s150 = sphi 0, %s149
      %s164 = sphi 0, %s150
      %s168 = sphi 0, %s168
      %s170 = sphi 0, %s168
      %s171 = sphi 0, %s170
      %s185 = sphi 0, %s171
      %s189 = sphi 0, %s189
      %s191 = sphi 0, %s189
      %s192 = sphi 0, %s191
      %s206 = sphi 0, %s192
      %s210 = sphi 0, %s210
      %s212 = sphi 0, %s210
      %s213 = sphi 0, %s212
      %s227 = sphi 0, %s213
      %s231 = sphi 0, %s231
      %s233 = sphi 0, %s231
      %s234 = sphi 0, %s233
      %s248 = sphi 0, %s234
      %s252 = sphi 0, %s252
      %s254 = sphi 0, %s252
      %s255 = sphi 0, %s254
      %s269 = sphi 0, %s255
      %s273 = sphi 0, %s273
      %s275 = sphi 0, %s273
      %s276 = sphi 0, %s275
      %s290 = sphi 0, %s276
      %s294 = sphi 0, %s294
      %s296 = sphi 0, %s294
      %s297 = sphi 0, %s296
      %s311 = sphi 0, %s297
      %s315 = sphi 0, %s315
      %s317 = sphi 0, %s315
      %s318 = sphi 0, %s317
      %s332 = sphi 0, %s318
      %s336 = sphi 0, %s336
      %s338 = sphi 0, %s336
      %s339 = sphi 0, %s338
      %s353 = sphi 0, %s339
      %s361 = sphi 0, %s363
      %s364 = sphi 0, %s361
      %s365 = sphi 0, %s364
      %s381 = sphi 0, %s365
    $region4: #{overdrive_forward.1} parent=1 // loop_header_branch
      %29 = sbr.rel (%p27) target = $region8
    $region5: #{overdrive_forward.1} parent=1 // loop_body
      %s31 = ssub.s32 %s26, 1
      %s32 = ssub.s32 %s26, 2
      %s39 = sadd.s32 1, %s34
      %p40 = scmp.ge.s32.totalorder %s39, 3
      %s41 = scalar_select %p40, 0, %s39
      %s42 = sadd.s32 1, %s33
      %s43 = scalar_select %p40, %s42, %s33
      %p44 = scmp.ge.s32.totalorder %s43, 2
      %s45 = scalar_select %p44, 0, %s43
      %s46 = ssub.s32 %s33, %s45
      %s47 = ssub.s32 %s34, %s41
      %s48 = sor.u32 %s46, %s47
      %p49 = scmp.eq.s32.totalorder %s48, 0
      %s51 = sadd.s32 %s50, 1
      %s52 = scalar_select %p49, %s50, %s51
      %p55 = pneg %p49
      %p56 = scmp.eq.s32.totalorder %s26, 5
      %p57 = por %p55, %p56
      %p58 = scmp.ne.s32.totalorder %s50, %s53
      %p59 = scmp.eq.s32.totalorder %s26, 0
      %p60 = por %p58, %p59
      %p61 = scmp.ne.s32.totalorder %s50, %s53
      %p62 = scmp.eq.s32.totalorder %s31, 5
      %p63 = por %p61, %p62
      %p64 = scmp.ne.s32.totalorder %s53, %s54
      %p65 = scmp.eq.s32.totalorder %s31, 0
      %p66 = por %p64, %p65
      %p67 = scmp.ne.s32.totalorder %s53, %s54
      %p68 = scmp.eq.s32.totalorder %s32, 5
      %p69 = por %p67, %p68
      %p71 = scmp.ne.s32.totalorder %s54, %s70
      %p72 = scmp.eq.s32.totalorder %s32, 0
      %p73 = por %p71, %p72
      %s74 = ssub.s32 %s33, %s45
      %p75 = scmp.eq.s32.totalorder %s74, 0
      %s77 = sadd.s32 %s76, 1
      %s78 = scalar_select %p75, %s76, %s77
      %p81 = pneg %p75
      %p82 = scmp.eq.s32.totalorder %s26, 5
      %p83 = por %p81, %p82
      %p84 = scmp.ne.s32.totalorder %s76, %s79
      %p85 = scmp.eq.s32.totalorder %s26, 0
      %p86 = por %p84, %p85
      %p87 = scmp.ne.s32.totalorder %s76, %s79
      %p88 = scmp.eq.s32.totalorder %s31, 5
      %p89 = por %p87, %p88
      %p90 = scmp.ne.s32.totalorder %s79, %s80
      %p91 = scmp.eq.s32.totalorder %s31, 0
      %p92 = por %p90, %p91
      %p93 = scmp.ne.s32.totalorder %s79, %s80
      %p94 = scmp.eq.s32.totalorder %s32, 5
      %p95 = por %p93, %p94
      %p97 = scmp.ne.s32.totalorder %s80, %s96
      %p98 = scmp.eq.s32.totalorder %s32, 0
      %p99 = por %p97, %p98
      %s100 = ssub.s32 %s33, %s45
      %p101 = scmp.eq.s32.totalorder %s100, 0
      %s103 = sadd.s32 %s102, 1
      %s104 = scalar_select %p101, %s102, %s103
      %p107 = pneg %p101
      %p108 = scmp.eq.s32.totalorder %s26, 5
      %p109 = por %p107, %p108
      %p110 = scmp.ne.s32.totalorder %s102, %s105
      %p111 = scmp.eq.s32.totalorder %s26, 0
      %p112 = por %p110, %p111
      %p113 = scmp.ne.s32.totalorder %s102, %s105
      %p114 = scmp.eq.s32.totalorder %s31, 5
      %p115 = por %p113, %p114
      %p116 = scmp.ne.s32.totalorder %s105, %s106
      %p117 = scmp.eq.s32.totalorder %s31, 0
      %p118 = por %p116, %p117
      %p119 = scmp.ne.s32.totalorder %s105, %s106
      %p120 = scmp.eq.s32.totalorder %s32, 5
      %p121 = por %p119, %p120
      %p123 = scmp.ne.s32.totalorder %s106, %s122
      %p124 = scmp.eq.s32.totalorder %s32, 0
      %p125 = por %p123, %p124
      %s127 = sadd.s32 %s126, 1
      %p130 = scmp.eq.s32.totalorder %s26, 5
      %p131 = scmp.ne.s32.totalorder %s126, %s128
      %p132 = scmp.eq.s32.totalorder %s26, 0
      %p133 = por %p131, %p132
      %p134 = scmp.ne.s32.totalorder %s126, %s128
      %p135 = scmp.eq.s32.totalorder %s31, 5
      %p136 = por %p134, %p135
      %p137 = scmp.ne.s32.totalorder %s128, %s129
      %p138 = scmp.eq.s32.totalorder %s31, 0
      %p139 = por %p137, %p138
      %p140 = scmp.ne.s32.totalorder %s128, %s129
      %p141 = scmp.eq.s32.totalorder %s32, 5
      %p142 = por %p140, %p141
      %p144 = scmp.ne.s32.totalorder %s129, %s143
      %p145 = scmp.eq.s32.totalorder %s32, 0
      %p146 = por %p144, %p145
      %s148 = sadd.s32 %s147, 1
      %p151 = scmp.eq.s32.totalorder %s26, 5
      %p152 = scmp.ne.s32.totalorder %s147, %s149
      %p153 = scmp.eq.s32.totalorder %s26, 0
      %p154 = por %p152, %p153
      %p155 = scmp.ne.s32.totalorder %s147, %s149
      %p156 = scmp.eq.s32.totalorder %s31, 5
      %p157 = por %p155, %p156
      %p158 = scmp.ne.s32.totalorder %s149, %s150
      %p159 = scmp.eq.s32.totalorder %s31, 0
      %p160 = por %p158, %p159
      %p161 = scmp.ne.s32.totalorder %s149, %s150
      %p162 = scmp.eq.s32.totalorder %s32, 5
      %p163 = por %p161, %p162
      %p165 = scmp.ne.s32.totalorder %s150, %s164
      %p166 = scmp.eq.s32.totalorder %s32, 0
      %p167 = por %p165, %p166
      %s169 = sadd.s32 %s168, 1
      %p172 = scmp.eq.s32.totalorder %s26, 5
      %p173 = scmp.ne.s32.totalorder %s168, %s170
      %p174 = scmp.eq.s32.totalorder %s26, 0
      %p175 = por %p173, %p174
      %p176 = scmp.ne.s32.totalorder %s168, %s170
      %p177 = scmp.eq.s32.totalorder %s31, 5
      %p178 = por %p176, %p177
      %p179 = scmp.ne.s32.totalorder %s170, %s171
      %p180 = scmp.eq.s32.totalorder %s31, 0
      %p181 = por %p179, %p180
      %p182 = scmp.ne.s32.totalorder %s170, %s171
      %p183 = scmp.eq.s32.totalorder %s32, 5
      %p184 = por %p182, %p183
      %p186 = scmp.ne.s32.totalorder %s171, %s185
      %p187 = scmp.eq.s32.totalorder %s32, 0
      %p188 = por %p186, %p187
      %s190 = sadd.s32 %s189, 1
      %p193 = scmp.eq.s32.totalorder %s26, 5
      %p194 = scmp.ne.s32.totalorder %s189, %s191
      %p195 = scmp.eq.s32.totalorder %s26, 0
      %p196 = por %p194, %p195
      %p197 = scmp.ne.s32.totalorder %s189, %s191
      %p198 = scmp.eq.s32.totalorder %s31, 5
      %p199 = por %p197, %p198
      %p200 = scmp.ne.s32.totalorder %s191, %s192
      %p201 = scmp.eq.s32.totalorder %s31, 0
      %p202 = por %p200, %p201
      %p203 = scmp.ne.s32.totalorder %s191, %s192
      %p204 = scmp.eq.s32.totalorder %s32, 5
      %p205 = por %p203, %p204
      %p207 = scmp.ne.s32.totalorder %s192, %s206
      %p208 = scmp.eq.s32.totalorder %s32, 0
      %p209 = por %p207, %p208
      %s211 = sadd.s32 %s210, 1
      %p214 = scmp.eq.s32.totalorder %s26, 5
      %p215 = scmp.ne.s32.totalorder %s210, %s212
      %p216 = scmp.eq.s32.totalorder %s26, 0
      %p217 = por %p215, %p216
      %p218 = scmp.ne.s32.totalorder %s210, %s212
      %p219 = scmp.eq.s32.totalorder %s31, 5
      %p220 = por %p218, %p219
      %p221 = scmp.ne.s32.totalorder %s212, %s213
      %p222 = scmp.eq.s32.totalorder %s31, 0
      %p223 = por %p221, %p222
      %p224 = scmp.ne.s32.totalorder %s212, %s213
      %p225 = scmp.eq.s32.totalorder %s32, 5
      %p226 = por %p224, %p225
      %p228 = scmp.ne.s32.totalorder %s213, %s227
      %p229 = scmp.eq.s32.totalorder %s32, 0
      %p230 = por %p228, %p229
      %s232 = sadd.s32 %s231, 1
      %p235 = scmp.eq.s32.totalorder %s26, 5
      %p236 = scmp.ne.s32.totalorder %s231, %s233
      %p237 = scmp.eq.s32.totalorder %s26, 0
      %p238 = por %p236, %p237
      %p239 = scmp.ne.s32.totalorder %s231, %s233
      %p240 = scmp.eq.s32.totalorder %s31, 5
      %p241 = por %p239, %p240
      %p242 = scmp.ne.s32.totalorder %s233, %s234
      %p243 = scmp.eq.s32.totalorder %s31, 0
      %p244 = por %p242, %p243
      %p245 = scmp.ne.s32.totalorder %s233, %s234
      %p246 = scmp.eq.s32.totalorder %s32, 5
      %p247 = por %p245, %p246
      %p249 = scmp.ne.s32.totalorder %s234, %s248
      %p250 = scmp.eq.s32.totalorder %s32, 0
      %p251 = por %p249, %p250
      %s253 = sadd.s32 %s252, 1
      %p256 = scmp.eq.s32.totalorder %s26, 5
      %p257 = scmp.ne.s32.totalorder %s252, %s254
      %p258 = scmp.eq.s32.totalorder %s26, 0
      %p259 = por %p257, %p258
      %p260 = scmp.ne.s32.totalorder %s252, %s254
      %p261 = scmp.eq.s32.totalorder %s31, 5
      %p262 = por %p260, %p261
      %p263 = scmp.ne.s32.totalorder %s254, %s255
      %p264 = scmp.eq.s32.totalorder %s31, 0
      %p265 = por %p263, %p264
      %p266 = scmp.ne.s32.totalorder %s254, %s255
      %p267 = scmp.eq.s32.totalorder %s32, 5
      %p268 = por %p266, %p267
      %p270 = scmp.ne.s32.totalorder %s255, %s269
      %p271 = scmp.eq.s32.totalorder %s32, 0
      %p272 = por %p270, %p271
      %s274 = sadd.s32 %s273, 1
      %p277 = scmp.eq.s32.totalorder %s26, 5
      %p278 = scmp.ne.s32.totalorder %s273, %s275
      %p279 = scmp.eq.s32.totalorder %s26, 0
      %p280 = por %p278, %p279
      %p281 = scmp.ne.s32.totalorder %s273, %s275
      %p282 = scmp.eq.s32.totalorder %s31, 5
      %p283 = por %p281, %p282
      %p284 = scmp.ne.s32.totalorder %s275, %s276
      %p285 = scmp.eq.s32.totalorder %s31, 0
      %p286 = por %p284, %p285
      %p287 = scmp.ne.s32.totalorder %s275, %s276
      %p288 = scmp.eq.s32.totalorder %s32, 5
      %p289 = por %p287, %p288
      %p291 = scmp.ne.s32.totalorder %s276, %s290
      %p292 = scmp.eq.s32.totalorder %s32, 0
      %p293 = por %p291, %p292
      %s295 = sadd.s32 %s294, 1
      %p298 = scmp.eq.s32.totalorder %s26, 5
      %p299 = scmp.ne.s32.totalorder %s294, %s296
      %p300 = scmp.eq.s32.totalorder %s26, 0
      %p301 = por %p299, %p300
      %p302 = scmp.ne.s32.totalorder %s294, %s296
      %p303 = scmp.eq.s32.totalorder %s31, 5
      %p304 = por %p302, %p303
      %p305 = scmp.ne.s32.totalorder %s296, %s297
      %p306 = scmp.eq.s32.totalorder %s31, 0
      %p307 = por %p305, %p306
      %p308 = scmp.ne.s32.totalorder %s296, %s297
      %p309 = scmp.eq.s32.totalorder %s32, 5
      %p310 = por %p308, %p309
      %p312 = scmp.ne.s32.totalorder %s297, %s311
      %p313 = scmp.eq.s32.totalorder %s32, 0
      %p314 = por %p312, %p313
      %s316 = sadd.s32 %s315, 1
      %p319 = scmp.eq.s32.totalorder %s26, 5
      %p320 = scmp.ne.s32.totalorder %s315, %s317
      %p321 = scmp.eq.s32.totalorder %s26, 0
      %p322 = por %p320, %p321
      %p323 = scmp.ne.s32.totalorder %s315, %s317
      %p324 = scmp.eq.s32.totalorder %s31, 5
      %p325 = por %p323, %p324
      %p326 = scmp.ne.s32.totalorder %s317, %s318
      %p327 = scmp.eq.s32.totalorder %s31, 0
      %p328 = por %p326, %p327
      %p329 = scmp.ne.s32.totalorder %s317, %s318
      %p330 = scmp.eq.s32.totalorder %s32, 5
      %p331 = por %p329, %p330
      %p333 = scmp.ne.s32.totalorder %s318, %s332
      %p334 = scmp.eq.s32.totalorder %s32, 0
      %p335 = por %p333, %p334
      %s337 = sadd.s32 %s336, 1
      %p340 = scmp.eq.s32.totalorder %s26, 5
      %p341 = scmp.ne.s32.totalorder %s336, %s338
      %p342 = scmp.eq.s32.totalorder %s26, 0
      %p343 = por %p341, %p342
      %p344 = scmp.ne.s32.totalorder %s336, %s338
      %p345 = scmp.eq.s32.totalorder %s31, 5
      %p346 = por %p344, %p345
      %p347 = scmp.ne.s32.totalorder %s338, %s339
      %p348 = scmp.eq.s32.totalorder %s31, 0
      %p349 = por %p347, %p348
      %p350 = scmp.ne.s32.totalorder %s338, %s339
      %p351 = scmp.eq.s32.totalorder %s32, 5
      %p352 = por %p350, %p351
      %p354 = scmp.ne.s32.totalorder %s339, %s353
      %p355 = scmp.eq.s32.totalorder %s32, 0
      %p356 = por %p354, %p355
      %s357 = ssub.s32 %s33, %s45
      %s358 = ssub.s32 %s34, %s41
      %s359 = sor.u32 %s357, %s358
      %p360 = scmp.eq.s32.totalorder %s359, 0
      %s362 = sadd.s32 %s361, 1
      %s363 = scalar_select %p360, %s361, %s362
      %p366 = pneg %p360
      %p367 = scmp.eq.s32.totalorder %s26, 5
      %p368 = por %p366, %p367
      %p369 = scmp.ne.s32.totalorder %s361, %s364
      %p370 = scmp.eq.s32.totalorder %s26, 0
      %p371 = por %p369, %p370
      %p372 = scmp.ne.s32.totalorder %s361, %s364
      %p373 = scmp.eq.s32.totalorder %s31, 5
      %p374 = por %p372, %p373
      %p375 = scmp.ne.s32.totalorder %s364, %s365
      %p376 = scmp.eq.s32.totalorder %s31, 0
      %p377 = por %p375, %p376
      %p378 = scmp.ne.s32.totalorder %s364, %s365
      %p379 = scmp.eq.s32.totalorder %s32, 5
      %p380 = por %p378, %p379
      %p382 = scmp.ne.s32.totalorder %s365, %s381
      %p383 = scmp.eq.s32.totalorder %s32, 0
      %p384 = por %p382, %p383
      %p385 = scmp.le.s32.totalorder 1, %s26
      %p386 = scmp.lt.s32.totalorder %s26, 7
      %p387 = pnand %p385, %p386
      %p388 = pneg %p387
      // Predicated region
      $region9: #{overdrive_forward.1} parent=5 // pred_check
        _
      $region10: #{overdrive_forward.1} parent=5 // pred_check_branch
        %390 = sbr.rel (%p387) target = $region12
      $region11: #{overdrive_forward.1} parent=5 // pred_region
        %s391 = ssub.s32 %s26, 1
        // Predicated region
        $region13: #{overdrive_forward.1} parent=11 // pred_check
          %p392 = pneg %p139
        $region14: #{overdrive_forward.1} parent=11 // pred_check_branch
          %394 = sbr.rel (%p392) target = $region16
        $region15: #{overdrive_forward.1} parent=11 // pred_region
          _
        $region16: #{overdrive_forward.1} parent=11 // pred_fallthru
          _
        // Predicated region
        $region17: #{overdrive_forward.1} parent=11 // pred_check
          %p395 = pneg %p160
        $region18: #{overdrive_forward.1} parent=11 // pred_check_branch
          %397 = sbr.rel (%p395) target = $region20
        $region19: #{overdrive_forward.1} parent=11 // pred_region
          _
        $region20: #{overdrive_forward.1} parent=11 // pred_fallthru
          _
        // Predicated region
        $region21: #{overdrive_forward.1} parent=11 // pred_check
          %p398 = pneg %p181
        $region22: #{overdrive_forward.1} parent=11 // pred_check_branch
          %400 = sbr.rel (%p398) target = $region24
        $region23: #{overdrive_forward.1} parent=11 // pred_region
          _
        $region24: #{overdrive_forward.1} parent=11 // pred_fallthru
          _
        // Predicated region
        $region25: #{overdrive_forward.1} parent=11 // pred_check
          %p401 = pneg %p202
        $region26: #{overdrive_forward.1} parent=11 // pred_check_branch
          %403 = sbr.rel (%p401) target = $region28
        $region27: #{overdrive_forward.1} parent=11 // pred_region
          _
        $region28: #{overdrive_forward.1} parent=11 // pred_fallthru
          _
        // Predicated region
        $region29: #{overdrive_forward.1} parent=11 // pred_check
          %p404 = pneg %p223
        $region30: #{overdrive_forward.1} parent=11 // pred_check_branch
          %406 = sbr.rel (%p404) target = $region32
        $region31: #{overdrive_forward.1} parent=11 // pred_region
          _
        $region32: #{overdrive_forward.1} parent=11 // pred_fallthru
          _
        // Predicated region
        $region33: #{overdrive_forward.1} parent=11 // pred_check
          %p407 = pneg %p244
        $region34: #{overdrive_forward.1} parent=11 // pred_check_branch
          %409 = sbr.rel (%p407) target = $region36
        $region35: #{overdrive_forward.1} parent=11 // pred_region
          _
        $region36: #{overdrive_forward.1} parent=11 // pred_fallthru
          _
        // Predicated region
        $region37: #{overdrive_forward.1} parent=11 // pred_check
          %p410 = pneg %p265
        $region38: #{overdrive_forward.1} parent=11 // pred_check_branch
          %412 = sbr.rel (%p410) target = $region40
        $region39: #{overdrive_forward.1} parent=11 // pred_region
          _
        $region40: #{overdrive_forward.1} parent=11 // pred_fallthru
          _
        // Predicated region
        $region41: #{overdrive_forward.1} parent=11 // pred_check
          %p413 = pneg %p286
        $region42: #{overdrive_forward.1} parent=11 // pred_check_branch
          %415 = sbr.rel (%p413) target = $region44
        $region43: #{overdrive_forward.1} parent=11 // pred_region
          _
        $region44: #{overdrive_forward.1} parent=11 // pred_fallthru
          _
        // Predicated region
        $region45: #{overdrive_forward.1} parent=11 // pred_check
          %p416 = pneg %p307
        $region46: #{overdrive_forward.1} parent=11 // pred_check_branch
          %418 = sbr.rel (%p416) target = $region48
        $region47: #{overdrive_forward.1} parent=11 // pred_region
          _
        $region48: #{overdrive_forward.1} parent=11 // pred_fallthru
          _
        // Predicated region
        $region49: #{overdrive_forward.1} parent=11 // pred_check
          %p419 = pneg %p328
        $region50: #{overdrive_forward.1} parent=11 // pred_check_branch
          %421 = sbr.rel (%p419) target = $region52
        $region51: #{overdrive_forward.1} parent=11 // pred_region
          _
        $region52: #{overdrive_forward.1} parent=11 // pred_fallthru
          _
        // Predicated region
        $region53: #{overdrive_forward.1} parent=11 // pred_check
          %p422 = pneg %p349
        $region54: #{overdrive_forward.1} parent=11 // pred_check_branch
          %424 = sbr.rel (%p422) target = $region56
        $region55: #{overdrive_forward.1} parent=11 // pred_region
          %426 = vsyncadd [#allocation5], 0
          %s428 = sshll.u32 %s13, 4
          %s429 = int_to_ptr.vmem [resolvable:$true] %s428
          %431 = dma.vmem_to_smem %s429, 16, [#allocation3], [#allocation5]
        $region56: #{overdrive_forward.1} parent=11 // pred_fallthru
          _
      $region12: #{overdrive_forward.1} parent=5 // pred_fallthru
        _
      %p432 = scmp.lt.s32.totalorder %s26, 6
      // Predicated region
      $region57: #{overdrive_forward.1} parent=5 // pred_check
        %p433 = pneg %p432
      $region58: #{overdrive_forward.1} parent=5 // pred_check_branch
        %435 = sbr.rel (%p433) target = $region60
      $region59: #{overdrive_forward.1} parent=5 // pred_region
        // Predicated region
        $region61: #{overdrive_forward.1} parent=59 // pred_check
          %p436 = pneg %p60
        $region62: #{overdrive_forward.1} parent=59 // pred_check_branch
          %438 = sbr.rel (%p436) target = $region64
        $region63: #{overdrive_forward.1} parent=59 // pred_region
          %p439 = scmp.lt.s32.totalorder %s33, 1
          %s440 = scalar_select %p439, %s33, 1
          %p441 = scmp.lt.s32.totalorder %s34, 2
          %s442 = scalar_select %p441, %s34, 2
          %s443 = smul.addr %s442, 3
          %s444 = smul.addr %s440, 9
          %s445 = sadd.s32 %s443, %s444
          %s446 = scalar_lea.vmem %s0, %s445
        $region64: #{overdrive_forward.1} parent=59 // pred_fallthru
          _
        // Predicated region
        $region65: #{overdrive_forward.1} parent=59 // pred_check
          %p447 = pneg %p86
        $region66: #{overdrive_forward.1} parent=59 // pred_check_branch
          %449 = sbr.rel (%p447) target = $region68
        $region67: #{overdrive_forward.1} parent=59 // pred_region
          %p450 = scmp.lt.s32.totalorder %s33, 1
          %s451 = scalar_select %p450, %s33, 1
          %s452 = smul.addr %s451, 16
          %s453 = smul.addr %s452, 8
          %s454 = scalar_lea.vmem %s1, %s453
        $region68: #{overdrive_forward.1} parent=59 // pred_fallthru
          _
        // Predicated region
        $region69: #{overdrive_forward.1} parent=59 // pred_check
          %p455 = pneg %p112
        $region70: #{overdrive_forward.1} parent=59 // pred_check_branch
          %457 = sbr.rel (%p455) target = $region72
        $region71: #{overdrive_forward.1} parent=59 // pred_region
          %p458 = scmp.lt.s32.totalorder %s33, 1
          %s459 = scalar_select %p458, %s33, 1
          %s460 = smul.addr %s459, 16
          %s461 = smul.addr %s460, 8
          %s462 = scalar_lea.vmem %s2, %s461
        $region72: #{overdrive_forward.1} parent=59 // pred_fallthru
          _
      $region60: #{overdrive_forward.1} parent=5 // pred_fallthru
        _
      %p463 = scmp.le.s32.totalorder 1, %s26
      %p464 = scmp.lt.s32.totalorder %s26, 7
      %p465 = pnand %p463, %p464
      %p466 = pneg %p465
      // Predicated region
      $region73: #{overdrive_forward.1} parent=5 // pred_check
        _
      $region74: #{overdrive_forward.1} parent=5 // pred_check_branch
        %468 = sbr.rel (%p465) target = $region76
      $region75: #{overdrive_forward.1} parent=5 // pred_region
        %s469 = ssub.s32 %s26, 1
        // Predicated region
        $region77: #{overdrive_forward.1} parent=75 // pred_check
          %p470 = pneg %p349
        $region78: #{overdrive_forward.1} parent=75 // pred_check_branch
          %472 = sbr.rel (%p470) target = $region80
        $region79: #{overdrive_forward.1} parent=75 // pred_region
          %474 = dma.done [#allocation5], 16
        $region80: #{overdrive_forward.1} parent=75 // pred_fallthru
          _
        %475 = sfence
        %p476 = scmp.lt.s32.totalorder %s35, 1
        %s477 = scalar_select %p476, %s35, 1
        %p478 = scmp.lt.s32.totalorder %s36, 2
        %s479 = scalar_select %p478, %s36, 2
        %s480 = smul.addr %s479, 3
        %s481 = smul.addr %s477, 9
        %s482 = sadd.s32 %s480, %s481
        %s483 = scalar_lea.vmem %s0, %s482
        %p484 = pneg %p66
        %p485 = pneg %p63
        %p486 = scmp.lt.s32.totalorder %s35, 1
        %s487 = scalar_select %p486, %s35, 1
        %s488 = smul.addr %s487, 16
        %s489 = smul.addr %s488, 8
        %s490 = scalar_lea.vmem %s1, %s489
        %p491 = pneg %p92
        %p492 = pneg %p89
        %p493 = scmp.lt.s32.totalorder %s35, 1
        %s494 = scalar_select %p493, %s35, 1
        %s495 = smul.addr %s494, 16
        %s496 = smul.addr %s495, 8
        %s497 = scalar_lea.vmem %s2, %s496
        %p498 = pneg %p118
        %p499 = pneg %p115
        %p500 = pneg %p139
        %p501 = pneg %p136
        %p502 = pneg %p160
        %p503 = pneg %p157
        %p504 = pneg %p181
        %p505 = pneg %p178
        %p506 = pneg %p202
        %p507 = pneg %p199
        %p508 = pneg %p223
        %p509 = pneg %p220
        %p510 = pneg %p244
        %p511 = pneg %p241
        %p512 = pneg %p265
        %p513 = pneg %p262
        %p514 = pneg %p286
        %p515 = pneg %p283
        %p516 = pneg %p307
        %p517 = pneg %p304
        %p518 = pneg %p328
        %p519 = pneg %p325
        %p520 = pneg %p349
        %p521 = pneg %p346
        %p522 = pneg %p377
        %p523 = pneg %p374
        %s524 = sand.u32 %s364, 1
        %s525 = scalar_lea.sflag [#allocation4], %s524
        %s526 = sand.u32 %s364, 1
        %s527 = scalar_lea.vmem [#allocation6], %s526
        %p528 = scmp.lt.s32.totalorder %s35, 1
        %s529 = scalar_select %p528, %s35, 1
        %p530 = scmp.lt.s32.totalorder %s36, 2
        %s531 = scalar_select %p530, %s36, 2
        %s532 = smul.addr %s531, 3
        %s533 = smul.addr %s529, 9
        %s534 = sadd.s32 %s532, %s533
        %s535 = scalar_lea.vmem %s0, %s534
        %p536 = scmp.lt.s32.totalorder %s35, 1
        %s537 = scalar_select %p536, %s35, 1
        %s538 = smul.addr %s537, 16
        %s539 = smul.addr %s538, 8
        %s540 = scalar_lea.vmem %s1, %s539
        %p541 = scmp.lt.s32.totalorder %s35, 1
        %s542 = scalar_select %p541, %s35, 1
        %s543 = smul.addr %s542, 16
        %s544 = smul.addr %s543, 8
        %s545 = scalar_lea.vmem %s2, %s544
        %v547 = vld [vmem:[%s535] sm:$0x7]
        %v549 = vperm.slane %v547, 0
        %v550 = vperm.slane %v547, 1
        %v551 = vperm.slane %v547, 2
        %v555 = vpack.c.bf16 %v550, %v549
        %v556 = vpack.c.bf16 %v551, %v551
        %v559 = vunpack.c.l.b16 %v555
        %v560 = vunpack.c.h.b16 %v555
        %v561 = vunpack.c.l.b16 %v556
        %v562 = vpack.c.b16 %v559, %v559
        %v563 = vpack.c.b16 %v560, %v560
        %v564 = vpack.c.b16 %v561, %v561
        %v569 = vshll.u32 %v562, 16
        %v572 = vshll.u32 %v563, 16
        %v575 = vshll.u32 %v564, 16
        %577 = vrot.lane.b32.xlu0 %v569, 127
        %v578 = vpop.permute.xlu0 %577
        %579 = vrot.lane.b32.xlu0 %v572, 127
        %v580 = vpop.permute.xlu0 %579
        %581 = vrot.lane.b32.xlu0 %v575, 127
        %v582 = vpop.permute.xlu0 %581
        %vm583 = vcmask 1039360
        %v584 = vsel %vm583, %v578, %v580
        %v585 = vsel %vm583, %v580, %v582
        %v589 = vrot.slane %v562, 7
        %v590 = vrot.slane %v563, 7
        %v591 = vrot.slane %v564, 7
        %592 = vrot.lane.b32.xlu0 %v589, 126
        %v593 = vpop.permute.xlu0 %592
        %594 = vrot.lane.b32.xlu0 %v590, 126
        %v595 = vpop.permute.xlu0 %594
        %596 = vrot.lane.b32.xlu0 %v591, 126
        %v597 = vpop.permute.xlu0 %596
        %vm598 = vcmask 1031168
        %v599 = vsel %vm598, %v593, %v595
        %v600 = vsel %vm598, %v595, %v597
        %v601 = vrot.slane %v569, 7
        %v602 = vrot.slane %v572, 7
        %v603 = vrot.slane %v575, 7
        %604 = vrot.lane.b32.xlu0 %v601, 125
        %v605 = vpop.permute.xlu0 %604
        %606 = vrot.lane.b32.xlu0 %v602, 125
        %v607 = vpop.permute.xlu0 %606
        %608 = vrot.lane.b32.xlu0 %v603, 125
        %v609 = vpop.permute.xlu0 %608
        %vm610 = vcmask 1022976
        %v611 = vsel %vm610, %v605, %v607
        %v612 = vsel %vm610, %v607, %v609
        %v616 = vrot.slane %v562, 6
        %v617 = vrot.slane %v563, 6
        %v618 = vrot.slane %v564, 6
        %619 = vrot.lane.b32.xlu0 %v616, 124
        %v620 = vpop.permute.xlu0 %619
        %621 = vrot.lane.b32.xlu0 %v617, 124
        %v622 = vpop.permute.xlu0 %621
        %623 = vrot.lane.b32.xlu0 %v618, 124
        %v624 = vpop.permute.xlu0 %623
        %vm625 = vcmask 1014784
        %v626 = vsel %vm625, %v620, %v622
        %v627 = vsel %vm625, %v622, %v624
        %v628 = vrot.slane %v569, 6
        %v629 = vrot.slane %v572, 6
        %v630 = vrot.slane %v575, 6
        %631 = vrot.lane.b32.xlu0 %v628, 123
        %v632 = vpop.permute.xlu0 %631
        %633 = vrot.lane.b32.xlu0 %v629, 123
        %v634 = vpop.permute.xlu0 %633
        %635 = vrot.lane.b32.xlu0 %v630, 123
        %v636 = vpop.permute.xlu0 %635
        %vm637 = vcmask 1006592
        %v638 = vsel %vm637, %v632, %v634
        %v639 = vsel %vm637, %v634, %v636
        %v643 = vrot.slane %v562, 5
        %v644 = vrot.slane %v563, 5
        %v645 = vrot.slane %v564, 5
        %646 = vrot.lane.b32.xlu0 %v643, 122
        %v647 = vpop.permute.xlu0 %646
        %648 = vrot.lane.b32.xlu0 %v644, 122
        %v649 = vpop.permute.xlu0 %648
        %650 = vrot.lane.b32.xlu0 %v645, 122
        %v651 = vpop.permute.xlu0 %650
        %vm652 = vcmask 998400
        %v653 = vsel %vm652, %v647, %v649
        %v654 = vsel %vm652, %v649, %v651
        %v655 = vrot.slane %v569, 5
        %v656 = vrot.slane %v572, 5
        %v657 = vrot.slane %v575, 5
        %658 = vrot.lane.b32.xlu0 %v655, 121
        %v659 = vpop.permute.xlu0 %658
        %660 = vrot.lane.b32.xlu0 %v656, 121
        %v661 = vpop.permute.xlu0 %660
        %662 = vrot.lane.b32.xlu0 %v657, 121
        %v663 = vpop.permute.xlu0 %662
        %vm664 = vcmask 990208
        %v665 = vsel %vm664, %v659, %v661
        %v666 = vsel %vm664, %v661, %v663
        %670 = vrot.lane.b32.xlu0 %v562, 120
        %v671 = vpop.permute.xlu0 %670
        %672 = vrot.lane.b32.xlu0 %v563, 120
        %v673 = vpop.permute.xlu0 %672
        %674 = vrot.lane.b32.xlu0 %v564, 120
        %v675 = vpop.permute.xlu0 %674
        %vm676 = vcmask 982016
        %v677 = vsel %vm676, %v671, %v673
        %v678 = vsel %vm676, %v673, %v675
        %v679 = vrot.slane %v569, 4
        %v680 = vrot.slane %v572, 4
        %v681 = vrot.slane %v575, 4
        %682 = vrot.lane.b32.xlu0 %v679, 119
        %v683 = vpop.permute.xlu0 %682
        %684 = vrot.lane.b32.xlu0 %v680, 119
        %v685 = vpop.permute.xlu0 %684
        %686 = vrot.lane.b32.xlu0 %v681, 119
        %v687 = vpop.permute.xlu0 %686
        %vm688 = vcmask 973824
        %v689 = vsel %vm688, %v683, %v685
        %v690 = vsel %vm688, %v685, %v687
        %v694 = vrot.slane %v562, 3
        %v695 = vrot.slane %v563, 3
        %v696 = vrot.slane %v564, 3
        %697 = vrot.lane.b32.xlu0 %v694, 118
        %v698 = vpop.permute.xlu0 %697
        %699 = vrot.lane.b32.xlu0 %v695, 118
        %v700 = vpop.permute.xlu0 %699
        %701 = vrot.lane.b32.xlu0 %v696, 118
        %v702 = vpop.permute.xlu0 %701
        %vm703 = vcmask 965632
        %v704 = vsel %vm703, %v698, %v700
        %v705 = vsel %vm703, %v700, %v702
        %v706 = vrot.slane %v569, 3
        %v707 = vrot.slane %v572, 3
        %v708 = vrot.slane %v575, 3
        %709 = vrot.lane.b32.xlu0 %v706, 117
        %v710 = vpop.permute.xlu0 %709
        %711 = vrot.lane.b32.xlu0 %v707, 117
        %v712 = vpop.permute.xlu0 %711
        %713 = vrot.lane.b32.xlu0 %v708, 117
        %v714 = vpop.permute.xlu0 %713
        %vm715 = vcmask 957440
        %v716 = vsel %vm715, %v710, %v712
        %v717 = vsel %vm715, %v712, %v714
        %v721 = vrot.slane %v562, 2
        %v722 = vrot.slane %v563, 2
        %v723 = vrot.slane %v564, 2
        %724 = vrot.lane.b32.xlu0 %v721, 116
        %v725 = vpop.permute.xlu0 %724
        %726 = vrot.lane.b32.xlu0 %v722, 116
        %v727 = vpop.permute.xlu0 %726
        %728 = vrot.lane.b32.xlu0 %v723, 116
        %v729 = vpop.permute.xlu0 %728
        %vm730 = vcmask 949248
        %v731 = vsel %vm730, %v725, %v727
        %v732 = vsel %vm730, %v727, %v729
        %vm733 = vcmask 1040384
        %vm734 = vsmask.f32 256
        %vm735 = vmand %vm733, %vm734
        %v736 = vsel %vm735, %v562, %v584
        %v737 = vsel %vm735, %v563, %v585
        %v738 = vsel %vm735, %v564, %v582
        %vm739 = vcmask 1040384
        %v742 = vsel %vm739, %v736, %v599
        %v746 = vsel %vm739, %v737, %v600
        %v750 = vsel %vm739, %v738, %v597
        %vm752 = vcmask 1041408
        %vm753 = vsmask.f32 1280
        %vm754 = vmand %vm752, %vm753
        %v755 = vsel %vm754, %v742, %v611
        %v756 = vsel %vm754, %v746, %v612
        %v757 = vsel %vm754, %v750, %v609
        %vm758 = vcmask 1041408
        %v761 = vsel %vm758, %v755, %v626
        %v765 = vsel %vm758, %v756, %v627
        %v769 = vsel %vm758, %v757, %v624
        %vm771 = vcmask 1042432
        %vm772 = vsmask.f32 2304
        %vm773 = vmand %vm771, %vm772
        %v774 = vsel %vm773, %v761, %v638
        %v775 = vsel %vm773, %v765, %v639
        %v776 = vsel %vm773, %v769, %v636
        %vm777 = vcmask 1042432
        %v780 = vsel %vm777, %v774, %v653
        %v784 = vsel %vm777, %v775, %v654
        %v788 = vsel %vm777, %v776, %v651
        %vm790 = vcmask 1043456
        %vm791 = vsmask.f32 3328
        %vm792 = vmand %vm790, %vm791
        %v793 = vsel %vm792, %v780, %v665
        %v794 = vsel %vm792, %v784, %v666
        %v795 = vsel %vm792, %v788, %v663
        %vm796 = vcmask 1043456
        %v799 = vsel %vm796, %v793, %v677
        %v803 = vsel %vm796, %v794, %v678
        %v807 = vsel %vm796, %v795, %v675
        %vm809 = vcmask 1044480
        %vm810 = vsmask.f32 4352
        %vm811 = vmand %vm809, %vm810
        %v812 = vsel %vm811, %v799, %v689
        %v813 = vsel %vm811, %v803, %v690
        %v814 = vsel %vm811, %v807, %v687
        %vm815 = vcmask 1044480
        %v818 = vsel %vm815, %v812, %v704
        %v822 = vsel %vm815, %v813, %v705
        %v826 = vsel %vm815, %v814, %v702
        %vm828 = vcmask 1045504
        %vm829 = vsmask.f32 5376
        %vm830 = vmand %vm828, %vm829
        %v831 = vsel %vm830, %v818, %v716
        %v832 = vsel %vm830, %v822, %v717
        %v833 = vsel %vm830, %v826, %v714
        %vm834 = vcmask 1045504
        %v837 = vsel %vm834, %v831, %v731
        %v840 = vsel %vm834, %v832, %v732
        %v843 = vsel %vm834, %v833, %v729
        %v844 = vld [vmem:[%s3] sm:$0xf]
        %v845 = vld [vmem:[%s3 + $0x4] sm:$0xf]
        %v846 = vld [vmem:[%s3 + $0x8] sm:$0xf]
        %v847 = vld [vmem:[%s3 + $0xc] sm:$0xf]
        %v852 = vunpack.c.l.b16 %v844
        %v853 = vunpack.c.l.b16 %v845
        %v854 = vunpack.c.l.b16 %v846
        %v855 = vunpack.c.l.b16 %v847
        %v856 = vpack.c.b16 %v853, %v852
        %v857 = vpack.c.b16 %v855, %v854
        %vm858 = vcmask 105472
        %v860 = vsel %vm858, %v856, 0
        %v863 = vsel %vm858, %v857, 0
        %vm865 = vcmask 1046528
        %v866 = vsel %vm834, 4294967295, 65535
        %v867 = vsel %vm865, %v866, 0
        %v868 = vand.u32 %v837, %v867
        %v870 = vand.u32 %v840, %v867
        %v872 = vand.u32 %v843, %v867
        %874 = vmatpush.bf16.msra.mxu0 0
        %875 = vmatpush.bf16.msra.mxu0 0
        %876 = vmatpush.bf16.msra.mxu0 0
        %877 = vmatpush.bf16.msra.mxu0 0
        %878 = vmatpush.bf16.msra.mxu0 0
        %879 = vmatpush.bf16.msra.mxu0 0
        %880 = vmatpush.bf16.msra.mxu0 0
        %881 = vmatpush.bf16.msra.mxu0 %v868
        %882 = vmatmul.bf16.gmra.mxu0 %v860
        %v883 = vpop.f32.mrf.mxu0
        %v884 = vadd.f32 0.0, %v883
        %v885 = vpop.f32.mrf.mxu0
        %v886 = vadd.f32 0.0, %v885
        %887 = vmatmul.bf16.gmra.mxu0 %v863
        %v888 = vpop.f32.mrf.mxu0
        %v889 = vadd.f32 0.0, %v888
        %v890 = vpop.f32.mrf.mxu0
        %v891 = vadd.f32 0.0, %v890
        %892 = vdwg.mxu0
        %893 = vmatpush.bf16.msra.mxu0 0
        %894 = vmatpush.bf16.msra.mxu0 0
        %895 = vmatpush.bf16.msra.mxu0 0
        %896 = vmatpush.bf16.msra.mxu0 0
        %897 = vmatpush.bf16.msra.mxu0 0
        %898 = vmatpush.bf16.msra.mxu0 0
        %899 = vmatpush.bf16.msra.mxu0 0
        %900 = vmatpush.bf16.msra.mxu0 %v870
        %901 = vmatmul.bf16.gmra.mxu0 %v860
        %v902 = vpop.f32.mrf.mxu0
        %v903 = vadd.f32 0.0, %v902
        %v904 = vpop.f32.mrf.mxu0
        %v905 = vadd.f32 0.0, %v904
        %906 = vmatmul.bf16.gmra.mxu0 %v863
        %v907 = vpop.f32.mrf.mxu0
        %v908 = vadd.f32 0.0, %v907
        %v909 = vpop.f32.mrf.mxu0
        %v910 = vadd.f32 0.0, %v909
        %911 = vdwg.mxu0
        %912 = vmatpush.bf16.msra.mxu0 0
        %913 = vmatpush.bf16.msra.mxu0 0
        %914 = vmatpush.bf16.msra.mxu0 0
        %915 = vmatpush.bf16.msra.mxu0 0
        %916 = vmatpush.bf16.msra.mxu0 0
        %917 = vmatpush.bf16.msra.mxu0 0
        %918 = vmatpush.bf16.msra.mxu0 0
        %919 = vmatpush.bf16.msra.mxu0 %v872
        %920 = vmatmul.bf16.gmra.mxu0 %v860
        %v921 = vpop.f32.mrf.mxu0
        %v922 = vadd.f32 0.0, %v921
        %v923 = vpop.f32.mrf.mxu0
        %v924 = vadd.f32 0.0, %v923
        %925 = vmatmul.bf16.gmra.mxu0 %v863
        %v926 = vpop.f32.mrf.mxu0
        %v927 = vadd.f32 0.0, %v926
        %v928 = vpop.f32.mrf.mxu0
        %v929 = vadd.f32 0.0, %v928
        %930 = vdwg.mxu0
        %v931 = vld [vmem:[%s540] sm:$0xff]
        %v932 = vld [vmem:[%s540 + $0x8] sm:$0xff]
        %v933 = vld [vmem:[%s540 + $0x10] sm:$0xff]
        %v934 = vld [vmem:[%s540 + $0x18] sm:$0xff]
        %v935 = vld [vmem:[%s545] sm:$0xff]
        %v936 = vld [vmem:[%s545 + $0x8] sm:$0xff]
        %v937 = vld [vmem:[%s545 + $0x10] sm:$0xff]
        %v938 = vld [vmem:[%s545 + $0x18] sm:$0xff]
        %940 = vset.pattern.permute.xlu0 0
        %941 = vperm.xlu0 %940, %v931
        %v942 = vpop.permute.xlu0 %941
        %945 = vset.pattern.permute.xlu0 0
        %946 = vperm.xlu0 %945, %v932
        %v947 = vpop.permute.xlu0 %946
        %950 = vset.pattern.permute.xlu0 0
        %951 = vperm.xlu0 %950, %v933
        %v952 = vpop.permute.xlu0 %951
        %955 = vset.pattern.permute.xlu0 0
        %956 = vperm.xlu0 %955, %v934
        %v957 = vpop.permute.xlu0 %956
        %v959 = vmul.f32 %v884, %v942
        %v960 = vmul.f32 %v903, %v942
        %v961 = vmul.f32 %v922, %v942
        %v962 = vmul.f32 %v886, %v947
        %v963 = vmul.f32 %v905, %v947
        %v964 = vmul.f32 %v924, %v947
        %v965 = vmul.f32 %v889, %v952
        %v966 = vmul.f32 %v908, %v952
        %v967 = vmul.f32 %v927, %v952
        %v968 = vmul.f32 %v891, %v957
        %v969 = vmul.f32 %v910, %v957
        %v970 = vmul.f32 %v929, %v957
        %972 = vset.pattern.permute.xlu0 0
        %973 = vperm.xlu0 %972, %v935
        %v974 = vpop.permute.xlu0 %973
        %977 = vset.pattern.permute.xlu0 0
        %978 = vperm.xlu0 %977, %v936
        %v979 = vpop.permute.xlu0 %978
        %982 = vset.pattern.permute.xlu0 0
        %983 = vperm.xlu0 %982, %v937
        %v984 = vpop.permute.xlu0 %983
        %987 = vset.pattern.permute.xlu0 0
        %988 = vperm.xlu0 %987, %v938
        %v989 = vpop.permute.xlu0 %988
        %v991 = vadd.f32 %v959, %v974
        %v992 = vadd.f32 %v960, %v974
        %v993 = vadd.f32 %v961, %v974
        %v994 = vadd.f32 %v962, %v979
        %v995 = vadd.f32 %v963, %v979
        %v996 = vadd.f32 %v964, %v979
        %v997 = vadd.f32 %v965, %v984
        %v998 = vadd.f32 %v966, %v984
        %v999 = vadd.f32 %v967, %v984
        %v1000 = vadd.f32 %v968, %v989
        %v1001 = vadd.f32 %v969, %v989
        %v1002 = vadd.f32 %v970, %v989
        %s1003 = sld [smem:[#allocation3]]
        %vm1004 = vcmp.ge.f32.partialorder %v991, 0.0
        %vm1005 = vcmp.ge.f32.partialorder %v992, 0.0
        %vm1006 = vcmp.ge.f32.partialorder %v993, 0.0
        %vm1007 = vcmp.ge.f32.partialorder %v994, 0.0
        %vm1008 = vcmp.ge.f32.partialorder %v995, 0.0
        %vm1009 = vcmp.ge.f32.partialorder %v996, 0.0
        %vm1010 = vcmp.ge.f32.partialorder %v997, 0.0
        %vm1011 = vcmp.ge.f32.partialorder %v998, 0.0
        %vm1012 = vcmp.ge.f32.partialorder %v999, 0.0
        %vm1013 = vcmp.ge.f32.partialorder %v1000, 0.0
        %vm1014 = vcmp.ge.f32.partialorder %v1001, 0.0
        %vm1015 = vcmp.ge.f32.partialorder %v1002, 0.0
        %v1016 = vstv %s1003
        %v1017 = vmul.f32 %v1016, %v991
        %v1018 = vmul.f32 %v1016, %v992
        %v1019 = vmul.f32 %v1016, %v993
        %v1020 = vmul.f32 %v1016, %v994
        %v1021 = vmul.f32 %v1016, %v995
        %v1022 = vmul.f32 %v1016, %v996
        %v1023 = vmul.f32 %v1016, %v997
        %v1024 = vmul.f32 %v1016, %v998
        %v1025 = vmul.f32 %v1016, %v999
        %v1026 = vmul.f32 %v1016, %v1000
        %v1027 = vmul.f32 %v1016, %v1001
        %v1028 = vmul.f32 %v1016, %v1002
        %v1029 = vsel %vm1004, %v991, %v1017
        %v1030 = vsel %vm1005, %v992, %v1018
        %v1031 = vsel %vm1006, %v993, %v1019
        %v1032 = vsel %vm1007, %v994, %v1020
        %v1033 = vsel %vm1008, %v995, %v1021
        %v1034 = vsel %vm1009, %v996, %v1022
        %v1035 = vsel %vm1010, %v997, %v1023
        %v1036 = vsel %vm1011, %v998, %v1024
        %v1037 = vsel %vm1012, %v999, %v1025
        %v1038 = vsel %vm1013, %v1000, %v1026
        %v1039 = vsel %vm1014, %v1001, %v1027
        %v1040 = vsel %vm1015, %v1002, %v1028
        %v1041 = vld [vmem:[%s4] sm:$0xff]
        %v1042 = vld [vmem:[%s4 + $0x8] sm:$0xff]
        %v1043 = vld [vmem:[%s4 + $0x10] sm:$0xff]
        %v1044 = vld [vmem:[%s4 + $0x18] sm:$0xff]
        %1046 = vset.pattern.permute.xlu0 0
        %1047 = vperm.xlu0 %1046, %v1041
        %v1048 = vpop.permute.xlu0 %1047
        %1051 = vset.pattern.permute.xlu0 0
        %1052 = vperm.xlu0 %1051, %v1042
        %v1053 = vpop.permute.xlu0 %1052
        %1056 = vset.pattern.permute.xlu0 0
        %1057 = vperm.xlu0 %1056, %v1043
        %v1058 = vpop.permute.xlu0 %1057
        %1061 = vset.pattern.permute.xlu0 0
        %1062 = vperm.xlu0 %1061, %v1044
        %v1063 = vpop.permute.xlu0 %1062
        %v1065 = vmul.f32 %v1048, %v549
        %v1066 = vmul.f32 %v1048, %v550
        %v1067 = vmul.f32 %v1048, %v551
        %v1068 = vmul.f32 %v1053, %v549
        %v1069 = vmul.f32 %v1053, %v550
        %v1070 = vmul.f32 %v1053, %v551
        %v1071 = vmul.f32 %v1058, %v549
        %v1072 = vmul.f32 %v1058, %v550
        %v1073 = vmul.f32 %v1058, %v551
        %v1074 = vmul.f32 %v1063, %v549
        %v1075 = vmul.f32 %v1063, %v550
        %v1076 = vmul.f32 %v1063, %v551
        %1089 = vrot.lane.b32.xlu0 %v1065, 116
        %v1090 = vpop.permute.xlu0 %1089
        %1091 = vrot.lane.b32.xlu0 %v1066, 116
        %v1092 = vpop.permute.xlu0 %1091
        %1093 = vrot.lane.b32.xlu0 %v1067, 116
        %v1094 = vpop.permute.xlu0 %1093
        %1095 = vrot.lane.b32.xlu0 %v1068, 116
        %v1096 = vpop.permute.xlu0 %1095
        %1097 = vrot.lane.b32.xlu0 %v1069, 116
        %v1098 = vpop.permute.xlu0 %1097
        %1099 = vrot.lane.b32.xlu0 %v1070, 116
        %v1100 = vpop.permute.xlu0 %1099
        %1101 = vrot.lane.b32.xlu0 %v1071, 116
        %v1102 = vpop.permute.xlu0 %1101
        %1103 = vrot.lane.b32.xlu0 %v1072, 116
        %v1104 = vpop.permute.xlu0 %1103
        %1105 = vrot.lane.b32.xlu0 %v1073, 116
        %v1106 = vpop.permute.xlu0 %1105
        %1107 = vrot.lane.b32.xlu0 %v1074, 116
        %v1108 = vpop.permute.xlu0 %1107
        %1109 = vrot.lane.b32.xlu0 %v1075, 116
        %v1110 = vpop.permute.xlu0 %1109
        %1111 = vrot.lane.b32.xlu0 %v1076, 116
        %v1112 = vpop.permute.xlu0 %1111
        %vm1113 = vcmask 949248
        %v1114 = vsel %vm1113, %v1090, %v1092
        %v1115 = vsel %vm1113, %v1092, %v1094
        %v1116 = vsel %vm1113, %v1096, %v1098
        %v1117 = vsel %vm1113, %v1098, %v1100
        %v1118 = vsel %vm1113, %v1102, %v1104
        %v1119 = vsel %vm1113, %v1104, %v1106
        %v1120 = vsel %vm1113, %v1108, %v1110
        %v1121 = vsel %vm1113, %v1110, %v1112
        %v1134 = vadd.f32 %v1029, %v1114
        %v1135 = vadd.f32 %v1030, %v1115
        %v1136 = vadd.f32 %v1031, %v1094
        %v1137 = vadd.f32 %v1032, %v1116
        %v1138 = vadd.f32 %v1033, %v1117
        %v1139 = vadd.f32 %v1034, %v1100
        %v1140 = vadd.f32 %v1035, %v1118
        %v1141 = vadd.f32 %v1036, %v1119
        %v1142 = vadd.f32 %v1037, %v1106
        %v1143 = vadd.f32 %v1038, %v1120
        %v1144 = vadd.f32 %v1039, %v1121
        %v1145 = vadd.f32 %v1040, %v1112
        %v1146 = vpack.c.bf16 %v1135, %v1134
        %v1147 = vpack.c.bf16 %v1136, %v1136
        %v1148 = vpack.c.bf16 %v1138, %v1137
        %v1149 = vpack.c.bf16 %v1139, %v1139
        %v1150 = vpack.c.bf16 %v1141, %v1140
        %v1151 = vpack.c.bf16 %v1142, %v1142
        %v1152 = vpack.c.bf16 %v1144, %v1143
        %v1153 = vpack.c.bf16 %v1145, %v1145
        %v1162 = vunpack.c.l.b16 %v1146
        %v1163 = vunpack.c.h.b16 %v1146
        %v1164 = vunpack.c.l.b16 %v1147
        %v1165 = vunpack.c.l.b16 %v1148
        %v1166 = vunpack.c.h.b16 %v1148
        %v1167 = vunpack.c.l.b16 %v1149
        %v1168 = vunpack.c.l.b16 %v1150
        %v1169 = vunpack.c.h.b16 %v1150
        %v1170 = vunpack.c.l.b16 %v1151
        %v1171 = vunpack.c.l.b16 %v1152
        %v1172 = vunpack.c.h.b16 %v1152
        %v1173 = vunpack.c.l.b16 %v1153
        %v1174 = vpack.c.b16 %v1165, %v1162
        %v1175 = vpack.c.b16 %v1166, %v1163
        %v1176 = vpack.c.b16 %v1167, %v1164
        %v1177 = vpack.c.b16 %v1171, %v1168
        %v1178 = vpack.c.b16 %v1172, %v1169
        %v1179 = vpack.c.b16 %v1173, %v1170
        %1186 = vrot.lane.b32.xlu0 %v1174, 126
        %v1187 = vpop.permute.xlu0 %1186
        %1188 = vrot.lane.b32.xlu0 %v1175, 126
        %v1189 = vpop.permute.xlu0 %1188
        %1190 = vrot.lane.b32.xlu0 %v1176, 126
        %v1191 = vpop.permute.xlu0 %1190
        %1192 = vrot.lane.b32.xlu0 %v1177, 126
        %v1193 = vpop.permute.xlu0 %1192
        %1194 = vrot.lane.b32.xlu0 %v1178, 126
        %v1195 = vpop.permute.xlu0 %1194
        %1196 = vrot.lane.b32.xlu0 %v1179, 126
        %v1197 = vpop.permute.xlu0 %1196
        %v1198 = vsel %vm598, %v1187, %v1189
        %v1199 = vsel %vm598, %v1189, %v1191
        %v1200 = vsel %vm598, %v1193, %v1195
        %v1201 = vsel %vm598, %v1195, %v1197
        %1208 = vrot.lane.b32.xlu0 %v1174, 124
        %v1209 = vpop.permute.xlu0 %1208
        %1210 = vrot.lane.b32.xlu0 %v1175, 124
        %v1211 = vpop.permute.xlu0 %1210
        %1212 = vrot.lane.b32.xlu0 %v1176, 124
        %v1213 = vpop.permute.xlu0 %1212
        %1214 = vrot.lane.b32.xlu0 %v1177, 124
        %v1215 = vpop.permute.xlu0 %1214
        %1216 = vrot.lane.b32.xlu0 %v1178, 124
        %v1217 = vpop.permute.xlu0 %1216
        %1218 = vrot.lane.b32.xlu0 %v1179, 124
        %v1219 = vpop.permute.xlu0 %1218
        %v1220 = vsel %vm625, %v1209, %v1211
        %v1221 = vsel %vm625, %v1211, %v1213
        %v1222 = vsel %vm625, %v1215, %v1217
        %v1223 = vsel %vm625, %v1217, %v1219
        %1230 = vrot.lane.b32.xlu0 %v1174, 122
        %v1231 = vpop.permute.xlu0 %1230
        %1232 = vrot.lane.b32.xlu0 %v1175, 122
        %v1233 = vpop.permute.xlu0 %1232
        %1234 = vrot.lane.b32.xlu0 %v1176, 122
        %v1235 = vpop.permute.xlu0 %1234
        %1236 = vrot.lane.b32.xlu0 %v1177, 122
        %v1237 = vpop.permute.xlu0 %1236
        %1238 = vrot.lane.b32.xlu0 %v1178, 122
        %v1239 = vpop.permute.xlu0 %1238
        %1240 = vrot.lane.b32.xlu0 %v1179, 122
        %v1241 = vpop.permute.xlu0 %1240
        %v1242 = vsel %vm652, %v1231, %v1233
        %v1243 = vsel %vm652, %v1233, %v1235
        %v1244 = vsel %vm652, %v1237, %v1239
        %v1245 = vsel %vm652, %v1239, %v1241
        %1252 = vrot.lane.b32.xlu0 %v1174, 120
        %v1253 = vpop.permute.xlu0 %1252
        %1254 = vrot.lane.b32.xlu0 %v1175, 120
        %v1255 = vpop.permute.xlu0 %1254
        %1256 = vrot.lane.b32.xlu0 %v1176, 120
        %v1257 = vpop.permute.xlu0 %1256
        %1258 = vrot.lane.b32.xlu0 %v1177, 120
        %v1259 = vpop.permute.xlu0 %1258
        %1260 = vrot.lane.b32.xlu0 %v1178, 120
        %v1261 = vpop.permute.xlu0 %1260
        %1262 = vrot.lane.b32.xlu0 %v1179, 120
        %v1263 = vpop.permute.xlu0 %1262
        %v1264 = vsel %vm676, %v1253, %v1255
        %v1265 = vsel %vm676, %v1255, %v1257
        %v1266 = vsel %vm676, %v1259, %v1261
        %v1267 = vsel %vm676, %v1261, %v1263
        %1274 = vrot.lane.b32.xlu0 %v1174, 118
        %v1275 = vpop.permute.xlu0 %1274
        %1276 = vrot.lane.b32.xlu0 %v1175, 118
        %v1277 = vpop.permute.xlu0 %1276
        %1278 = vrot.lane.b32.xlu0 %v1176, 118
        %v1279 = vpop.permute.xlu0 %1278
        %1280 = vrot.lane.b32.xlu0 %v1177, 118
        %v1281 = vpop.permute.xlu0 %1280
        %1282 = vrot.lane.b32.xlu0 %v1178, 118
        %v1283 = vpop.permute.xlu0 %1282
        %1284 = vrot.lane.b32.xlu0 %v1179, 118
        %v1285 = vpop.permute.xlu0 %1284
        %v1286 = vsel %vm703, %v1275, %v1277
        %v1287 = vsel %vm703, %v1277, %v1279
        %v1288 = vsel %vm703, %v1281, %v1283
        %v1289 = vsel %vm703, %v1283, %v1285
        %1296 = vrot.lane.b32.xlu0 %v1174, 116
        %v1297 = vpop.permute.xlu0 %1296
        %1298 = vrot.lane.b32.xlu0 %v1175, 116
        %v1299 = vpop.permute.xlu0 %1298
        %1300 = vrot.lane.b32.xlu0 %v1176, 116
        %v1301 = vpop.permute.xlu0 %1300
        %1302 = vrot.lane.b32.xlu0 %v1177, 116
        %v1303 = vpop.permute.xlu0 %1302
        %1304 = vrot.lane.b32.xlu0 %v1178, 116
        %v1305 = vpop.permute.xlu0 %1304
        %1306 = vrot.lane.b32.xlu0 %v1179, 116
        %v1307 = vpop.permute.xlu0 %1306
        %v1308 = vsel %vm730, %v1297, %v1299
        %v1309 = vsel %vm730, %v1299, %v1301
        %v1310 = vsel %vm730, %v1303, %v1305
        %v1311 = vsel %vm730, %v1305, %v1307
        %1318 = vrot.lane.b32.xlu0 %v1174, 114
        %v1319 = vpop.permute.xlu0 %1318
        %1320 = vrot.lane.b32.xlu0 %v1175, 114
        %v1321 = vpop.permute.xlu0 %1320
        %1322 = vrot.lane.b32.xlu0 %v1176, 114
        %v1323 = vpop.permute.xlu0 %1322
        %1324 = vrot.lane.b32.xlu0 %v1177, 114
        %v1325 = vpop.permute.xlu0 %1324
        %1326 = vrot.lane.b32.xlu0 %v1178, 114
        %v1327 = vpop.permute.xlu0 %1326
        %1328 = vrot.lane.b32.xlu0 %v1179, 114
        %v1329 = vpop.permute.xlu0 %1328
        %vm1330 = vcmask 932864
        %v1331 = vsel %vm1330, %v1319, %v1321
        %v1332 = vsel %vm1330, %v1321, %v1323
        %v1333 = vsel %vm1330, %v1325, %v1327
        %v1334 = vsel %vm1330, %v1327, %v1329
        %1341 = vrot.lane.b32.xlu0 %v1174, 112
        %v1342 = vpop.permute.xlu0 %1341
        %1343 = vrot.lane.b32.xlu0 %v1175, 112
        %v1344 = vpop.permute.xlu0 %1343
        %1345 = vrot.lane.b32.xlu0 %v1176, 112
        %v1346 = vpop.permute.xlu0 %1345
        %1347 = vrot.lane.b32.xlu0 %v1177, 112
        %v1348 = vpop.permute.xlu0 %1347
        %1349 = vrot.lane.b32.xlu0 %v1178, 112
        %v1350 = vpop.permute.xlu0 %1349
        %1351 = vrot.lane.b32.xlu0 %v1179, 112
        %v1352 = vpop.permute.xlu0 %1351
        %vm1353 = vcmask 916480
        %v1354 = vsel %vm1353, %v1342, %v1344
        %v1355 = vsel %vm1353, %v1344, %v1346
        %v1356 = vsel %vm1353, %v1348, %v1350
        %v1357 = vsel %vm1353, %v1350, %v1352
        %1364 = vrot.lane.b32.xlu0 %v1174, 110
        %v1365 = vpop.permute.xlu0 %1364
        %1366 = vrot.lane.b32.xlu0 %v1175, 110
        %v1367 = vpop.permute.xlu0 %1366
        %1368 = vrot.lane.b32.xlu0 %v1176, 110
        %v1369 = vpop.permute.xlu0 %1368
        %1370 = vrot.lane.b32.xlu0 %v1177, 110
        %v1371 = vpop.permute.xlu0 %1370
        %1372 = vrot.lane.b32.xlu0 %v1178, 110
        %v1373 = vpop.permute.xlu0 %1372
        %1374 = vrot.lane.b32.xlu0 %v1179, 110
        %v1375 = vpop.permute.xlu0 %1374
        %vm1376 = vcmask 900096
        %v1377 = vsel %vm1376, %v1365, %v1367
        %v1378 = vsel %vm1376, %v1367, %v1369
        %v1379 = vsel %vm1376, %v1371, %v1373
        %v1380 = vsel %vm1376, %v1373, %v1375
        %1387 = vrot.lane.b32.xlu0 %v1174, 108
        %v1388 = vpop.permute.xlu0 %1387
        %1389 = vrot.lane.b32.xlu0 %v1175, 108
        %v1390 = vpop.permute.xlu0 %1389
        %1391 = vrot.lane.b32.xlu0 %v1176, 108
        %v1392 = vpop.permute.xlu0 %1391
        %1393 = vrot.lane.b32.xlu0 %v1177, 108
        %v1394 = vpop.permute.xlu0 %1393
        %1395 = vrot.lane.b32.xlu0 %v1178, 108
        %v1396 = vpop.permute.xlu0 %1395
        %1397 = vrot.lane.b32.xlu0 %v1179, 108
        %v1398 = vpop.permute.xlu0 %1397
        %vm1399 = vcmask 883712
        %v1400 = vsel %vm1399, %v1388, %v1390
        %v1401 = vsel %vm1399, %v1390, %v1392
        %v1402 = vsel %vm1399, %v1394, %v1396
        %v1403 = vsel %vm1399, %v1396, %v1398
        %1410 = vrot.lane.b32.xlu0 %v1174, 106
        %v1411 = vpop.permute.xlu0 %1410
        %1412 = vrot.lane.b32.xlu0 %v1175, 106
        %v1413 = vpop.permute.xlu0 %1412
        %1414 = vrot.lane.b32.xlu0 %v1176, 106
        %v1415 = vpop.permute.xlu0 %1414
        %1416 = vrot.lane.b32.xlu0 %v1177, 106
        %v1417 = vpop.permute.xlu0 %1416
        %1418 = vrot.lane.b32.xlu0 %v1178, 106
        %v1419 = vpop.permute.xlu0 %1418
        %1420 = vrot.lane.b32.xlu0 %v1179, 106
        %v1421 = vpop.permute.xlu0 %1420
        %vm1422 = vcmask 867328
        %v1423 = vsel %vm1422, %v1411, %v1413
        %v1424 = vsel %vm1422, %v1413, %v1415
        %v1425 = vsel %vm1422, %v1417, %v1419
        %v1426 = vsel %vm1422, %v1419, %v1421
        %1433 = vrot.lane.b32.xlu0 %v1174, 104
        %v1434 = vpop.permute.xlu0 %1433
        %1435 = vrot.lane.b32.xlu0 %v1175, 104
        %v1436 = vpop.permute.xlu0 %1435
        %1437 = vrot.lane.b32.xlu0 %v1176, 104
        %v1438 = vpop.permute.xlu0 %1437
        %1439 = vrot.lane.b32.xlu0 %v1177, 104
        %v1440 = vpop.permute.xlu0 %1439
        %1441 = vrot.lane.b32.xlu0 %v1178, 104
        %v1442 = vpop.permute.xlu0 %1441
        %1443 = vrot.lane.b32.xlu0 %v1179, 104
        %v1444 = vpop.permute.xlu0 %1443
        %vm1445 = vcmask 850944
        %v1446 = vsel %vm1445, %v1434, %v1436
        %v1447 = vsel %vm1445, %v1436, %v1438
        %v1448 = vsel %vm1445, %v1440, %v1442
        %v1449 = vsel %vm1445, %v1442, %v1444
        %v1456 = vld [vmem:[%s5] sm:$0xff]
        %v1457 = vld [vmem:[%s5 + $0x8] sm:$0xff]
        %v1458 = vld [vmem:[%s5 + $0x10] sm:$0xff]
        %v1459 = vld [vmem:[%s5 + $0x18] sm:$0xff]
        %v1460 = vld [vmem:[%s5 + $0x20] sm:$0xff]
        %v1461 = vld [vmem:[%s5 + $0x28] sm:$0xff]
        %v1462 = vld [vmem:[%s5 + $0x30] sm:$0xff]
        %v1463 = vld [vmem:[%s5 + $0x38] sm:$0xff]
        %v1472 = vunpack.c.l.b16 %v1456
        %v1473 = vunpack.c.h.b16 %v1456
        %v1474 = vunpack.c.l.b16 %v1457
        %v1475 = vunpack.c.h.b16 %v1457
        %v1476 = vunpack.c.l.b16 %v1458
        %v1477 = vunpack.c.h.b16 %v1458
        %v1478 = vunpack.c.l.b16 %v1459
        %v1479 = vunpack.c.h.b16 %v1459
        %v1480 = vunpack.c.l.b16 %v1460
        %v1481 = vunpack.c.h.b16 %v1460
        %v1482 = vunpack.c.l.b16 %v1461
        %v1483 = vunpack.c.h.b16 %v1461
        %v1484 = vunpack.c.l.b16 %v1462
        %v1485 = vunpack.c.h.b16 %v1462
        %v1486 = vunpack.c.l.b16 %v1463
        %v1487 = vunpack.c.h.b16 %v1463
        %v1488 = vpack.c.b16 %v1476, %v1472
        %v1489 = vpack.c.b16 %v1477, %v1473
        %v1490 = vpack.c.b16 %v1478, %v1474
        %v1491 = vpack.c.b16 %v1479, %v1475
        %v1492 = vpack.c.b16 %v1484, %v1480
        %v1493 = vpack.c.b16 %v1485, %v1481
        %v1494 = vpack.c.b16 %v1486, %v1482
        %v1495 = vpack.c.b16 %v1487, %v1483
        %vm1502 = vcmask 261120
        %v1504 = vsel %vm1502, %v1491, 0
        %v1507 = vsel %vm1502, %v1495, 0
        %1509 = vmatpush.bf16.msra.mxu0 %v1244
        %1510 = vmatpush.bf16.msra.mxu0 %v1242
        %1511 = vmatpush.bf16.msra.mxu0 %v1222
        %1512 = vmatpush.bf16.msra.mxu0 %v1220
        %1513 = vmatpush.bf16.msra.mxu0 %v1200
        %1514 = vmatpush.bf16.msra.mxu0 %v1198
        %1515 = vmatpush.bf16.msra.mxu0 %v1177
        %1516 = vmatpush.bf16.msra.mxu0 %v1174
        %1517 = vmatmul.bf16.gmra.mxu0 %v1488
        %v1518 = vpop.f32.mrf.mxu0
        %v1519 = vadd.f32 0.0, %v1518
        %v1520 = vpop.f32.mrf.mxu0
        %v1521 = vadd.f32 0.0, %v1520
        %1522 = vmatmul.bf16.gmra.mxu0 %v1492
        %v1523 = vpop.f32.mrf.mxu0
        %v1524 = vadd.f32 0.0, %v1523
        %v1525 = vpop.f32.mrf.mxu0
        %v1526 = vadd.f32 0.0, %v1525
        %1527 = vdwg.mxu0
        %1528 = vmatpush.bf16.msra.mxu0 %v1333
        %1529 = vmatpush.bf16.msra.mxu0 %v1331
        %1530 = vmatpush.bf16.msra.mxu0 %v1310
        %1531 = vmatpush.bf16.msra.mxu0 %v1308
        %1532 = vmatpush.bf16.msra.mxu0 %v1288
        %1533 = vmatpush.bf16.msra.mxu0 %v1286
        %1534 = vmatpush.bf16.msra.mxu0 %v1266
        %1535 = vmatpush.bf16.msra.mxu0 %v1264
        %1536 = vmatmul.bf16.gmra.mxu0 %v1489
        %v1537 = vpop.f32.mrf.mxu0
        %v1538 = vadd.f32 %v1519, %v1537
        %v1539 = vpop.f32.mrf.mxu0
        %v1540 = vadd.f32 %v1521, %v1539
        %1541 = vmatmul.bf16.gmra.mxu0 %v1493
        %v1542 = vpop.f32.mrf.mxu0
        %v1543 = vadd.f32 %v1524, %v1542
        %v1544 = vpop.f32.mrf.mxu0
        %v1545 = vadd.f32 %v1526, %v1544
        %1546 = vdwg.mxu0
        %1547 = vmatpush.bf16.msra.mxu0 %v1425
        %1548 = vmatpush.bf16.msra.mxu0 %v1423
        %1549 = vmatpush.bf16.msra.mxu0 %v1402
        %1550 = vmatpush.bf16.msra.mxu0 %v1400
        %1551 = vmatpush.bf16.msra.mxu0 %v1379
        %1552 = vmatpush.bf16.msra.mxu0 %v1377
        %1553 = vmatpush.bf16.msra.mxu0 %v1356
        %1554 = vmatpush.bf16.msra.mxu0 %v1354
        %1555 = vmatmul.bf16.gmra.mxu0 %v1490
        %v1556 = vpop.f32.mrf.mxu0
        %v1557 = vadd.f32 %v1538, %v1556
        %v1558 = vpop.f32.mrf.mxu0
        %v1559 = vadd.f32 %v1540, %v1558
        %1560 = vmatmul.bf16.gmra.mxu0 %v1494
        %v1561 = vpop.f32.mrf.mxu0
        %v1562 = vadd.f32 %v1543, %v1561
        %v1563 = vpop.f32.mrf.mxu0
        %v1564 = vadd.f32 %v1545, %v1563
        %1565 = vdwg.mxu0
        %1566 = vmatpush.bf16.msra.mxu0 0
        %1567 = vmatpush.bf16.msra.mxu0 0
        %1568 = vmatpush.bf16.msra.mxu0 0
        %1569 = vmatpush.bf16.msra.mxu0 0
        %1570 = vmatpush.bf16.msra.mxu0 0
        %1571 = vmatpush.bf16.msra.mxu0 0
        %1572 = vmatpush.bf16.msra.mxu0 %v1448
        %1573 = vmatpush.bf16.msra.mxu0 %v1446
        %1574 = vmatmul.bf16.gmra.mxu0 %v1504
        %v1575 = vpop.f32.mrf.mxu0
        %v1576 = vadd.f32 %v1557, %v1575
        %v1577 = vpop.f32.mrf.mxu0
        %v1578 = vadd.f32 %v1559, %v1577
        %1579 = vmatmul.bf16.gmra.mxu0 %v1507
        %v1580 = vpop.f32.mrf.mxu0
        %v1581 = vadd.f32 %v1562, %v1580
        %v1582 = vpop.f32.mrf.mxu0
        %v1583 = vadd.f32 %v1564, %v1582
        %1584 = vdwg.mxu0
        %1585 = vmatpush.bf16.msra.mxu0 %v1245
        %1586 = vmatpush.bf16.msra.mxu0 %v1243
        %1587 = vmatpush.bf16.msra.mxu0 %v1223
        %1588 = vmatpush.bf16.msra.mxu0 %v1221
        %1589 = vmatpush.bf16.msra.mxu0 %v1201
        %1590 = vmatpush.bf16.msra.mxu0 %v1199
        %1591 = vmatpush.bf16.msra.mxu0 %v1178
        %1592 = vmatpush.bf16.msra.mxu0 %v1175
        %1593 = vmatmul.bf16.gmra.mxu0 %v1488
        %v1594 = vpop.f32.mrf.mxu0
        %v1595 = vadd.f32 0.0, %v1594
        %v1596 = vpop.f32.mrf.mxu0
        %v1597 = vadd.f32 0.0, %v1596
        %1598 = vmatmul.bf16.gmra.mxu0 %v1492
        %v1599 = vpop.f32.mrf.mxu0
        %v1600 = vadd.f32 0.0, %v1599
        %v1601 = vpop.f32.mrf.mxu0
        %v1602 = vadd.f32 0.0, %v1601
        %1603 = vdwg.mxu0
        %1604 = vmatpush.bf16.msra.mxu0 %v1334
        %1605 = vmatpush.bf16.msra.mxu0 %v1332
        %1606 = vmatpush.bf16.msra.mxu0 %v1311
        %1607 = vmatpush.bf16.msra.mxu0 %v1309
        %1608 = vmatpush.bf16.msra.mxu0 %v1289
        %1609 = vmatpush.bf16.msra.mxu0 %v1287
        %1610 = vmatpush.bf16.msra.mxu0 %v1267
        %1611 = vmatpush.bf16.msra.mxu0 %v1265
        %1612 = vmatmul.bf16.gmra.mxu0 %v1489
        %v1613 = vpop.f32.mrf.mxu0
        %v1614 = vadd.f32 %v1595, %v1613
        %v1615 = vpop.f32.mrf.mxu0
        %v1616 = vadd.f32 %v1597, %v1615
        %1617 = vmatmul.bf16.gmra.mxu0 %v1493
        %v1618 = vpop.f32.mrf.mxu0
        %v1619 = vadd.f32 %v1600, %v1618
        %v1620 = vpop.f32.mrf.mxu0
        %v1621 = vadd.f32 %v1602, %v1620
        %1622 = vdwg.mxu0
        %1623 = vmatpush.bf16.msra.mxu0 %v1426
        %1624 = vmatpush.bf16.msra.mxu0 %v1424
        %1625 = vmatpush.bf16.msra.mxu0 %v1403
        %1626 = vmatpush.bf16.msra.mxu0 %v1401
        %1627 = vmatpush.bf16.msra.mxu0 %v1380
        %1628 = vmatpush.bf16.msra.mxu0 %v1378
        %1629 = vmatpush.bf16.msra.mxu0 %v1357
        %1630 = vmatpush.bf16.msra.mxu0 %v1355
        %1631 = vmatmul.bf16.gmra.mxu0 %v1490
        %v1632 = vpop.f32.mrf.mxu0
        %v1633 = vadd.f32 %v1614, %v1632
        %v1634 = vpop.f32.mrf.mxu0
        %v1635 = vadd.f32 %v1616, %v1634
        %1636 = vmatmul.bf16.gmra.mxu0 %v1494
        %v1637 = vpop.f32.mrf.mxu0
        %v1638 = vadd.f32 %v1619, %v1637
        %v1639 = vpop.f32.mrf.mxu0
        %v1640 = vadd.f32 %v1621, %v1639
        %1641 = vdwg.mxu0
        %1642 = vmatpush.bf16.msra.mxu0 0
        %1643 = vmatpush.bf16.msra.mxu0 0
        %1644 = vmatpush.bf16.msra.mxu0 0
        %1645 = vmatpush.bf16.msra.mxu0 0
        %1646 = vmatpush.bf16.msra.mxu0 0
        %1647 = vmatpush.bf16.msra.mxu0 0
        %1648 = vmatpush.bf16.msra.mxu0 %v1449
        %1649 = vmatpush.bf16.msra.mxu0 %v1447
        %1650 = vmatmul.bf16.gmra.mxu0 %v1504
        %v1651 = vpop.f32.mrf.mxu0
        %v1652 = vadd.f32 %v1633, %v1651
        %v1653 = vpop.f32.mrf.mxu0
        %v1654 = vadd.f32 %v1635, %v1653
        %1655 = vmatmul.bf16.gmra.mxu0 %v1507
        %v1656 = vpop.f32.mrf.mxu0
        %v1657 = vadd.f32 %v1638, %v1656
        %v1658 = vpop.f32.mrf.mxu0
        %v1659 = vadd.f32 %v1640, %v1658
        %1660 = vdwg.mxu0
        %1661 = vmatpush.bf16.msra.mxu0 %v1241
        %1662 = vmatpush.bf16.msra.mxu0 %v1235
        %1663 = vmatpush.bf16.msra.mxu0 %v1219
        %1664 = vmatpush.bf16.msra.mxu0 %v1213
        %1665 = vmatpush.bf16.msra.mxu0 %v1197
        %1666 = vmatpush.bf16.msra.mxu0 %v1191
        %1667 = vmatpush.bf16.msra.mxu0 %v1179
        %1668 = vmatpush.bf16.msra.mxu0 %v1176
        %1669 = vmatmul.bf16.gmra.mxu0 %v1488
        %v1670 = vpop.f32.mrf.mxu0
        %v1671 = vadd.f32 0.0, %v1670
        %v1672 = vpop.f32.mrf.mxu0
        %v1673 = vadd.f32 0.0, %v1672
        %1674 = vmatmul.bf16.gmra.mxu0 %v1492
        %v1675 = vpop.f32.mrf.mxu0
        %v1676 = vadd.f32 0.0, %v1675
        %v1677 = vpop.f32.mrf.mxu0
        %v1678 = vadd.f32 0.0, %v1677
        %1679 = vdwg.mxu0
        %1680 = vmatpush.bf16.msra.mxu0 %v1329
        %1681 = vmatpush.bf16.msra.mxu0 %v1323
        %1682 = vmatpush.bf16.msra.mxu0 %v1307
        %1683 = vmatpush.bf16.msra.mxu0 %v1301
        %1684 = vmatpush.bf16.msra.mxu0 %v1285
        %1685 = vmatpush.bf16.msra.mxu0 %v1279
        %1686 = vmatpush.bf16.msra.mxu0 %v1263
        %1687 = vmatpush.bf16.msra.mxu0 %v1257
        %1688 = vmatmul.bf16.gmra.mxu0 %v1489
        %v1689 = vpop.f32.mrf.mxu0
        %v1690 = vadd.f32 %v1671, %v1689
        %v1691 = vpop.f32.mrf.mxu0
        %v1692 = vadd.f32 %v1673, %v1691
        %1693 = vmatmul.bf16.gmra.mxu0 %v1493
        %v1694 = vpop.f32.mrf.mxu0
        %v1695 = vadd.f32 %v1676, %v1694
        %v1696 = vpop.f32.mrf.mxu0
        %v1697 = vadd.f32 %v1678, %v1696
        %1698 = vdwg.mxu0
        %1699 = vmatpush.bf16.msra.mxu0 %v1421
        %1700 = vmatpush.bf16.msra.mxu0 %v1415
        %1701 = vmatpush.bf16.msra.mxu0 %v1398
        %1702 = vmatpush.bf16.msra.mxu0 %v1392
        %1703 = vmatpush.bf16.msra.mxu0 %v1375
        %1704 = vmatpush.bf16.msra.mxu0 %v1369
        %1705 = vmatpush.bf16.msra.mxu0 %v1352
        %1706 = vmatpush.bf16.msra.mxu0 %v1346
        %1707 = vmatmul.bf16.gmra.mxu0 %v1490
        %v1708 = vpop.f32.mrf.mxu0
        %v1709 = vadd.f32 %v1690, %v1708
        %v1710 = vpop.f32.mrf.mxu0
        %v1711 = vadd.f32 %v1692, %v1710
        %1712 = vmatmul.bf16.gmra.mxu0 %v1494
        %v1713 = vpop.f32.mrf.mxu0
        %v1714 = vadd.f32 %v1695, %v1713
        %v1715 = vpop.f32.mrf.mxu0
        %v1716 = vadd.f32 %v1697, %v1715
        %1717 = vdwg.mxu0
        %1718 = vmatpush.bf16.msra.mxu0 0
        %1719 = vmatpush.bf16.msra.mxu0 0
        %1720 = vmatpush.bf16.msra.mxu0 0
        %1721 = vmatpush.bf16.msra.mxu0 0
        %1722 = vmatpush.bf16.msra.mxu0 0
        %1723 = vmatpush.bf16.msra.mxu0 0
        %1724 = vmatpush.bf16.msra.mxu0 %v1444
        %1725 = vmatpush.bf16.msra.mxu0 %v1438
        %1726 = vmatmul.bf16.gmra.mxu0 %v1504
        %v1727 = vpop.f32.mrf.mxu0
        %v1728 = vadd.f32 %v1709, %v1727
        %v1729 = vpop.f32.mrf.mxu0
        %v1730 = vadd.f32 %v1711, %v1729
        %1731 = vmatmul.bf16.gmra.mxu0 %v1507
        %v1732 = vpop.f32.mrf.mxu0
        %v1733 = vadd.f32 %v1714, %v1732
        %v1734 = vpop.f32.mrf.mxu0
        %v1735 = vadd.f32 %v1716, %v1734
        %1736 = vdwg.mxu0
        %s1737 = scalar_lea.vmem %s540, 32
        %v1738 = vld [vmem:[%s1737] sm:$0xff]
        %v1739 = vld [vmem:[%s1737 + $0x8] sm:$0xff]
        %v1740 = vld [vmem:[%s1737 + $0x10] sm:$0xff]
        %v1741 = vld [vmem:[%s1737 + $0x18] sm:$0xff]
        %s1742 = scalar_lea.vmem %s545, 32
        %v1743 = vld [vmem:[%s1742] sm:$0xff]
        %v1744 = vld [vmem:[%s1742 + $0x8] sm:$0xff]
        %v1745 = vld [vmem:[%s1742 + $0x10] sm:$0xff]
        %v1746 = vld [vmem:[%s1742 + $0x18] sm:$0xff]
        %1748 = vset.pattern.permute.xlu0 0
        %1749 = vperm.xlu0 %1748, %v1738
        %v1750 = vpop.permute.xlu0 %1749
        %1753 = vset.pattern.permute.xlu0 0
        %1754 = vperm.xlu0 %1753, %v1739
        %v1755 = vpop.permute.xlu0 %1754
        %1758 = vset.pattern.permute.xlu0 0
        %1759 = vperm.xlu0 %1758, %v1740
        %v1760 = vpop.permute.xlu0 %1759
        %1763 = vset.pattern.permute.xlu0 0
        %1764 = vperm.xlu0 %1763, %v1741
        %v1765 = vpop.permute.xlu0 %1764
        %v1767 = vmul.f32 %v1576, %v1750
        %v1768 = vmul.f32 %v1652, %v1750
        %v1769 = vmul.f32 %v1728, %v1750
        %v1770 = vmul.f32 %v1578, %v1755
        %v1771 = vmul.f32 %v1654, %v1755
        %v1772 = vmul.f32 %v1730, %v1755
        %v1773 = vmul.f32 %v1581, %v1760
        %v1774 = vmul.f32 %v1657, %v1760
        %v1775 = vmul.f32 %v1733, %v1760
        %v1776 = vmul.f32 %v1583, %v1765
        %v1777 = vmul.f32 %v1659, %v1765
        %v1778 = vmul.f32 %v1735, %v1765
        %1780 = vset.pattern.permute.xlu0 0
        %1781 = vperm.xlu0 %1780, %v1743
        %v1782 = vpop.permute.xlu0 %1781
        %1785 = vset.pattern.permute.xlu0 0
        %1786 = vperm.xlu0 %1785, %v1744
        %v1787 = vpop.permute.xlu0 %1786
        %1790 = vset.pattern.permute.xlu0 0
        %1791 = vperm.xlu0 %1790, %v1745
        %v1792 = vpop.permute.xlu0 %1791
        %1795 = vset.pattern.permute.xlu0 0
        %1796 = vperm.xlu0 %1795, %v1746
        %v1797 = vpop.permute.xlu0 %1796
        %v1799 = vadd.f32 %v1767, %v1782
        %v1800 = vadd.f32 %v1768, %v1782
        %v1801 = vadd.f32 %v1769, %v1782
        %v1802 = vadd.f32 %v1770, %v1787
        %v1803 = vadd.f32 %v1771, %v1787
        %v1804 = vadd.f32 %v1772, %v1787
        %v1805 = vadd.f32 %v1773, %v1792
        %v1806 = vadd.f32 %v1774, %v1792
        %v1807 = vadd.f32 %v1775, %v1792
        %v1808 = vadd.f32 %v1776, %v1797
        %v1809 = vadd.f32 %v1777, %v1797
        %v1810 = vadd.f32 %v1778, %v1797
        %s1811 = sld [smem:[#allocation3 + $0x1]]
        %vm1812 = vcmp.ge.f32.partialorder %v1799, 0.0
        %vm1813 = vcmp.ge.f32.partialorder %v1800, 0.0
        %vm1814 = vcmp.ge.f32.partialorder %v1801, 0.0
        %vm1815 = vcmp.ge.f32.partialorder %v1802, 0.0
        %vm1816 = vcmp.ge.f32.partialorder %v1803, 0.0
        %vm1817 = vcmp.ge.f32.partialorder %v1804, 0.0
        %vm1818 = vcmp.ge.f32.partialorder %v1805, 0.0
        %vm1819 = vcmp.ge.f32.partialorder %v1806, 0.0
        %vm1820 = vcmp.ge.f32.partialorder %v1807, 0.0
        %vm1821 = vcmp.ge.f32.partialorder %v1808, 0.0
        %vm1822 = vcmp.ge.f32.partialorder %v1809, 0.0
        %vm1823 = vcmp.ge.f32.partialorder %v1810, 0.0
        %v1824 = vstv %s1811
        %v1825 = vmul.f32 %v1824, %v1799
        %v1826 = vmul.f32 %v1824, %v1800
        %v1827 = vmul.f32 %v1824, %v1801
        %v1828 = vmul.f32 %v1824, %v1802
        %v1829 = vmul.f32 %v1824, %v1803
        %v1830 = vmul.f32 %v1824, %v1804
        %v1831 = vmul.f32 %v1824, %v1805
        %v1832 = vmul.f32 %v1824, %v1806
        %v1833 = vmul.f32 %v1824, %v1807
        %v1834 = vmul.f32 %v1824, %v1808
        %v1835 = vmul.f32 %v1824, %v1809
        %v1836 = vmul.f32 %v1824, %v1810
        %v1837 = vsel %vm1812, %v1799, %v1825
        %v1838 = vsel %vm1813, %v1800, %v1826
        %v1839 = vsel %vm1814, %v1801, %v1827
        %v1840 = vsel %vm1815, %v1802, %v1828
        %v1841 = vsel %vm1816, %v1803, %v1829
        %v1842 = vsel %vm1817, %v1804, %v1830
        %v1843 = vsel %vm1818, %v1805, %v1831
        %v1844 = vsel %vm1819, %v1806, %v1832
        %v1845 = vsel %vm1820, %v1807, %v1833
        %v1846 = vsel %vm1821, %v1808, %v1834
        %v1847 = vsel %vm1822, %v1809, %v1835
        %v1848 = vsel %vm1823, %v1810, %v1836
        %v1849 = vld [vmem:[%s6] sm:$0xff]
        %v1850 = vld [vmem:[%s6 + $0x8] sm:$0xff]
        %v1851 = vld [vmem:[%s6 + $0x10] sm:$0xff]
        %v1852 = vld [vmem:[%s6 + $0x18] sm:$0xff]
        %1865 = vrot.lane.b32.xlu0 %v1134, 104
        %v1866 = vpop.permute.xlu0 %1865
        %1867 = vrot.lane.b32.xlu0 %v1135, 104
        %v1868 = vpop.permute.xlu0 %1867
        %1869 = vrot.lane.b32.xlu0 %v1136, 104
        %v1870 = vpop.permute.xlu0 %1869
        %1871 = vrot.lane.b32.xlu0 %v1137, 104
        %v1872 = vpop.permute.xlu0 %1871
        %1873 = vrot.lane.b32.xlu0 %v1138, 104
        %v1874 = vpop.permute.xlu0 %1873
        %1875 = vrot.lane.b32.xlu0 %v1139, 104
        %v1876 = vpop.permute.xlu0 %1875
        %1877 = vrot.lane.b32.xlu0 %v1140, 104
        %v1878 = vpop.permute.xlu0 %1877
        %1879 = vrot.lane.b32.xlu0 %v1141, 104
        %v1880 = vpop.permute.xlu0 %1879
        %1881 = vrot.lane.b32.xlu0 %v1142, 104
        %v1882 = vpop.permute.xlu0 %1881
        %1883 = vrot.lane.b32.xlu0 %v1143, 104
        %v1884 = vpop.permute.xlu0 %1883
        %1885 = vrot.lane.b32.xlu0 %v1144, 104
        %v1886 = vpop.permute.xlu0 %1885
        %1887 = vrot.lane.b32.xlu0 %v1145, 104
        %v1888 = vpop.permute.xlu0 %1887
        %vm1889 = vcmask 850944
        %v1890 = vsel %vm1889, %v1866, %v1868
        %v1891 = vsel %vm1889, %v1868, %v1870
        %v1892 = vsel %vm1889, %v1872, %v1874
        %v1893 = vsel %vm1889, %v1874, %v1876
        %v1894 = vsel %vm1889, %v1878, %v1880
        %v1895 = vsel %vm1889, %v1880, %v1882
        %v1896 = vsel %vm1889, %v1884, %v1886
        %v1897 = vsel %vm1889, %v1886, %v1888
        %v1911 = vsel %vm1502, %v1849, 0
        %v1914 = vsel %vm1502, %v1850, 0
        %v1917 = vsel %vm1502, %v1851, 0
        %v1920 = vsel %vm1502, %v1852, 0
        %1922 = vmatpush.msra.mxu0 0.0
        %1923 = vmatpush.msra.mxu0 0.0
        %1924 = vmatpush.msra.mxu0 0.0
        %1925 = vmatpush.msra.mxu0 0.0
        %1926 = vmatpush.msra.mxu0 0.0
        %1927 = vmatpush.msra.mxu0 0.0
        %1928 = vmatpush.msra.mxu0 0.0
        %1929 = vmatpush.msra.mxu0 0.0
        %1930 = vmatpush.msra.mxu0 0.0
        %1931 = vmatpush.msra.mxu0 0.0
        %1932 = vmatpush.msra.mxu0 0.0
        %1933 = vmatpush.msra.mxu0 0.0
        %1934 = vmatpush.msra.mxu0 %v1896
        %1935 = vmatpush.msra.mxu0 %v1894
        %1936 = vmatpush.msra.mxu0 %v1892
        %1937 = vmatpush.msra.mxu0 %v1890
        %1938 = vmatmul.f32.gmra.mxu0 %v1911
        %v1939 = vpop.f32.mrf.mxu0
        %v1940 = vadd.f32 0.0, %v1939
        %1941 = vmatmul.f32.gmra.mxu0 %v1914
        %v1942 = vpop.f32.mrf.mxu0
        %v1943 = vadd.f32 0.0, %v1942
        %1944 = vmatmul.f32.gmra.mxu0 %v1917
        %v1945 = vpop.f32.mrf.mxu0
        %v1946 = vadd.f32 0.0, %v1945
        %1947 = vmatmul.f32.gmra.mxu0 %v1920
        %v1948 = vpop.f32.mrf.mxu0
        %v1949 = vadd.f32 0.0, %v1948
        %1950 = vdwg.mxu0
        %1951 = vmatpush.msra.mxu0 0.0
        %1952 = vmatpush.msra.mxu0 0.0
        %1953 = vmatpush.msra.mxu0 0.0
        %1954 = vmatpush.msra.mxu0 0.0
        %1955 = vmatpush.msra.mxu0 0.0
        %1956 = vmatpush.msra.mxu0 0.0
        %1957 = vmatpush.msra.mxu0 0.0
        %1958 = vmatpush.msra.mxu0 0.0
        %1959 = vmatpush.msra.mxu0 0.0
        %1960 = vmatpush.msra.mxu0 0.0
        %1961 = vmatpush.msra.mxu0 0.0
        %1962 = vmatpush.msra.mxu0 0.0
        %1963 = vmatpush.msra.mxu0 %v1897
        %1964 = vmatpush.msra.mxu0 %v1895
        %1965 = vmatpush.msra.mxu0 %v1893
        %1966 = vmatpush.msra.mxu0 %v1891
        %1967 = vmatmul.f32.gmra.mxu0 %v1911
        %v1968 = vpop.f32.mrf.mxu0
        %v1969 = vadd.f32 0.0, %v1968
        %1970 = vmatmul.f32.gmra.mxu0 %v1914
        %v1971 = vpop.f32.mrf.mxu0
        %v1972 = vadd.f32 0.0, %v1971
        %1973 = vmatmul.f32.gmra.mxu0 %v1917
        %v1974 = vpop.f32.mrf.mxu0
        %v1975 = vadd.f32 0.0, %v1974
        %1976 = vmatmul.f32.gmra.mxu0 %v1920
        %v1977 = vpop.f32.mrf.mxu0
        %v1978 = vadd.f32 0.0, %v1977
        %1979 = vdwg.mxu0
        %1980 = vmatpush.msra.mxu0 0.0
        %1981 = vmatpush.msra.mxu0 0.0
        %1982 = vmatpush.msra.mxu0 0.0
        %1983 = vmatpush.msra.mxu0 0.0
        %1984 = vmatpush.msra.mxu0 0.0
        %1985 = vmatpush.msra.mxu0 0.0
        %1986 = vmatpush.msra.mxu0 0.0
        %1987 = vmatpush.msra.mxu0 0.0
        %1988 = vmatpush.msra.mxu0 0.0
        %1989 = vmatpush.msra.mxu0 0.0
        %1990 = vmatpush.msra.mxu0 0.0
        %1991 = vmatpush.msra.mxu0 0.0
        %1992 = vmatpush.msra.mxu0 %v1888
        %1993 = vmatpush.msra.mxu0 %v1882
        %1994 = vmatpush.msra.mxu0 %v1876
        %1995 = vmatpush.msra.mxu0 %v1870
        %1996 = vmatmul.f32.gmra.mxu0 %v1911
        %v1997 = vpop.f32.mrf.mxu0
        %v1998 = vadd.f32 0.0, %v1997
        %1999 = vmatmul.f32.gmra.mxu0 %v1914
        %v2000 = vpop.f32.mrf.mxu0
        %v2001 = vadd.f32 0.0, %v2000
        %2002 = vmatmul.f32.gmra.mxu0 %v1917
        %v2003 = vpop.f32.mrf.mxu0
        %v2004 = vadd.f32 0.0, %v2003
        %2005 = vmatmul.f32.gmra.mxu0 %v1920
        %v2006 = vpop.f32.mrf.mxu0
        %v2007 = vadd.f32 0.0, %v2006
        %2008 = vdwg.mxu0
        %v2009 = vadd.f32 %v1837, %v1940
        %v2010 = vadd.f32 %v1838, %v1969
        %v2011 = vadd.f32 %v1839, %v1998
        %v2012 = vadd.f32 %v1840, %v1943
        %v2013 = vadd.f32 %v1841, %v1972
        %v2014 = vadd.f32 %v1842, %v2001
        %v2015 = vadd.f32 %v1843, %v1946
        %v2016 = vadd.f32 %v1844, %v1975
        %v2017 = vadd.f32 %v1845, %v2004
        %v2018 = vadd.f32 %v1846, %v1949
        %v2019 = vadd.f32 %v1847, %v1978
        %v2020 = vadd.f32 %v1848, %v2007
        %v2021 = vpack.c.bf16 %v2010, %v2009
        %v2022 = vpack.c.bf16 %v2011, %v2011
        %v2023 = vpack.c.bf16 %v2013, %v2012
        %v2024 = vpack.c.bf16 %v2014, %v2014
        %v2025 = vpack.c.bf16 %v2016, %v2015
        %v2026 = vpack.c.bf16 %v2017, %v2017
        %v2027 = vpack.c.bf16 %v2019, %v2018
        %v2028 = vpack.c.bf16 %v2020, %v2020
        %v2033 = vunpack.c.l.b16 %v2021
        %v2034 = vunpack.c.h.b16 %v2021
        %v2035 = vunpack.c.l.b16 %v2023
        %v2036 = vunpack.c.h.b16 %v2023
        %v2037 = vunpack.c.l.b16 %v2025
        %v2038 = vunpack.c.h.b16 %v2025
        %v2039 = vunpack.c.l.b16 %v2027
        %v2040 = vunpack.c.h.b16 %v2027
        %v2041 = vpack.c.b16 %v2035, %v2033
        %v2042 = vpack.c.b16 %v2036, %v2034
        %v2043 = vpack.c.b16 %v2039, %v2037
        %v2044 = vpack.c.b16 %v2040, %v2038
        %2049 = vrot.lane.b32.xlu0 %v2041, 124
        %v2050 = vpop.permute.xlu0 %2049
        %2051 = vrot.lane.b32.xlu0 %v2042, 124
        %v2052 = vpop.permute.xlu0 %2051
        %2053 = vrot.lane.b32.xlu0 %v2043, 124
        %v2054 = vpop.permute.xlu0 %2053
        %2055 = vrot.lane.b32.xlu0 %v2044, 124
        %v2056 = vpop.permute.xlu0 %2055
        %v2057 = vsel %vm625, %v2050, %v2052
        %v2058 = vsel %vm625, %v2054, %v2056
        %2063 = vrot.lane.b32.xlu0 %v2041, 120
        %v2064 = vpop.permute.xlu0 %2063
        %2065 = vrot.lane.b32.xlu0 %v2042, 120
        %v2066 = vpop.permute.xlu0 %2065
        %2067 = vrot.lane.b32.xlu0 %v2043, 120
        %v2068 = vpop.permute.xlu0 %2067
        %2069 = vrot.lane.b32.xlu0 %v2044, 120
        %v2070 = vpop.permute.xlu0 %2069
        %v2071 = vsel %vm676, %v2064, %v2066
        %v2072 = vsel %vm676, %v2068, %v2070
        %2077 = vrot.lane.b32.xlu0 %v2041, 116
        %v2078 = vpop.permute.xlu0 %2077
        %2079 = vrot.lane.b32.xlu0 %v2042, 116
        %v2080 = vpop.permute.xlu0 %2079
        %2081 = vrot.lane.b32.xlu0 %v2043, 116
        %v2082 = vpop.permute.xlu0 %2081
        %2083 = vrot.lane.b32.xlu0 %v2044, 116
        %v2084 = vpop.permute.xlu0 %2083
        %v2085 = vsel %vm730, %v2078, %v2080
        %v2086 = vsel %vm730, %v2082, %v2084
        %2091 = vrot.lane.b32.xlu0 %v2041, 112
        %v2092 = vpop.permute.xlu0 %2091
        %2093 = vrot.lane.b32.xlu0 %v2042, 112
        %v2094 = vpop.permute.xlu0 %2093
        %2095 = vrot.lane.b32.xlu0 %v2043, 112
        %v2096 = vpop.permute.xlu0 %2095
        %2097 = vrot.lane.b32.xlu0 %v2044, 112
        %v2098 = vpop.permute.xlu0 %2097
        %v2099 = vsel %vm1353, %v2092, %v2094
        %v2100 = vsel %vm1353, %v2096, %v2098
        %2105 = vrot.lane.b32.xlu0 %v2041, 108
        %v2106 = vpop.permute.xlu0 %2105
        %2107 = vrot.lane.b32.xlu0 %v2042, 108
        %v2108 = vpop.permute.xlu0 %2107
        %2109 = vrot.lane.b32.xlu0 %v2043, 108
        %v2110 = vpop.permute.xlu0 %2109
        %2111 = vrot.lane.b32.xlu0 %v2044, 108
        %v2112 = vpop.permute.xlu0 %2111
        %v2113 = vsel %vm1399, %v2106, %v2108
        %v2114 = vsel %vm1399, %v2110, %v2112
        %2119 = vrot.lane.b32.xlu0 %v2041, 104
        %v2120 = vpop.permute.xlu0 %2119
        %2121 = vrot.lane.b32.xlu0 %v2042, 104
        %v2122 = vpop.permute.xlu0 %2121
        %2123 = vrot.lane.b32.xlu0 %v2043, 104
        %v2124 = vpop.permute.xlu0 %2123
        %2125 = vrot.lane.b32.xlu0 %v2044, 104
        %v2126 = vpop.permute.xlu0 %2125
        %v2127 = vsel %vm1445, %v2120, %v2122
        %v2128 = vsel %vm1445, %v2124, %v2126
        %2133 = vrot.lane.b32.xlu0 %v2041, 100
        %v2134 = vpop.permute.xlu0 %2133
        %2135 = vrot.lane.b32.xlu0 %v2042, 100
        %v2136 = vpop.permute.xlu0 %2135
        %2137 = vrot.lane.b32.xlu0 %v2043, 100
        %v2138 = vpop.permute.xlu0 %2137
        %2139 = vrot.lane.b32.xlu0 %v2044, 100
        %v2140 = vpop.permute.xlu0 %2139
        %vm2141 = vcmask 818176
        %v2142 = vsel %vm2141, %v2134, %v2136
        %v2143 = vsel %vm2141, %v2138, %v2140
        %2148 = vrot.lane.b32.xlu0 %v2041, 96
        %v2149 = vpop.permute.xlu0 %2148
        %2150 = vrot.lane.b32.xlu0 %v2042, 96
        %v2151 = vpop.permute.xlu0 %2150
        %2152 = vrot.lane.b32.xlu0 %v2043, 96
        %v2153 = vpop.permute.xlu0 %2152
        %2154 = vrot.lane.b32.xlu0 %v2044, 96
        %v2155 = vpop.permute.xlu0 %2154
        %vm2156 = vcmask 785408
        %v2157 = vsel %vm2156, %v2149, %v2151
        %v2158 = vsel %vm2156, %v2153, %v2155
        %v2167 = vunpack.c.l.b16 %v2022
        %v2168 = vunpack.c.l.b16 %v2024
        %v2169 = vunpack.c.l.b16 %v2026
        %v2170 = vunpack.c.l.b16 %v2028
        %v2171 = vpack.c.b16 %v2168, %v2167
        %v2172 = vpack.c.b16 %v2170, %v2169
        %2173 = vrot.lane.b32.xlu0 %v2041, 92
        %v2174 = vpop.permute.xlu0 %2173
        %2175 = vrot.lane.b32.xlu0 %v2042, 92
        %v2176 = vpop.permute.xlu0 %2175
        %2177 = vrot.lane.b32.xlu0 %v2171, 92
        %v2178 = vpop.permute.xlu0 %2177
        %2179 = vrot.lane.b32.xlu0 %v2043, 92
        %v2180 = vpop.permute.xlu0 %2179
        %2181 = vrot.lane.b32.xlu0 %v2044, 92
        %v2182 = vpop.permute.xlu0 %2181
        %2183 = vrot.lane.b32.xlu0 %v2172, 92
        %v2184 = vpop.permute.xlu0 %2183
        %vm2185 = vcmask 752640
        %v2186 = vsel %vm2185, %v2174, %v2176
        %v2187 = vsel %vm2185, %v2176, %v2178
        %v2188 = vsel %vm2185, %v2180, %v2182
        %v2189 = vsel %vm2185, %v2182, %v2184
        %2194 = vrot.lane.b32.xlu0 %v2041, 88
        %v2195 = vpop.permute.xlu0 %2194
        %2196 = vrot.lane.b32.xlu0 %v2042, 88
        %v2197 = vpop.permute.xlu0 %2196
        %2198 = vrot.lane.b32.xlu0 %v2171, 88
        %v2199 = vpop.permute.xlu0 %2198
        %2200 = vrot.lane.b32.xlu0 %v2043, 88
        %v2201 = vpop.permute.xlu0 %2200
        %2202 = vrot.lane.b32.xlu0 %v2044, 88
        %v2203 = vpop.permute.xlu0 %2202
        %2204 = vrot.lane.b32.xlu0 %v2172, 88
        %v2205 = vpop.permute.xlu0 %2204
        %vm2206 = vcmask 719872
        %v2207 = vsel %vm2206, %v2195, %v2197
        %v2208 = vsel %vm2206, %v2197, %v2199
        %v2209 = vsel %vm2206, %v2201, %v2203
        %v2210 = vsel %vm2206, %v2203, %v2205
        %2215 = vrot.lane.b32.xlu0 %v2041, 84
        %v2216 = vpop.permute.xlu0 %2215
        %2217 = vrot.lane.b32.xlu0 %v2042, 84
        %v2218 = vpop.permute.xlu0 %2217
        %2219 = vrot.lane.b32.xlu0 %v2171, 84
        %v2220 = vpop.permute.xlu0 %2219
        %2221 = vrot.lane.b32.xlu0 %v2043, 84
        %v2222 = vpop.permute.xlu0 %2221
        %2223 = vrot.lane.b32.xlu0 %v2044, 84
        %v2224 = vpop.permute.xlu0 %2223
        %2225 = vrot.lane.b32.xlu0 %v2172, 84
        %v2226 = vpop.permute.xlu0 %2225
        %vm2227 = vcmask 687104
        %v2228 = vsel %vm2227, %v2216, %v2218
        %v2229 = vsel %vm2227, %v2218, %v2220
        %v2230 = vsel %vm2227, %v2222, %v2224
        %v2231 = vsel %vm2227, %v2224, %v2226
        %2236 = vrot.lane.b32.xlu0 %v2041, 80
        %v2237 = vpop.permute.xlu0 %2236
        %2238 = vrot.lane.b32.xlu0 %v2042, 80
        %v2239 = vpop.permute.xlu0 %2238
        %2240 = vrot.lane.b32.xlu0 %v2171, 80
        %v2241 = vpop.permute.xlu0 %2240
        %2242 = vrot.lane.b32.xlu0 %v2043, 80
        %v2243 = vpop.permute.xlu0 %2242
        %2244 = vrot.lane.b32.xlu0 %v2044, 80
        %v2245 = vpop.permute.xlu0 %2244
        %2246 = vrot.lane.b32.xlu0 %v2172, 80
        %v2247 = vpop.permute.xlu0 %2246
        %vm2248 = vcmask 654336
        %v2249 = vsel %vm2248, %v2237, %v2239
        %v2250 = vsel %vm2248, %v2239, %v2241
        %v2251 = vsel %vm2248, %v2243, %v2245
        %v2252 = vsel %vm2248, %v2245, %v2247
        %v2257 = vld [vmem:[%s7] sm:$0xff]
        %v2258 = vld [vmem:[%s7 + $0x8] sm:$0xff]
        %v2259 = vld [vmem:[%s7 + $0x10] sm:$0xff]
        %v2260 = vld [vmem:[%s7 + $0x18] sm:$0xff]
        %v2261 = vld [vmem:[%s7 + $0x20] sm:$0xff]
        %v2262 = vld [vmem:[%s7 + $0x28] sm:$0xff]
        %v2263 = vld [vmem:[%s7 + $0x30] sm:$0xff]
        %v2264 = vld [vmem:[%s7 + $0x38] sm:$0xff]
        %v2273 = vunpack.c.l.b16 %v2257
        %v2274 = vunpack.c.h.b16 %v2257
        %v2275 = vunpack.c.l.b16 %v2258
        %v2276 = vunpack.c.h.b16 %v2258
        %v2277 = vunpack.c.l.b16 %v2259
        %v2278 = vunpack.c.h.b16 %v2259
        %v2279 = vunpack.c.l.b16 %v2260
        %v2280 = vunpack.c.h.b16 %v2260
        %v2281 = vunpack.c.l.b16 %v2261
        %v2282 = vunpack.c.h.b16 %v2261
        %v2283 = vunpack.c.l.b16 %v2262
        %v2284 = vunpack.c.h.b16 %v2262
        %v2285 = vunpack.c.l.b16 %v2263
        %v2286 = vunpack.c.h.b16 %v2263
        %v2287 = vunpack.c.l.b16 %v2264
        %v2288 = vunpack.c.h.b16 %v2264
        %v2289 = vpack.c.b16 %v2277, %v2273
        %v2290 = vpack.c.b16 %v2278, %v2274
        %v2291 = vpack.c.b16 %v2279, %v2275
        %v2292 = vpack.c.b16 %v2280, %v2276
        %v2293 = vpack.c.b16 %v2285, %v2281
        %v2294 = vpack.c.b16 %v2286, %v2282
        %v2295 = vpack.c.b16 %v2287, %v2283
        %v2296 = vpack.c.b16 %v2288, %v2284
        %v2304 = vsel %vm1502, %v2292, 0
        %v2307 = vsel %vm1502, %v2296, 0
        %2309 = vmatpush.bf16.msra.mxu0 %v2086
        %2310 = vmatpush.bf16.msra.mxu0 %v2085
        %2311 = vmatpush.bf16.msra.mxu0 %v2072
        %2312 = vmatpush.bf16.msra.mxu0 %v2071
        %2313 = vmatpush.bf16.msra.mxu0 %v2058
        %2314 = vmatpush.bf16.msra.mxu0 %v2057
        %2315 = vmatpush.bf16.msra.mxu0 %v2043
        %2316 = vmatpush.bf16.msra.mxu0 %v2041
        %2317 = vmatmul.bf16.gmra.mxu0 %v2289
        %v2318 = vpop.f32.mrf.mxu0
        %v2319 = vadd.f32 0.0, %v2318
        %v2320 = vpop.f32.mrf.mxu0
        %v2321 = vadd.f32 0.0, %v2320
        %2322 = vmatmul.bf16.gmra.mxu0 %v2293
        %v2323 = vpop.f32.mrf.mxu0
        %v2324 = vadd.f32 0.0, %v2323
        %v2325 = vpop.f32.mrf.mxu0
        %v2326 = vadd.f32 0.0, %v2325
        %2327 = vdwg.mxu0
        %2328 = vmatpush.bf16.msra.mxu0 %v2143
        %2329 = vmatpush.bf16.msra.mxu0 %v2142
        %2330 = vmatpush.bf16.msra.mxu0 %v2128
        %2331 = vmatpush.bf16.msra.mxu0 %v2127
        %2332 = vmatpush.bf16.msra.mxu0 %v2114
        %2333 = vmatpush.bf16.msra.mxu0 %v2113
        %2334 = vmatpush.bf16.msra.mxu0 %v2100
        %2335 = vmatpush.bf16.msra.mxu0 %v2099
        %2336 = vmatmul.bf16.gmra.mxu0 %v2290
        %v2337 = vpop.f32.mrf.mxu0
        %v2338 = vadd.f32 %v2319, %v2337
        %v2339 = vpop.f32.mrf.mxu0
        %v2340 = vadd.f32 %v2321, %v2339
        %2341 = vmatmul.bf16.gmra.mxu0 %v2294
        %v2342 = vpop.f32.mrf.mxu0
        %v2343 = vadd.f32 %v2324, %v2342
        %v2344 = vpop.f32.mrf.mxu0
        %v2345 = vadd.f32 %v2326, %v2344
        %2346 = vdwg.mxu0
        %2347 = vmatpush.bf16.msra.mxu0 %v2230
        %2348 = vmatpush.bf16.msra.mxu0 %v2228
        %2349 = vmatpush.bf16.msra.mxu0 %v2209
        %2350 = vmatpush.bf16.msra.mxu0 %v2207
        %2351 = vmatpush.bf16.msra.mxu0 %v2188
        %2352 = vmatpush.bf16.msra.mxu0 %v2186
        %2353 = vmatpush.bf16.msra.mxu0 %v2158
        %2354 = vmatpush.bf16.msra.mxu0 %v2157
        %2355 = vmatmul.bf16.gmra.mxu0 %v2291
        %v2356 = vpop.f32.mrf.mxu0
        %v2357 = vadd.f32 %v2338, %v2356
        %v2358 = vpop.f32.mrf.mxu0
        %v2359 = vadd.f32 %v2340, %v2358
        %2360 = vmatmul.bf16.gmra.mxu0 %v2295
        %v2361 = vpop.f32.mrf.mxu0
        %v2362 = vadd.f32 %v2343, %v2361
        %v2363 = vpop.f32.mrf.mxu0
        %v2364 = vadd.f32 %v2345, %v2363
        %2365 = vdwg.mxu0
        %2366 = vmatpush.bf16.msra.mxu0 0
        %2367 = vmatpush.bf16.msra.mxu0 0
        %2368 = vmatpush.bf16.msra.mxu0 0
        %2369 = vmatpush.bf16.msra.mxu0 0
        %2370 = vmatpush.bf16.msra.mxu0 0
        %2371 = vmatpush.bf16.msra.mxu0 0
        %2372 = vmatpush.bf16.msra.mxu0 %v2251
        %2373 = vmatpush.bf16.msra.mxu0 %v2249
        %2374 = vmatmul.bf16.gmra.mxu0 %v2304
        %v2375 = vpop.f32.mrf.mxu0
        %v2376 = vadd.f32 %v2357, %v2375
        %v2377 = vpop.f32.mrf.mxu0
        %v2378 = vadd.f32 %v2359, %v2377
        %2379 = vmatmul.bf16.gmra.mxu0 %v2307
        %v2380 = vpop.f32.mrf.mxu0
        %v2381 = vadd.f32 %v2362, %v2380
        %v2382 = vpop.f32.mrf.mxu0
        %v2383 = vadd.f32 %v2364, %v2382
        %2384 = vdwg.mxu0
        %2385 = vmatpush.bf16.msra.mxu0 %v2084
        %2386 = vmatpush.bf16.msra.mxu0 %v2080
        %2387 = vmatpush.bf16.msra.mxu0 %v2070
        %2388 = vmatpush.bf16.msra.mxu0 %v2066
        %2389 = vmatpush.bf16.msra.mxu0 %v2056
        %2390 = vmatpush.bf16.msra.mxu0 %v2052
        %2391 = vmatpush.bf16.msra.mxu0 %v2044
        %2392 = vmatpush.bf16.msra.mxu0 %v2042
        %2393 = vmatmul.bf16.gmra.mxu0 %v2289
        %v2394 = vpop.f32.mrf.mxu0
        %v2395 = vadd.f32 0.0, %v2394
        %v2396 = vpop.f32.mrf.mxu0
        %v2397 = vadd.f32 0.0, %v2396
        %2398 = vmatmul.bf16.gmra.mxu0 %v2293
        %v2399 = vpop.f32.mrf.mxu0
        %v2400 = vadd.f32 0.0, %v2399
        %v2401 = vpop.f32.mrf.mxu0
        %v2402 = vadd.f32 0.0, %v2401
        %2403 = vdwg.mxu0
        %2404 = vmatpush.bf16.msra.mxu0 %v2140
        %2405 = vmatpush.bf16.msra.mxu0 %v2136
        %2406 = vmatpush.bf16.msra.mxu0 %v2126
        %2407 = vmatpush.bf16.msra.mxu0 %v2122
        %2408 = vmatpush.bf16.msra.mxu0 %v2112
        %2409 = vmatpush.bf16.msra.mxu0 %v2108
        %2410 = vmatpush.bf16.msra.mxu0 %v2098
        %2411 = vmatpush.bf16.msra.mxu0 %v2094
        %2412 = vmatmul.bf16.gmra.mxu0 %v2290
        %v2413 = vpop.f32.mrf.mxu0
        %v2414 = vadd.f32 %v2395, %v2413
        %v2415 = vpop.f32.mrf.mxu0
        %v2416 = vadd.f32 %v2397, %v2415
        %2417 = vmatmul.bf16.gmra.mxu0 %v2294
        %v2418 = vpop.f32.mrf.mxu0
        %v2419 = vadd.f32 %v2400, %v2418
        %v2420 = vpop.f32.mrf.mxu0
        %v2421 = vadd.f32 %v2402, %v2420
        %2422 = vdwg.mxu0
        %2423 = vmatpush.bf16.msra.mxu0 %v2231
        %2424 = vmatpush.bf16.msra.mxu0 %v2229
        %2425 = vmatpush.bf16.msra.mxu0 %v2210
        %2426 = vmatpush.bf16.msra.mxu0 %v2208
        %2427 = vmatpush.bf16.msra.mxu0 %v2189
        %2428 = vmatpush.bf16.msra.mxu0 %v2187
        %2429 = vmatpush.bf16.msra.mxu0 %v2155
        %2430 = vmatpush.bf16.msra.mxu0 %v2151
        %2431 = vmatmul.bf16.gmra.mxu0 %v2291
        %v2432 = vpop.f32.mrf.mxu0
        %v2433 = vadd.f32 %v2414, %v2432
        %v2434 = vpop.f32.mrf.mxu0
        %v2435 = vadd.f32 %v2416, %v2434
        %2436 = vmatmul.bf16.gmra.mxu0 %v2295
        %v2437 = vpop.f32.mrf.mxu0
        %v2438 = vadd.f32 %v2419, %v2437
        %v2439 = vpop.f32.mrf.mxu0
        %v2440 = vadd.f32 %v2421, %v2439
        %2441 = vdwg.mxu0
        %2442 = vmatpush.bf16.msra.mxu0 0
        %2443 = vmatpush.bf16.msra.mxu0 0
        %2444 = vmatpush.bf16.msra.mxu0 0
        %2445 = vmatpush.bf16.msra.mxu0 0
        %2446 = vmatpush.bf16.msra.mxu0 0
        %2447 = vmatpush.bf16.msra.mxu0 0
        %2448 = vmatpush.bf16.msra.mxu0 %v2252
        %2449 = vmatpush.bf16.msra.mxu0 %v2250
        %2450 = vmatmul.bf16.gmra.mxu0 %v2304
        %v2451 = vpop.f32.mrf.mxu0
        %v2452 = vadd.f32 %v2433, %v2451
        %v2453 = vpop.f32.mrf.mxu0
        %v2454 = vadd.f32 %v2435, %v2453
        %2455 = vmatmul.bf16.gmra.mxu0 %v2307
        %v2456 = vpop.f32.mrf.mxu0
        %v2457 = vadd.f32 %v2438, %v2456
        %v2458 = vpop.f32.mrf.mxu0
        %v2459 = vadd.f32 %v2440, %v2458
        %2460 = vdwg.mxu0
        %s2461 = scalar_lea.vmem %s540, 64
        %v2462 = vld [vmem:[%s2461] sm:$0xff]
        %v2463 = vld [vmem:[%s2461 + $0x8] sm:$0xff]
        %v2464 = vld [vmem:[%s2461 + $0x10] sm:$0xff]
        %v2465 = vld [vmem:[%s2461 + $0x18] sm:$0xff]
        %s2466 = scalar_lea.vmem %s545, 64
        %v2467 = vld [vmem:[%s2466] sm:$0xff]
        %v2468 = vld [vmem:[%s2466 + $0x8] sm:$0xff]
        %v2469 = vld [vmem:[%s2466 + $0x10] sm:$0xff]
        %v2470 = vld [vmem:[%s2466 + $0x18] sm:$0xff]
        %2472 = vset.pattern.permute.xlu0 0
        %2473 = vperm.xlu0 %2472, %v2462
        %v2474 = vpop.permute.xlu0 %2473
        %2477 = vset.pattern.permute.xlu0 0
        %2478 = vperm.xlu0 %2477, %v2463
        %v2479 = vpop.permute.xlu0 %2478
        %2482 = vset.pattern.permute.xlu0 0
        %2483 = vperm.xlu0 %2482, %v2464
        %v2484 = vpop.permute.xlu0 %2483
        %2487 = vset.pattern.permute.xlu0 0
        %2488 = vperm.xlu0 %2487, %v2465
        %v2489 = vpop.permute.xlu0 %2488
        %v2491 = vmul.f32 %v2376, %v2474
        %v2492 = vmul.f32 %v2452, %v2474
        %v2493 = vmul.f32 %v2378, %v2479
        %v2494 = vmul.f32 %v2454, %v2479
        %v2495 = vmul.f32 %v2381, %v2484
        %v2496 = vmul.f32 %v2457, %v2484
        %v2497 = vmul.f32 %v2383, %v2489
        %v2498 = vmul.f32 %v2459, %v2489
        %2500 = vset.pattern.permute.xlu0 0
        %2501 = vperm.xlu0 %2500, %v2467
        %v2502 = vpop.permute.xlu0 %2501
        %2505 = vset.pattern.permute.xlu0 0
        %2506 = vperm.xlu0 %2505, %v2468
        %v2507 = vpop.permute.xlu0 %2506
        %2510 = vset.pattern.permute.xlu0 0
        %2511 = vperm.xlu0 %2510, %v2469
        %v2512 = vpop.permute.xlu0 %2511
        %2515 = vset.pattern.permute.xlu0 0
        %2516 = vperm.xlu0 %2515, %v2470
        %v2517 = vpop.permute.xlu0 %2516
        %v2519 = vadd.f32 %v2491, %v2502
        %v2520 = vadd.f32 %v2492, %v2502
        %v2521 = vadd.f32 %v2493, %v2507
        %v2522 = vadd.f32 %v2494, %v2507
        %v2523 = vadd.f32 %v2495, %v2512
        %v2524 = vadd.f32 %v2496, %v2512
        %v2525 = vadd.f32 %v2497, %v2517
        %v2526 = vadd.f32 %v2498, %v2517
        %s2527 = sld [smem:[#allocation3 + $0x2]]
        %vm2528 = vcmp.ge.f32.partialorder %v2519, 0.0
        %vm2529 = vcmp.ge.f32.partialorder %v2520, 0.0
        %vm2530 = vcmp.ge.f32.partialorder %v2521, 0.0
        %vm2531 = vcmp.ge.f32.partialorder %v2522, 0.0
        %vm2532 = vcmp.ge.f32.partialorder %v2523, 0.0
        %vm2533 = vcmp.ge.f32.partialorder %v2524, 0.0
        %vm2534 = vcmp.ge.f32.partialorder %v2525, 0.0
        %vm2535 = vcmp.ge.f32.partialorder %v2526, 0.0
        %v2536 = vstv %s2527
        %v2537 = vmul.f32 %v2536, %v2519
        %v2538 = vmul.f32 %v2536, %v2520
        %v2539 = vmul.f32 %v2536, %v2521
        %v2540 = vmul.f32 %v2536, %v2522
        %v2541 = vmul.f32 %v2536, %v2523
        %v2542 = vmul.f32 %v2536, %v2524
        %v2543 = vmul.f32 %v2536, %v2525
        %v2544 = vmul.f32 %v2536, %v2526
        %v2545 = vsel %vm2528, %v2519, %v2537
        %v2546 = vsel %vm2529, %v2520, %v2538
        %v2547 = vsel %vm2530, %v2521, %v2539
        %v2548 = vsel %vm2531, %v2522, %v2540
        %v2549 = vsel %vm2532, %v2523, %v2541
        %v2550 = vsel %vm2533, %v2524, %v2542
        %v2551 = vsel %vm2534, %v2525, %v2543
        %v2552 = vsel %vm2535, %v2526, %v2544
        %v2553 = vld [vmem:[%s8] sm:$0xff]
        %v2554 = vld [vmem:[%s8 + $0x8] sm:$0xff]
        %v2555 = vld [vmem:[%s8 + $0x10] sm:$0xff]
        %v2556 = vld [vmem:[%s8 + $0x18] sm:$0xff]
        %2569 = vrot.lane.b32.xlu0 %v2009, 80
        %v2570 = vpop.permute.xlu0 %2569
        %2571 = vrot.lane.b32.xlu0 %v2010, 80
        %v2572 = vpop.permute.xlu0 %2571
        %2573 = vrot.lane.b32.xlu0 %v2011, 80
        %v2574 = vpop.permute.xlu0 %2573
        %2575 = vrot.lane.b32.xlu0 %v2012, 80
        %v2576 = vpop.permute.xlu0 %2575
        %2577 = vrot.lane.b32.xlu0 %v2013, 80
        %v2578 = vpop.permute.xlu0 %2577
        %2579 = vrot.lane.b32.xlu0 %v2014, 80
        %v2580 = vpop.permute.xlu0 %2579
        %2581 = vrot.lane.b32.xlu0 %v2015, 80
        %v2582 = vpop.permute.xlu0 %2581
        %2583 = vrot.lane.b32.xlu0 %v2016, 80
        %v2584 = vpop.permute.xlu0 %2583
        %2585 = vrot.lane.b32.xlu0 %v2017, 80
        %v2586 = vpop.permute.xlu0 %2585
        %2587 = vrot.lane.b32.xlu0 %v2018, 80
        %v2588 = vpop.permute.xlu0 %2587
        %2589 = vrot.lane.b32.xlu0 %v2019, 80
        %v2590 = vpop.permute.xlu0 %2589
        %2591 = vrot.lane.b32.xlu0 %v2020, 80
        %v2592 = vpop.permute.xlu0 %2591
        %vm2593 = vcmask 654336
        %v2594 = vsel %vm2593, %v2570, %v2572
        %v2595 = vsel %vm2593, %v2572, %v2574
        %v2596 = vsel %vm2593, %v2576, %v2578
        %v2597 = vsel %vm2593, %v2578, %v2580
        %v2598 = vsel %vm2593, %v2582, %v2584
        %v2599 = vsel %vm2593, %v2584, %v2586
        %v2600 = vsel %vm2593, %v2588, %v2590
        %v2601 = vsel %vm2593, %v2590, %v2592
        %v2611 = vsel %vm1502, %v2553, 0
        %v2614 = vsel %vm1502, %v2554, 0
        %v2617 = vsel %vm1502, %v2555, 0
        %v2620 = vsel %vm1502, %v2556, 0
        %2622 = vmatpush.msra.mxu0 0.0
        %2623 = vmatpush.msra.mxu0 0.0
        %2624 = vmatpush.msra.mxu0 0.0
        %2625 = vmatpush.msra.mxu0 0.0
        %2626 = vmatpush.msra.mxu0 0.0
        %2627 = vmatpush.msra.mxu0 0.0
        %2628 = vmatpush.msra.mxu0 0.0
        %2629 = vmatpush.msra.mxu0 0.0
        %2630 = vmatpush.msra.mxu0 0.0
        %2631 = vmatpush.msra.mxu0 0.0
        %2632 = vmatpush.msra.mxu0 0.0
        %2633 = vmatpush.msra.mxu0 0.0
        %2634 = vmatpush.msra.mxu0 %v2600
        %2635 = vmatpush.msra.mxu0 %v2598
        %2636 = vmatpush.msra.mxu0 %v2596
        %2637 = vmatpush.msra.mxu0 %v2594
        %2638 = vmatmul.f32.gmra.mxu0 %v2611
        %v2639 = vpop.f32.mrf.mxu0
        %v2640 = vadd.f32 0.0, %v2639
        %2641 = vmatmul.f32.gmra.mxu0 %v2614
        %v2642 = vpop.f32.mrf.mxu0
        %v2643 = vadd.f32 0.0, %v2642
        %2644 = vmatmul.f32.gmra.mxu0 %v2617
        %v2645 = vpop.f32.mrf.mxu0
        %v2646 = vadd.f32 0.0, %v2645
        %2647 = vmatmul.f32.gmra.mxu0 %v2620
        %v2648 = vpop.f32.mrf.mxu0
        %v2649 = vadd.f32 0.0, %v2648
        %2650 = vdwg.mxu0
        %2651 = vmatpush.msra.mxu0 0.0
        %2652 = vmatpush.msra.mxu0 0.0
        %2653 = vmatpush.msra.mxu0 0.0
        %2654 = vmatpush.msra.mxu0 0.0
        %2655 = vmatpush.msra.mxu0 0.0
        %2656 = vmatpush.msra.mxu0 0.0
        %2657 = vmatpush.msra.mxu0 0.0
        %2658 = vmatpush.msra.mxu0 0.0
        %2659 = vmatpush.msra.mxu0 0.0
        %2660 = vmatpush.msra.mxu0 0.0
        %2661 = vmatpush.msra.mxu0 0.0
        %2662 = vmatpush.msra.mxu0 0.0
        %2663 = vmatpush.msra.mxu0 %v2601
        %2664 = vmatpush.msra.mxu0 %v2599
        %2665 = vmatpush.msra.mxu0 %v2597
        %2666 = vmatpush.msra.mxu0 %v2595
        %2667 = vmatmul.f32.gmra.mxu0 %v2611
        %v2668 = vpop.f32.mrf.mxu0
        %v2669 = vadd.f32 0.0, %v2668
        %2670 = vmatmul.f32.gmra.mxu0 %v2614
        %v2671 = vpop.f32.mrf.mxu0
        %v2672 = vadd.f32 0.0, %v2671
        %2673 = vmatmul.f32.gmra.mxu0 %v2617
        %v2674 = vpop.f32.mrf.mxu0
        %v2675 = vadd.f32 0.0, %v2674
        %2676 = vmatmul.f32.gmra.mxu0 %v2620
        %v2677 = vpop.f32.mrf.mxu0
        %v2678 = vadd.f32 0.0, %v2677
        %2679 = vdwg.mxu0
        %v2680 = vadd.f32 %v2545, %v2640
        %v2681 = vadd.f32 %v2546, %v2669
        %v2682 = vadd.f32 %v2547, %v2643
        %v2683 = vadd.f32 %v2548, %v2672
        %v2684 = vadd.f32 %v2549, %v2646
        %v2685 = vadd.f32 %v2550, %v2675
        %v2686 = vadd.f32 %v2551, %v2649
        %v2687 = vadd.f32 %v2552, %v2678
        %v2688 = vpack.c.bf16 %v2681, %v2680
        %v2689 = vpack.c.bf16 %v2683, %v2682
        %v2690 = vpack.c.bf16 %v2685, %v2684
        %v2691 = vpack.c.bf16 %v2687, %v2686
        %v2696 = vunpack.c.l.b16 %v2688
        %v2697 = vunpack.c.l.b16 %v2689
        %v2698 = vunpack.c.l.b16 %v2690
        %v2699 = vunpack.c.l.b16 %v2691
        %v2700 = vpack.c.b16 %v2697, %v2696
        %v2701 = vpack.c.b16 %v2699, %v2698
        %v2704 = vunpack.c.h.b16 %v2688
        %v2705 = vunpack.c.h.b16 %v2689
        %v2706 = vunpack.c.h.b16 %v2690
        %v2707 = vunpack.c.h.b16 %v2691
        %v2708 = vpack.c.b16 %v2705, %v2704
        %v2709 = vpack.c.b16 %v2707, %v2706
        %2710 = vrot.lane.b32.xlu0 %v2700, 120
        %v2711 = vpop.permute.xlu0 %2710
        %2712 = vrot.lane.b32.xlu0 %v2708, 120
        %v2713 = vpop.permute.xlu0 %2712
        %2714 = vrot.lane.b32.xlu0 %v2701, 120
        %v2715 = vpop.permute.xlu0 %2714
        %2716 = vrot.lane.b32.xlu0 %v2709, 120
        %v2717 = vpop.permute.xlu0 %2716
        %v2718 = vsel %vm676, %v2711, %v2713
        %v2719 = vsel %vm676, %v2715, %v2717
        %2722 = vrot.lane.b32.xlu0 %v2700, 112
        %v2723 = vpop.permute.xlu0 %2722
        %2724 = vrot.lane.b32.xlu0 %v2708, 112
        %v2725 = vpop.permute.xlu0 %2724
        %2726 = vrot.lane.b32.xlu0 %v2701, 112
        %v2727 = vpop.permute.xlu0 %2726
        %2728 = vrot.lane.b32.xlu0 %v2709, 112
        %v2729 = vpop.permute.xlu0 %2728
        %v2730 = vsel %vm1353, %v2723, %v2725
        %v2731 = vsel %vm1353, %v2727, %v2729
        %2734 = vrot.lane.b32.xlu0 %v2700, 104
        %v2735 = vpop.permute.xlu0 %2734
        %2736 = vrot.lane.b32.xlu0 %v2708, 104
        %v2737 = vpop.permute.xlu0 %2736
        %2738 = vrot.lane.b32.xlu0 %v2701, 104
        %v2739 = vpop.permute.xlu0 %2738
        %2740 = vrot.lane.b32.xlu0 %v2709, 104
        %v2741 = vpop.permute.xlu0 %2740
        %v2742 = vsel %vm1445, %v2735, %v2737
        %v2743 = vsel %vm1445, %v2739, %v2741
        %2746 = vrot.lane.b32.xlu0 %v2700, 96
        %v2747 = vpop.permute.xlu0 %2746
        %2748 = vrot.lane.b32.xlu0 %v2708, 96
        %v2749 = vpop.permute.xlu0 %2748
        %2750 = vrot.lane.b32.xlu0 %v2701, 96
        %v2751 = vpop.permute.xlu0 %2750
        %2752 = vrot.lane.b32.xlu0 %v2709, 96
        %v2753 = vpop.permute.xlu0 %2752
        %v2754 = vsel %vm2156, %v2747, %v2749
        %v2755 = vsel %vm2156, %v2751, %v2753
        %2758 = vrot.lane.b32.xlu0 %v2700, 88
        %v2759 = vpop.permute.xlu0 %2758
        %2760 = vrot.lane.b32.xlu0 %v2708, 88
        %v2761 = vpop.permute.xlu0 %2760
        %2762 = vrot.lane.b32.xlu0 %v2701, 88
        %v2763 = vpop.permute.xlu0 %2762
        %2764 = vrot.lane.b32.xlu0 %v2709, 88
        %v2765 = vpop.permute.xlu0 %2764
        %v2766 = vsel %vm2206, %v2759, %v2761
        %v2767 = vsel %vm2206, %v2763, %v2765
        %2770 = vrot.lane.b32.xlu0 %v2700, 80
        %v2771 = vpop.permute.xlu0 %2770
        %2772 = vrot.lane.b32.xlu0 %v2708, 80
        %v2773 = vpop.permute.xlu0 %2772
        %2774 = vrot.lane.b32.xlu0 %v2701, 80
        %v2775 = vpop.permute.xlu0 %2774
        %2776 = vrot.lane.b32.xlu0 %v2709, 80
        %v2777 = vpop.permute.xlu0 %2776
        %v2778 = vsel %vm2248, %v2771, %v2773
        %v2779 = vsel %vm2248, %v2775, %v2777
        %2782 = vrot.lane.b32.xlu0 %v2700, 72
        %v2783 = vpop.permute.xlu0 %2782
        %2784 = vrot.lane.b32.xlu0 %v2708, 72
        %v2785 = vpop.permute.xlu0 %2784
        %2786 = vrot.lane.b32.xlu0 %v2701, 72
        %v2787 = vpop.permute.xlu0 %2786
        %2788 = vrot.lane.b32.xlu0 %v2709, 72
        %v2789 = vpop.permute.xlu0 %2788
        %vm2790 = vcmask 588800
        %v2791 = vsel %vm2790, %v2783, %v2785
        %v2792 = vsel %vm2790, %v2787, %v2789
        %2795 = vrot.lane.b32.xlu0 %v2700, 64
        %v2796 = vpop.permute.xlu0 %2795
        %2797 = vrot.lane.b32.xlu0 %v2708, 64
        %v2798 = vpop.permute.xlu0 %2797
        %2799 = vrot.lane.b32.xlu0 %v2701, 64
        %v2800 = vpop.permute.xlu0 %2799
        %2801 = vrot.lane.b32.xlu0 %v2709, 64
        %v2802 = vpop.permute.xlu0 %2801
        %vm2803 = vcmask 523264
        %v2804 = vsel %vm2803, %v2796, %v2798
        %v2805 = vsel %vm2803, %v2800, %v2802
        %2808 = vrot.lane.b32.xlu0 %v2700, 56
        %v2809 = vpop.permute.xlu0 %2808
        %2810 = vrot.lane.b32.xlu0 %v2708, 56
        %v2811 = vpop.permute.xlu0 %2810
        %2812 = vrot.lane.b32.xlu0 %v2701, 56
        %v2813 = vpop.permute.xlu0 %2812
        %2814 = vrot.lane.b32.xlu0 %v2709, 56
        %v2815 = vpop.permute.xlu0 %2814
        %vm2816 = vcmask 457728
        %v2817 = vsel %vm2816, %v2809, %v2811
        %v2818 = vsel %vm2816, %v2813, %v2815
        %2821 = vrot.lane.b32.xlu0 %v2700, 48
        %v2822 = vpop.permute.xlu0 %2821
        %2823 = vrot.lane.b32.xlu0 %v2708, 48
        %v2824 = vpop.permute.xlu0 %2823
        %2825 = vrot.lane.b32.xlu0 %v2701, 48
        %v2826 = vpop.permute.xlu0 %2825
        %2827 = vrot.lane.b32.xlu0 %v2709, 48
        %v2828 = vpop.permute.xlu0 %2827
        %vm2829 = vcmask 392192
        %v2830 = vsel %vm2829, %v2822, %v2824
        %v2831 = vsel %vm2829, %v2826, %v2828
        %2834 = vrot.lane.b32.xlu0 %v2700, 40
        %v2835 = vpop.permute.xlu0 %2834
        %2836 = vrot.lane.b32.xlu0 %v2708, 40
        %v2837 = vpop.permute.xlu0 %2836
        %2838 = vrot.lane.b32.xlu0 %v2701, 40
        %v2839 = vpop.permute.xlu0 %2838
        %2840 = vrot.lane.b32.xlu0 %v2709, 40
        %v2841 = vpop.permute.xlu0 %2840
        %vm2842 = vcmask 326656
        %v2843 = vsel %vm2842, %v2835, %v2837
        %v2844 = vsel %vm2842, %v2839, %v2841
        %2847 = vrot.lane.b32.xlu0 %v2700, 32
        %v2848 = vpop.permute.xlu0 %2847
        %2849 = vrot.lane.b32.xlu0 %v2708, 32
        %v2850 = vpop.permute.xlu0 %2849
        %2851 = vrot.lane.b32.xlu0 %v2701, 32
        %v2852 = vpop.permute.xlu0 %2851
        %2853 = vrot.lane.b32.xlu0 %v2709, 32
        %v2854 = vpop.permute.xlu0 %2853
        %vm2855 = vcmask 261120
        %v2856 = vsel %vm2855, %v2848, %v2850
        %v2857 = vsel %vm2855, %v2852, %v2854
        %v2860 = vld [vmem:[%s9] sm:$0xff]
        %v2861 = vld [vmem:[%s9 + $0x8] sm:$0xff]
        %v2862 = vld [vmem:[%s9 + $0x10] sm:$0xff]
        %v2863 = vld [vmem:[%s9 + $0x18] sm:$0xff]
        %v2864 = vld [vmem:[%s9 + $0x20] sm:$0xff]
        %v2865 = vld [vmem:[%s9 + $0x28] sm:$0xff]
        %v2866 = vld [vmem:[%s9 + $0x30] sm:$0xff]
        %v2867 = vld [vmem:[%s9 + $0x38] sm:$0xff]
        %v2876 = vunpack.c.l.b16 %v2860
        %v2877 = vunpack.c.h.b16 %v2860
        %v2878 = vunpack.c.l.b16 %v2861
        %v2879 = vunpack.c.h.b16 %v2861
        %v2880 = vunpack.c.l.b16 %v2862
        %v2881 = vunpack.c.h.b16 %v2862
        %v2882 = vunpack.c.l.b16 %v2863
        %v2883 = vunpack.c.h.b16 %v2863
        %v2884 = vunpack.c.l.b16 %v2864
        %v2885 = vunpack.c.h.b16 %v2864
        %v2886 = vunpack.c.l.b16 %v2865
        %v2887 = vunpack.c.h.b16 %v2865
        %v2888 = vunpack.c.l.b16 %v2866
        %v2889 = vunpack.c.h.b16 %v2866
        %v2890 = vunpack.c.l.b16 %v2867
        %v2891 = vunpack.c.h.b16 %v2867
        %v2892 = vpack.c.b16 %v2880, %v2876
        %v2893 = vpack.c.b16 %v2881, %v2877
        %v2894 = vpack.c.b16 %v2882, %v2878
        %v2895 = vpack.c.b16 %v2883, %v2879
        %v2896 = vpack.c.b16 %v2888, %v2884
        %v2897 = vpack.c.b16 %v2889, %v2885
        %v2898 = vpack.c.b16 %v2890, %v2886
        %v2899 = vpack.c.b16 %v2891, %v2887
        %v2907 = vsel %vm1502, %v2895, 0
        %v2910 = vsel %vm1502, %v2899, 0
        %2912 = vmatpush.bf16.msra.mxu0 %v2743
        %2913 = vmatpush.bf16.msra.mxu0 %v2742
        %2914 = vmatpush.bf16.msra.mxu0 %v2731
        %2915 = vmatpush.bf16.msra.mxu0 %v2730
        %2916 = vmatpush.bf16.msra.mxu0 %v2719
        %2917 = vmatpush.bf16.msra.mxu0 %v2718
        %2918 = vmatpush.bf16.msra.mxu0 %v2701
        %2919 = vmatpush.bf16.msra.mxu0 %v2700
        %2920 = vmatmul.bf16.gmra.mxu0 %v2892
        %v2921 = vpop.f32.mrf.mxu0
        %v2922 = vadd.f32 0.0, %v2921
        %v2923 = vpop.f32.mrf.mxu0
        %v2924 = vadd.f32 0.0, %v2923
        %2925 = vmatmul.bf16.gmra.mxu0 %v2896
        %v2926 = vpop.f32.mrf.mxu0
        %v2927 = vadd.f32 0.0, %v2926
        %v2928 = vpop.f32.mrf.mxu0
        %v2929 = vadd.f32 0.0, %v2928
        %2930 = vdwg.mxu0
        %2931 = vmatpush.bf16.msra.mxu0 %v2792
        %2932 = vmatpush.bf16.msra.mxu0 %v2791
        %2933 = vmatpush.bf16.msra.mxu0 %v2779
        %2934 = vmatpush.bf16.msra.mxu0 %v2778
        %2935 = vmatpush.bf16.msra.mxu0 %v2767
        %2936 = vmatpush.bf16.msra.mxu0 %v2766
        %2937 = vmatpush.bf16.msra.mxu0 %v2755
        %2938 = vmatpush.bf16.msra.mxu0 %v2754
        %2939 = vmatmul.bf16.gmra.mxu0 %v2893
        %v2940 = vpop.f32.mrf.mxu0
        %v2941 = vadd.f32 %v2922, %v2940
        %v2942 = vpop.f32.mrf.mxu0
        %v2943 = vadd.f32 %v2924, %v2942
        %2944 = vmatmul.bf16.gmra.mxu0 %v2897
        %v2945 = vpop.f32.mrf.mxu0
        %v2946 = vadd.f32 %v2927, %v2945
        %v2947 = vpop.f32.mrf.mxu0
        %v2948 = vadd.f32 %v2929, %v2947
        %2949 = vdwg.mxu0
        %2950 = vmatpush.bf16.msra.mxu0 %v2844
        %2951 = vmatpush.bf16.msra.mxu0 %v2843
        %2952 = vmatpush.bf16.msra.mxu0 %v2831
        %2953 = vmatpush.bf16.msra.mxu0 %v2830
        %2954 = vmatpush.bf16.msra.mxu0 %v2818
        %2955 = vmatpush.bf16.msra.mxu0 %v2817
        %2956 = vmatpush.bf16.msra.mxu0 %v2805
        %2957 = vmatpush.bf16.msra.mxu0 %v2804
        %2958 = vmatmul.bf16.gmra.mxu0 %v2894
        %v2959 = vpop.f32.mrf.mxu0
        %v2960 = vadd.f32 %v2941, %v2959
        %v2961 = vpop.f32.mrf.mxu0
        %v2962 = vadd.f32 %v2943, %v2961
        %2963 = vmatmul.bf16.gmra.mxu0 %v2898
        %v2964 = vpop.f32.mrf.mxu0
        %v2965 = vadd.f32 %v2946, %v2964
        %v2966 = vpop.f32.mrf.mxu0
        %v2967 = vadd.f32 %v2948, %v2966
        %2968 = vdwg.mxu0
        %2969 = vmatpush.bf16.msra.mxu0 0
        %2970 = vmatpush.bf16.msra.mxu0 0
        %2971 = vmatpush.bf16.msra.mxu0 0
        %2972 = vmatpush.bf16.msra.mxu0 0
        %2973 = vmatpush.bf16.msra.mxu0 0
        %2974 = vmatpush.bf16.msra.mxu0 0
        %2975 = vmatpush.bf16.msra.mxu0 %v2857
        %2976 = vmatpush.bf16.msra.mxu0 %v2856
        %2977 = vmatmul.bf16.gmra.mxu0 %v2907
        %v2978 = vpop.f32.mrf.mxu0
        %v2979 = vadd.f32 %v2960, %v2978
        %v2980 = vpop.f32.mrf.mxu0
        %v2981 = vadd.f32 %v2962, %v2980
        %2982 = vmatmul.bf16.gmra.mxu0 %v2910
        %v2983 = vpop.f32.mrf.mxu0
        %v2984 = vadd.f32 %v2965, %v2983
        %v2985 = vpop.f32.mrf.mxu0
        %v2986 = vadd.f32 %v2967, %v2985
        %2987 = vdwg.mxu0
        %s2988 = scalar_lea.vmem %s540, 96
        %v2989 = vld [vmem:[%s2988] sm:$0xff]
        %v2990 = vld [vmem:[%s2988 + $0x8] sm:$0xff]
        %v2991 = vld [vmem:[%s2988 + $0x10] sm:$0xff]
        %v2992 = vld [vmem:[%s2988 + $0x18] sm:$0xff]
        %s2993 = scalar_lea.vmem %s545, 96
        %v2994 = vld [vmem:[%s2993] sm:$0xff]
        %v2995 = vld [vmem:[%s2993 + $0x8] sm:$0xff]
        %v2996 = vld [vmem:[%s2993 + $0x10] sm:$0xff]
        %v2997 = vld [vmem:[%s2993 + $0x18] sm:$0xff]
        %2999 = vset.pattern.permute.xlu0 0
        %3000 = vperm.xlu0 %2999, %v2989
        %v3001 = vpop.permute.xlu0 %3000
        %3004 = vset.pattern.permute.xlu0 0
        %3005 = vperm.xlu0 %3004, %v2990
        %v3006 = vpop.permute.xlu0 %3005
        %3009 = vset.pattern.permute.xlu0 0
        %3010 = vperm.xlu0 %3009, %v2991
        %v3011 = vpop.permute.xlu0 %3010
        %3014 = vset.pattern.permute.xlu0 0
        %3015 = vperm.xlu0 %3014, %v2992
        %v3016 = vpop.permute.xlu0 %3015
        %v3018 = vmul.f32 %v2979, %v3001
        %v3019 = vmul.f32 %v2981, %v3006
        %v3020 = vmul.f32 %v2984, %v3011
        %v3021 = vmul.f32 %v2986, %v3016
        %3023 = vset.pattern.permute.xlu0 0
        %3024 = vperm.xlu0 %3023, %v2994
        %v3025 = vpop.permute.xlu0 %3024
        %3028 = vset.pattern.permute.xlu0 0
        %3029 = vperm.xlu0 %3028, %v2995
        %v3030 = vpop.permute.xlu0 %3029
        %3033 = vset.pattern.permute.xlu0 0
        %3034 = vperm.xlu0 %3033, %v2996
        %v3035 = vpop.permute.xlu0 %3034
        %3038 = vset.pattern.permute.xlu0 0
        %3039 = vperm.xlu0 %3038, %v2997
        %v3040 = vpop.permute.xlu0 %3039
        %v3042 = vadd.f32 %v3018, %v3025
        %v3043 = vadd.f32 %v3019, %v3030
        %v3044 = vadd.f32 %v3020, %v3035
        %v3045 = vadd.f32 %v3021, %v3040
        %s3046 = sld [smem:[#allocation3 + $0x3]]
        %vm3047 = vcmp.ge.f32.partialorder %v3042, 0.0
        %vm3048 = vcmp.ge.f32.partialorder %v3043, 0.0
        %vm3049 = vcmp.ge.f32.partialorder %v3044, 0.0
        %vm3050 = vcmp.ge.f32.partialorder %v3045, 0.0
        %v3051 = vstv %s3046
        %v3052 = vmul.f32 %v3051, %v3042
        %v3053 = vmul.f32 %v3051, %v3043
        %v3054 = vmul.f32 %v3051, %v3044
        %v3055 = vmul.f32 %v3051, %v3045
        %v3056 = vsel %vm3047, %v3042, %v3052
        %v3057 = vsel %vm3048, %v3043, %v3053
        %v3058 = vsel %vm3049, %v3044, %v3054
        %v3059 = vsel %vm3050, %v3045, %v3055
        %v3060 = vld [vmem:[%s10] sm:$0xff]
        %v3061 = vld [vmem:[%s10 + $0x8] sm:$0xff]
        %v3062 = vld [vmem:[%s10 + $0x10] sm:$0xff]
        %v3063 = vld [vmem:[%s10 + $0x18] sm:$0xff]
        %3072 = vrot.lane.b32.xlu0 %v2680, 32
        %v3073 = vpop.permute.xlu0 %3072
        %3074 = vrot.lane.b32.xlu0 %v2681, 32
        %v3075 = vpop.permute.xlu0 %3074
        %3076 = vrot.lane.b32.xlu0 %v2682, 32
        %v3077 = vpop.permute.xlu0 %3076
        %3078 = vrot.lane.b32.xlu0 %v2683, 32
        %v3079 = vpop.permute.xlu0 %3078
        %3080 = vrot.lane.b32.xlu0 %v2684, 32
        %v3081 = vpop.permute.xlu0 %3080
        %3082 = vrot.lane.b32.xlu0 %v2685, 32
        %v3083 = vpop.permute.xlu0 %3082
        %3084 = vrot.lane.b32.xlu0 %v2686, 32
        %v3085 = vpop.permute.xlu0 %3084
        %3086 = vrot.lane.b32.xlu0 %v2687, 32
        %v3087 = vpop.permute.xlu0 %3086
        %v3088 = vsel %vm1502, %v3073, %v3075
        %v3089 = vsel %vm1502, %v3077, %v3079
        %v3090 = vsel %vm1502, %v3081, %v3083
        %v3091 = vsel %vm1502, %v3085, %v3087
        %v3097 = vsel %vm1502, %v3060, 0
        %v3100 = vsel %vm1502, %v3061, 0
        %v3103 = vsel %vm1502, %v3062, 0
        %v3106 = vsel %vm1502, %v3063, 0
        %3108 = vmatpush.msra.mxu0 0.0
        %3109 = vmatpush.msra.mxu0 0.0
        %3110 = vmatpush.msra.mxu0 0.0
        %3111 = vmatpush.msra.mxu0 0.0
        %3112 = vmatpush.msra.mxu0 0.0
        %3113 = vmatpush.msra.mxu0 0.0
        %3114 = vmatpush.msra.mxu0 0.0
        %3115 = vmatpush.msra.mxu0 0.0
        %3116 = vmatpush.msra.mxu0 0.0
        %3117 = vmatpush.msra.mxu0 0.0
        %3118 = vmatpush.msra.mxu0 0.0
        %3119 = vmatpush.msra.mxu0 0.0
        %3120 = vmatpush.msra.mxu0 %v3091
        %3121 = vmatpush.msra.mxu0 %v3090
        %3122 = vmatpush.msra.mxu0 %v3089
        %3123 = vmatpush.msra.mxu0 %v3088
        %3124 = vmatmul.f32.gmra.mxu0 %v3097
        %v3125 = vpop.f32.mrf.mxu0
        %v3126 = vadd.f32 0.0, %v3125
        %3127 = vmatmul.f32.gmra.mxu0 %v3100
        %v3128 = vpop.f32.mrf.mxu0
        %v3129 = vadd.f32 0.0, %v3128
        %3130 = vmatmul.f32.gmra.mxu0 %v3103
        %v3131 = vpop.f32.mrf.mxu0
        %v3132 = vadd.f32 0.0, %v3131
        %3133 = vmatmul.f32.gmra.mxu0 %v3106
        %v3134 = vpop.f32.mrf.mxu0
        %v3135 = vadd.f32 0.0, %v3134
        %3136 = vdwg.mxu0
        %v3137 = vadd.f32 %v3056, %v3126
        %v3138 = vadd.f32 %v3057, %v3129
        %v3139 = vadd.f32 %v3058, %v3132
        %v3140 = vadd.f32 %v3059, %v3135
        %v3141 = vld [vmem:[%s11] sm:$0x1]
        %v3142 = vld [vmem:[#allocation2] sm:$0x1]
        %3144 = vset.pattern.permute.xlu0 0
        %3145 = vperm.xlu0 %3144, %v3142
        %v3146 = vpop.permute.xlu0 %3145
        %v3148 = vperm.slane %v3146, 0
        %v3150 = vsel %vm1502, %v3141, 0
        %3152 = vmatpush.msra.mxu0 0.0
        %3153 = vmatpush.msra.mxu0 0.0
        %3154 = vmatpush.msra.mxu0 0.0
        %3155 = vmatpush.msra.mxu0 0.0
        %3156 = vmatpush.msra.mxu0 0.0
        %3157 = vmatpush.msra.mxu0 0.0
        %3158 = vmatpush.msra.mxu0 0.0
        %3159 = vmatpush.msra.mxu0 0.0
        %3160 = vmatpush.msra.mxu0 0.0
        %3161 = vmatpush.msra.mxu0 0.0
        %3162 = vmatpush.msra.mxu0 0.0
        %3163 = vmatpush.msra.mxu0 0.0
        %3164 = vmatpush.msra.mxu0 %v3140
        %3165 = vmatpush.msra.mxu0 %v3139
        %3166 = vmatpush.msra.mxu0 %v3138
        %3167 = vmatpush.msra.mxu0 %v3137
        %3168 = vmatmul.f32.gmra.mxu0 %v3150
        %v3169 = vpop.f32.mrf.mxu0
        %v3170 = vadd.f32 %v3148, %v3169
        %3171 = vdwg.mxu0
        %v3172 = vtanh.pop %v3170
        %3173 = vst [vmem:[%s527] sm:$0x1] %v3172
        %s3174 = sand.u32 %s364, 1
        %s3175 = scalar_lea.sflag [#allocation4], %s3174
        %s3176 = sand.u32 %s364, 1
        %s3177 = scalar_lea.vmem [#allocation6], %s3176
        // Predicated region
        $region81: #{overdrive_forward.1} parent=75 // pred_check
          %p3178 = pneg %p374
        $region82: #{overdrive_forward.1} parent=75 // pred_check_branch
          %3180 = sbr.rel (%p3178) target = $region84
        $region83: #{overdrive_forward.1} parent=75 // pred_region
          %3182 = vsyncadd %s3175, 0
          %s3183 = smul.addr %s35, 3
          %s3184 = sadd.s32 %s36, %s3183
          %s3185 = scalar_lea.hbm %s14, %s3184
          %s3187 = sshll.u32 %s3177, 4
          %s3188 = int_to_ptr.vmem [resolvable:$true] %s3187
          %s3189 = sshll.u32 %s3185, 4
          %s3190 = int_to_ptr.hbm [resolvable:$true] %s3189
          %3192 = dma.vmem_to_hbm [thread:$0]  %s3188, 16, %s3190, %s3175
        $region84: #{overdrive_forward.1} parent=75 // pred_fallthru
          _
      $region76: #{overdrive_forward.1} parent=5 // pred_fallthru
        _
      %p3193 = scmp.le.s32.totalorder 2, %s26
      // Predicated region
      $region85: #{overdrive_forward.1} parent=5 // pred_check
        %p3194 = pneg %p3193
      $region86: #{overdrive_forward.1} parent=5 // pred_check_branch
        %3196 = sbr.rel (%p3194) target = $region88
      $region87: #{overdrive_forward.1} parent=5 // pred_region
        %s3197 = ssub.s32 %s26, 2
        // Predicated region
        $region89: #{overdrive_forward.1} parent=87 // pred_check
          %p3198 = pneg %p380
        $region90: #{overdrive_forward.1} parent=87 // pred_check_branch
          %3200 = sbr.rel (%p3198) target = $region92
        $region91: #{overdrive_forward.1} parent=87 // pred_region
          %s3201 = sand.u32 %s365, 1
          %s3202 = scalar_lea.sflag [#allocation4], %s3201
          %s3203 = sand.u32 %s365, 1
          %s3204 = scalar_lea.vmem [#allocation6], %s3203
          %3206 = dma.done %s3202, 16
        $region92: #{overdrive_forward.1} parent=87 // pred_fallthru
          _
      $region88: #{overdrive_forward.1} parent=5 // pred_fallthru
        _
    $region6: #{overdrive_forward.1} parent=1 // loop_footer
      %s30 = sadd.s32 1, %s26
    $region7: #{overdrive_forward.1} parent=1 // loop_footer_branch
      %25 = sbr.rel target = $region3
    $region8: #{overdrive_forward.1} parent=1 // loop_exit
      _
    %3207 = vsyncpa [#allocation4], 1
    %s3208 = scalar_lea.sflag [#allocation4], 1
    %3209 = vsyncpa %s3208, 1
    %3210 = vsyncpa [#allocation5], 1
    %s3211 = scalar_lea.sflag [#allocation5], 1
    %3212 = vsyncpa %s3211, 1

</llo_original>
